<compile_context>
chip_gen: v6e
topology: v6e:2x2x1
jax: 0.10.0
libtpu: 0.0.40
codegen_flags: <defaults>
</compile_context>

<pallas_src>
import functools
import math

import jax
import jax.numpy as jnp
from jax import lax
from jax.experimental import pallas as pl
from jax.experimental.pallas import tpu as pltpu


_VMEM_LIMIT = 48 * 1024 * 1024   # <= v7x 64 MiB physical, well under v5e/v6e


# -----------------------------------------------------------------------------
# Tiling helper: largest `align`-multiple <= target that divides dim (with coarse
# fallbacks), otherwise the full dim (full dims always satisfy the (8,128) rule).
# -----------------------------------------------------------------------------
def _tile(dim, target, align):
    if dim <= target:
        return dim
    aligns = [align] + ([128] if align > 128 else []) + ([8] if align > 8 else [])
    for a in aligns:
        t = (target // a) * a
        while t >= a:
            if dim % t == 0:
                return t
            t -= a
    return dim


# -----------------------------------------------------------------------------
# Kernels
# -----------------------------------------------------------------------------
def _mm_kernel(x_ref, w_ref, b_ref, o_ref, acc_ref, *, activation):
    @pl.when(pl.program_id(2) == 0)
    def _():
        acc_ref[...] = jnp.zeros_like(acc_ref)

    acc_ref[...] += jnp.dot(x_ref[...], w_ref[...],
                            preferred_element_type=jnp.float32)

    @pl.when(pl.program_id(2) == pl.num_programs(2) - 1)
    def _():
        y = acc_ref[...] + b_ref[...].astype(jnp.float32)
        if activation == "gelu":
            # TODO(synk): HF BART uses exact (erf) GELU; tanh approximation here.
            y = jax.nn.gelu(y, approximate=True)
        o_ref[...] = y.astype(o_ref.dtype)


def _mm_add_ln_kernel(x_ref, w_ref, b_ref, r_ref, g_ref, bt_ref, o_ref, acc_ref,
                      *, eps):
    """matmul + bias + residual add + LayerNorm fused into the K-finalize step.

    Requires the full feature row (N = hidden) in one output block.
    """
    @pl.when(pl.program_id(1) == 0)
    def _():
        acc_ref[...] = jnp.zeros_like(acc_ref)

    acc_ref[...] += jnp.dot(x_ref[...], w_ref[...],
                            preferred_element_type=jnp.float32)

    @pl.when(pl.program_id(1) == pl.num_programs(1) - 1)
    def _():
        y = (acc_ref[...] + b_ref[...].astype(jnp.float32)
             + r_ref[...].astype(jnp.float32))
        mu = jnp.mean(y, axis=-1, keepdims=True)
        var = jnp.mean(jnp.square(y - mu), axis=-1, keepdims=True)
        yn = (y - mu) * lax.rsqrt(var + eps)
        o_ref[...] = (yn * g_ref[...].astype(jnp.float32)
                      + bt_ref[...].astype(jnp.float32)).astype(o_ref.dtype)


def _ln_kernel(x_ref, g_ref, b_ref, o_ref, *, eps):
    x = x_ref[...].astype(jnp.float32)
    mu = jnp.mean(x, axis=-1, keepdims=True)
    var = jnp.mean(jnp.square(x - mu), axis=-1, keepdims=True)
    y = (x - mu) * lax.rsqrt(var + eps)
    o_ref[...] = (y * g_ref[...].astype(jnp.float32)
                  + b_ref[...].astype(jnp.float32)).astype(o_ref.dtype)


def _attn_kernel(q_ref, k_ref, v_ref, km_ref, o_ref, *, num_heads, head_dim,
                 scale, causal, q_tile, q_off, k_off, v_off):
    """One (batch, q-tile) grid step; all heads processed with static lane slices.

    q_ref: (1, tq, *), k_ref/v_ref: (1, Sk, *), km_ref: (1, 1, Sk) f32 key mask
    (1 = keep, 0 = pad), o_ref: (1, tq, H).  q_off/k_off/v_off are static lane
    offsets of the Q/K/V sub-tensors inside their refs.
    """
    tq = o_ref.shape[1]
    km = km_ref[0]                                              # (1, Sk)
    Sk = km.shape[-1]
    bias = (1.0 - km.astype(jnp.float32)) * jnp.float32(-1e9)   # (1, Sk), f32
    if causal:
        q0 = pl.program_id(1) * q_tile
        r = lax.broadcasted_iota(jnp.int32, (tq, Sk), 0) + q0
        c = lax.broadcasted_iota(jnp.int32, (tq, Sk), 1)
        bias = bias + jnp.where(c > r, jnp.float32(-1e9), jnp.float32(0.0))
    else:
        bias = jnp.broadcast_to(bias, (tq, Sk))                 # hoisted once

    for h in range(num_heads):
        qh = q_ref[0, :, q_off + h * head_dim: q_off + (h + 1) * head_dim]
        kh = k_ref[0, :, k_off + h * head_dim: k_off + (h + 1) * head_dim]
        vh = v_ref[0, :, v_off + h * head_dim: v_off + (h + 1) * head_dim]
        # Q @ K^T via dot_general contracting last dims (no explicit transpose)
        s = lax.dot_general(qh, kh, (((1,), (1,)), ((), ())),
                            preferred_element_type=jnp.float32)
        s = s * jnp.float32(scale) + bias
        s = s - jnp.max(s, axis=-1, keepdims=True)
        p = jnp.exp(s)
        inv = pl.reciprocal(jnp.sum(p, axis=-1, keepdims=True), approx=True)
        p = (p * inv).astype(vh.dtype)
        ctx = jnp.dot(p, vh, preferred_element_type=jnp.float32)
        # per-head store into the lane-dense output tile (bounds live ranges)
        o_ref[0, :, h * head_dim:(h + 1) * head_dim] = ctx.astype(o_ref.dtype)


# -----------------------------------------------------------------------------
# Pallas wrappers
# -----------------------------------------------------------------------------
def linear(x2d, w, b, activation=None):
    """Tiled [M,K]@[K,N] + bias (+optional GELU), f32 accumulation."""
    M, K = x2d.shape
    N = w.shape[1]
    tm = _tile(M, 512, 16)       # 16-aligned for bf16 sublane packing
    tn = _tile(N, 1024, 256)     # 256-aligned for v6e/v7x 256x256 MXU
    tk = _tile(K, 1024, 256)
    grid = (M // tm, N // tn, K // tk)
    return pl.pallas_call(
        functools.partial(_mm_kernel, activation=activation),
        grid=grid,
        in_specs=[
            pl.BlockSpec((tm, tk), lambda i, j, k: (i, k)),
            pl.BlockSpec((tk, tn), lambda i, j, k: (k, j)),
            pl.BlockSpec((1, tn), lambda i, j, k: (0, j)),
        ],
        out_specs=pl.BlockSpec((tm, tn), lambda i, j, k: (i, j)),
        out_shape=jax.ShapeDtypeStruct((M, N), x2d.dtype),
        scratch_shapes=[pltpu.VMEM((tm, tn), jnp.float32)],
        compiler_params=pltpu.CompilerParams(
            dimension_semantics=("parallel", "parallel", "arbitrary"),
            vmem_limit_bytes=_VMEM_LIMIT),
    )(x2d, w, b.reshape(1, N))


def linear_add_ln(x2d, w, b, resid2d, g, beta, eps=1e-5):
    """LN(x2d @ w + b + resid2d) with the residual+LN fused in the matmul epilogue.

    N (= hidden) is kept as one full output block so the row statistics are exact.
    """
    M, K = x2d.shape
    N = w.shape[1]
    tm = _tile(M, 512, 16)
    tk = _tile(K, 1024, 256)
    grid = (M // tm, K // tk)
    return pl.pallas_call(
        functools.partial(_mm_add_ln_kernel, eps=eps),
        grid=grid,
        in_specs=[
            pl.BlockSpec((tm, tk), lambda i, k: (i, k)),
            pl.BlockSpec((tk, N), lambda i, k: (k, 0)),
            pl.BlockSpec((1, N), lambda i, k: (0, 0)),
            pl.BlockSpec((tm, N), lambda i, k: (i, 0)),
            pl.BlockSpec((1, N), lambda i, k: (0, 0)),
            pl.BlockSpec((1, N), lambda i, k: (0, 0)),
        ],
        out_specs=pl.BlockSpec((tm, N), lambda i, k: (i, 0)),
        out_shape=jax.ShapeDtypeStruct((M, N), x2d.dtype),
        scratch_shapes=[pltpu.VMEM((tm, N), jnp.float32)],
        compiler_params=pltpu.CompilerParams(
            dimension_semantics=("parallel", "arbitrary"),
            vmem_limit_bytes=_VMEM_LIMIT),
    )(x2d, w, b.reshape(1, N), resid2d, g.reshape(1, N), beta.reshape(1, N))


def layer_norm(x, g, b, eps=1e-5):
    shp = x.shape
    H = shp[-1]
    x2 = x.reshape(-1, H)
    M = x2.shape[0]
    tm = _tile(M, 512, 16)
    out = pl.pallas_call(
        functools.partial(_ln_kernel, eps=eps),
        grid=(M // tm,),
        in_specs=[pl.BlockSpec((tm, H), lambda i: (i, 0)),
                  pl.BlockSpec((1, H), lambda i: (0, 0)),
                  pl.BlockSpec((1, H), lambda i: (0, 0))],
        out_specs=pl.BlockSpec((tm, H), lambda i: (i, 0)),
        out_shape=jax.ShapeDtypeStruct(x2.shape, x.dtype),
        compiler_params=pltpu.CompilerParams(dimension_semantics=("parallel",)),
    )(x2, g.reshape(1, H), b.reshape(1, H))
    return out.reshape(shp)


def self_mha(x, p, km3, num_heads, causal):
    """Self-attention context (pre o-projection) with fused QKV projection.

    km3: [B,1,S] f32 key mask.  Returns [B,S,H]; caller fuses o-proj+residual+LN.
    """
    B, S, H = x.shape
    D = H // num_heads
    qkv = linear(x.reshape(B * S, H), p["qkv_w"], p["qkv_b"]).reshape(B, S, 3 * H)
    tq = _tile(S, 256, 16)
    if H % 128 == 0:
        # lane-blocked Q/K/V views of the fused qkv tensor
        q_spec = pl.BlockSpec((1, tq, H), lambda b, qi: (b, qi, 0))
        k_spec = pl.BlockSpec((1, S, H), lambda b, qi: (b, 0, 1))
        v_spec = pl.BlockSpec((1, S, H), lambda b, qi: (b, 0, 2))
        q_off, k_off, v_off = 0, 0, 0
    else:
        # tiny-H fallback: full lane width, static in-kernel offsets
        q_spec = pl.BlockSpec((1, tq, 3 * H), lambda b, qi: (b, qi, 0))
        k_spec = pl.BlockSpec((1, S, 3 * H), lambda b, qi: (b, 0, 0))
        v_spec = pl.BlockSpec((1, S, 3 * H), lambda b, qi: (b, 0, 0))
        q_off, k_off, v_off = 0, H, 2 * H
    return pl.pallas_call(
        functools.partial(_attn_kernel, num_heads=num_heads, head_dim=D,
                          scale=1.0 / math.sqrt(D), causal=causal, q_tile=tq,
                          q_off=q_off, k_off=k_off, v_off=v_off),
        grid=(B, S // tq),
        in_specs=[q_spec, k_spec, v_spec,
                  pl.BlockSpec((1, 1, S), lambda b, qi: (b, 0, 0))],
        out_specs=pl.BlockSpec((1, tq, H), lambda b, qi: (b, qi, 0)),
        out_shape=jax.ShapeDtypeStruct((B, S, H), x.dtype),
        compiler_params=pltpu.CompilerParams(
            dimension_semantics=("parallel", "parallel"),
            vmem_limit_bytes=_VMEM_LIMIT),
    )(qkv, qkv, qkv, km3)


def cross_mha(x_q, x_kv, p, km3, num_heads):
    """Cross-attention context (pre o-projection) with fused KV projection.

    km3 masks the KV (encoder) side.  Returns [B,Sq,H].
    """
    B, Sq, H = x_q.shape
    Sk = x_kv.shape[1]
    D = H // num_heads
    q = linear(x_q.reshape(B * Sq, H), p["q_w"], p["q_b"]).reshape(B, Sq, H)
    kv = linear(x_kv.reshape(B * Sk, H), p["kv_w"], p["kv_b"]).reshape(B, Sk, 2 * H)
    tq = _tile(Sq, 256, 16)
    if H % 128 == 0:
        k_spec = pl.BlockSpec((1, Sk, H), lambda b, qi: (b, 0, 0))
        v_spec = pl.BlockSpec((1, Sk, H), lambda b, qi: (b, 0, 1))
        k_off, v_off = 0, 0
    else:
        k_spec = pl.BlockSpec((1, Sk, 2 * H), lambda b, qi: (b, 0, 0))
        v_spec = pl.BlockSpec((1, Sk, 2 * H), lambda b, qi: (b, 0, 0))
        k_off, v_off = 0, H
    return pl.pallas_call(
        functools.partial(_attn_kernel, num_heads=num_heads, head_dim=D,
                          scale=1.0 / math.sqrt(D), causal=False, q_tile=tq,
                          q_off=0, k_off=k_off, v_off=v_off),
        grid=(B, Sq // tq),
        in_specs=[pl.BlockSpec((1, tq, H), lambda b, qi: (b, qi, 0)),
                  k_spec, v_spec,
                  pl.BlockSpec((1, 1, Sk), lambda b, qi: (b, 0, 0))],
        out_specs=pl.BlockSpec((1, tq, H), lambda b, qi: (b, qi, 0)),
        out_shape=jax.ShapeDtypeStruct((B, Sq, H), x_q.dtype),
        compiler_params=pltpu.CompilerParams(
            dimension_semantics=("parallel", "parallel"),
            vmem_limit_bytes=_VMEM_LIMIT),
    )(q, kv, kv, km3)


# -----------------------------------------------------------------------------
# BART-style model glue (embedding gathers / reshapes in XLA; compute in kernels)
# -----------------------------------------------------------------------------
def bart_with_classifier_forward(params, input_ids, attention_mask, cfg):
    B, S = input_ids.shape
    H, nh = cfg["d_model"], cfg["num_heads"]
    BS = B * S
    adt = jnp.bfloat16
    pos = jnp.arange(S) + 2  # BART learned positional embedding offset

    enc_km3 = attention_mask.astype(jnp.float32).reshape(B, 1, S)
    ones_km3 = jnp.ones((B, 1, S), jnp.float32)

    # ---------------- encoder ----------------
    h = (params["shared_emb"][input_ids]
         + params["enc_pos_emb"][pos][None, :, :]).astype(adt)
    h = layer_norm(h, params["enc_ln_emb_g"], params["enc_ln_emb_b"])
    for lp in params["enc_layers"]:
        sa = lp["self_attn"]
        a = self_mha(h, sa, enc_km3, nh, causal=False)
        h = linear_add_ln(a.reshape(BS, H), sa["o_w"], sa["o_b"],
                          h.reshape(BS, H), lp["ln1_g"], lp["ln1_b"]).reshape(B, S, H)
        f = linear(h.reshape(BS, H), lp["fc1_w"], lp["fc1_b"], activation="gelu")
        h = linear_add_ln(f, lp["fc2_w"], lp["fc2_b"],
                          h.reshape(BS, H), lp["ln2_g"], lp["ln2_b"]).reshape(B, S, H)
    enc_out = h

    # ---------------- decoder ----------------
    # shift_tokens_right: decoder_input_ids[:, 0] = decoder_start (= eos)
    dec_ids = jnp.concatenate(
        [jnp.full((B, 1), cfg["eos_id"], dtype=input_ids.dtype), input_ids[:, :-1]],
        axis=1)
    d = (params["shared_emb"][dec_ids]
         + params["dec_pos_emb"][pos][None, :, :]).astype(adt)
    d = layer_norm(d, params["dec_ln_emb_g"], params["dec_ln_emb_b"])
    for lp in params["dec_layers"]:
        sa = lp["self_attn"]
        a = self_mha(d, sa, ones_km3, nh, causal=True)
        d = linear_add_ln(a.reshape(BS, H), sa["o_w"], sa["o_b"],
                          d.reshape(BS, H), lp["ln1_g"], lp["ln1_b"]).reshape(B, S, H)
        ca = lp["cross_attn"]
        c = cross_mha(d, enc_out, ca, enc_km3, nh)
        d = linear_add_ln(c.reshape(BS, H), ca["o_w"], ca["o_b"],
                          d.reshape(BS, H), lp["lnc_g"], lp["lnc_b"]).reshape(B, S, H)
        f = linear(d.reshape(BS, H), lp["fc1_w"], lp["fc1_b"], activation="gelu")
        d = linear_add_ln(f, lp["fc2_w"], lp["fc2_b"],
                          d.reshape(BS, H), lp["ln2_g"], lp["ln2_b"]).reshape(B, S, H)

    # classifier on first decoder token (last_hidden_state[:, 0, :]).
    # N=7 (<128 lanes) => keep this tiny matmul in plain XLA to avoid masked stores.
    cls = d[:, 0, :].astype(jnp.float32)
    return cls @ params["clf_w"] + params["clf_b"]


# -----------------------------------------------------------------------------
# Deterministic synthetic parameter init (weights bf16 for the MXU, biases/LN f32)
# -----------------------------------------------------------------------------
def init_params(key, cfg, wdtype=jnp.bfloat16):
    H, F = cfg["d_model"], cfg["ffn"]

    def nxt():
        nonlocal key
        key, sub = jax.random.split(key)
        return sub

    def dense(i, o, dtype=wdtype):
        w = (jax.random.normal(nxt(), (i, o), jnp.float32) * 0.02).astype(dtype)
        return w, jnp.zeros((o,), jnp.float32)

    def ln():
        return jnp.ones((H,), jnp.float32), jnp.zeros((H,), jnp.float32)

    def self_attn_p():
        p = {}
        p["qkv_w"], p["qkv_b"] = dense(H, 3 * H)   # fused q|k|v projection
        p["o_w"], p["o_b"] = dense(H, H)
        return p

    def cross_attn_p():
        p = {}
        p["q_w"], p["q_b"] = dense(H, H)
        p["kv_w"], p["kv_b"] = dense(H, 2 * H)     # fused k|v projection
        p["o_w"], p["o_b"] = dense(H, H)
        return p

    def enc_layer():
        lp = {"self_attn": self_attn_p()}
        lp["ln1_g"], lp["ln1_b"] = ln()
        lp["fc1_w"], lp["fc1_b"] = dense(H, F)
        lp["fc2_w"], lp["fc2_b"] = dense(F, H)
        lp["ln2_g"], lp["ln2_b"] = ln()
        return lp

    def dec_layer():
        lp = {"self_attn": self_attn_p()}
        lp["ln1_g"], lp["ln1_b"] = ln()
        lp["cross_attn"] = cross_attn_p()
        lp["lnc_g"], lp["lnc_b"] = ln()
        lp["fc1_w"], lp["fc1_b"] = dense(H, F)
        lp["fc2_w"], lp["fc2_b"] = dense(F, H)
        lp["ln2_g"], lp["ln2_b"] = ln()
        return lp

    params = {
        "shared_emb": (jax.random.normal(nxt(), (cfg["vocab"], H), jnp.float32)
                       * 0.02).astype(wdtype),
        "enc_pos_emb": (jax.random.normal(nxt(), (cfg["max_pos"], H), jnp.float32)
                        * 0.02).astype(wdtype),
        "dec_pos_emb": (jax.random.normal(nxt(), (cfg["max_pos"], H), jnp.float32)
                        * 0.02).astype(wdtype),
    }
    params["enc_ln_emb_g"], params["enc_ln_emb_b"] = ln()
    params["dec_ln_emb_g"], params["dec_ln_emb_b"] = ln()
    params["enc_layers"] = [enc_layer() for _ in range(cfg["enc_layers"])]
    params["dec_layers"] = [dec_layer() for _ in range(cfg["dec_layers"])]
    # classifier kept in f32 / plain XLA
    params["clf_w"], params["clf_b"] = dense(H, cfg["num_labels"], dtype=jnp.float32)
    return params


# -----------------------------------------------------------------------------
if __name__ == "__main__":
    cfg = dict(vocab=64, d_model=32, num_heads=4, ffn=64, enc_layers=2,
               dec_layers=2, max_pos=64, pad_id=1, eos_id=2, num_labels=7)

    key = jax.random.PRNGKey(0)
    pkey, dkey = jax.random.split(key)
    params = init_params(pkey, cfg)

    B, S = 2, 8
    input_ids = jax.random.randint(dkey, (B, S), 3, cfg["vocab"], dtype=jnp.int32)
    attention_mask = jnp.ones((B, S), jnp.int32)
    # pad the tail of the second example to exercise the mask path
    input_ids = input_ids.at[1, S - 2:].set(cfg["pad_id"])
    attention_mask = attention_mask.at[1, S - 2:].set(0)

    fwd = jax.jit(lambda p, ids, m: bart_with_classifier_forward(p, ids, m, cfg))
    logits = fwd(params, input_ids, attention_mask)
    jax.block_until_ready(logits)

    assert logits.shape == (B, cfg["num_labels"]) and logits.dtype == jnp.float32
    assert bool(jnp.all(jnp.isfinite(logits)))
    print("KERNEL_OK")
</pallas_src>

<mosaic_0001>
module attributes {stable_mosaic.version = 11 : i64} {
  func.func @_mm_kernel(%arg0: i32, %arg1: i32, %arg2: i32, %arg3: memref<16x32xbf16, #tpu.memory_space<vmem>>, %arg4: memref<32x96xbf16, #tpu.memory_space<vmem>>, %arg5: memref<1x96xf32, #tpu.memory_space<vmem>>, %arg6: memref<16x96xbf16, #tpu.memory_space<vmem>>, %arg7: memref<16x96xf32, #tpu.memory_space<vmem>>) attributes {dimension_semantics = [#tpu.dimension_semantics<parallel>, #tpu.dimension_semantics<parallel>, #tpu.dimension_semantics<arbitrary>], iteration_bounds = array<i64: 1, 1, 1>, scalar_prefetch = 0 : i64, scratch_operands = 1 : i64, tpu.core_type = #tpu.core_type<tc>, window_params = [{transform_indices = @transform_0, window_bounds = array<i64: 16, 32>}, {transform_indices = @transform_1, window_bounds = array<i64: 32, 96>}, {transform_indices = @transform_2, window_bounds = array<i64: 1, 96>}, {transform_indices = @transform_3, window_bounds = array<i64: 16, 96>}]} {
    %c0_i32 = arith.constant 0 : i32
    %0 = arith.cmpi eq, %arg2, %c0_i32 : i32
    %1 = arith.extui %0 : i1 to i32
    %c0_i32_0 = arith.constant 0 : i32
    %2 = arith.cmpi ne, %1, %c0_i32_0 : i32
    scf.if %2 {
      %cst_10 = arith.constant 0.000000e+00 : f32
      %12 = vector.broadcast %cst_10 : f32 to vector<16x96xf32>
      %c0_11 = arith.constant 0 : index
      %c0_12 = arith.constant 0 : index
      %13 = vector.load %arg7[%c0_11, %c0_12] : memref<16x96xf32, #tpu.memory_space<vmem>>, vector<16x96xf32>
      tpu.vector_store %arg7[%c0_11, %c0_12], %12 {strides = array<i32>} : memref<16x96xf32, #tpu.memory_space<vmem>>, vector<16x96xf32>,
    } else {
    }
    %c0 = arith.constant 0 : index
    %c0_1 = arith.constant 0 : index
    %3 = vector.load %arg7[%c0, %c0_1] : memref<16x96xf32, #tpu.memory_space<vmem>>, vector<16x96xf32>
    %c0_2 = arith.constant 0 : index
    %c0_3 = arith.constant 0 : index
    %4 = vector.load %arg3[%c0_2, %c0_3] : memref<16x32xbf16, #tpu.memory_space<vmem>>, vector<16x32xbf16>
    %c0_4 = arith.constant 0 : index
    %c0_5 = arith.constant 0 : index
    %5 = vector.load %arg4[%c0_4, %c0_5] : memref<32x96xbf16, #tpu.memory_space<vmem>>, vector<32x96xbf16>
    %cst = arith.constant dense<0.000000e+00> : vector<16x96xf32>
    %6 = tpu.matmul %4, %5, %cst {dimension_numbers = #tpu.dot_dimension_numbers<[1], [0], [0], [1], [0, 0, 1, 1], [], []>} : vector<16x32xbf16>, vector<32x96xbf16>, vector<16x96xf32> -> vector<16x96xf32>
    %7 = arith.addf %3, %6 : vector<16x96xf32>
    %c0_6 = arith.constant 0 : index
    %c0_7 = arith.constant 0 : index
    %8 = vector.load %arg7[%c0_6, %c0_7] : memref<16x96xf32, #tpu.memory_space<vmem>>, vector<16x96xf32>
    tpu.vector_store %arg7[%c0_6, %c0_7], %7 {strides = array<i32>} : memref<16x96xf32, #tpu.memory_space<vmem>>, vector<16x96xf32>,
    %c0_i32_8 = arith.constant 0 : i32
    %9 = arith.cmpi eq, %arg2, %c0_i32_8 : i32
    %10 = arith.extui %9 : i1 to i32
    %c0_i32_9 = arith.constant 0 : i32
    %11 = arith.cmpi ne, %10, %c0_i32_9 : i32
    scf.if %11 {
      %c0_10 = arith.constant 0 : index
      %c0_11 = arith.constant 0 : index
      %12 = vector.load %arg7[%c0_10, %c0_11] : memref<16x96xf32, #tpu.memory_space<vmem>>, vector<16x96xf32>
      %c0_12 = arith.constant 0 : index
      %c0_13 = arith.constant 0 : index
      %13 = vector.load %arg5[%c0_12, %c0_13] : memref<1x96xf32, #tpu.memory_space<vmem>>, vector<1x96xf32>
      %14 = vector.broadcast %13 : vector<1x96xf32> to vector<16x96xf32>
      %15 = arith.addf %12, %14 : vector<16x96xf32>
      %16 = arith.truncf %15 : vector<16x96xf32> to vector<16x96xbf16>
      %c0_14 = arith.constant 0 : index
      %c0_15 = arith.constant 0 : index
      %17 = vector.load %arg6[%c0_14, %c0_15] : memref<16x96xbf16, #tpu.memory_space<vmem>>, vector<16x96xbf16>
      tpu.vector_store %arg6[%c0_14, %c0_15], %16 {strides = array<i32>} : memref<16x96xbf16, #tpu.memory_space<vmem>>, vector<16x96xbf16>,
    } else {
    }
    return
  }
  func.func @transform_0(%arg0: i32, %arg1: i32, %arg2: i32) -> (i32, i32) {
    %c0_i32 = arith.constant 0 : i32
    return %arg0, %arg2 : i32, i32
  }
  func.func @transform_1(%arg0: i32, %arg1: i32, %arg2: i32) -> (i32, i32) {
    %c0_i32 = arith.constant 0 : i32
    return %arg2, %arg1 : i32, i32
  }
  func.func @transform_2(%arg0: i32, %arg1: i32, %arg2: i32) -> (i32, i32) {
    %c0_i32 = arith.constant 0 : i32
    %c0_i32_0 = arith.constant 0 : i32
    return %c0_i32, %arg1 : i32, i32
  }
  func.func @transform_3(%arg0: i32, %arg1: i32, %arg2: i32) -> (i32, i32) {
    %c0_i32 = arith.constant 0 : i32
    return %arg0, %arg1 : i32, i32
  }
}

module attributes {stable_mosaic.version = 11 : i64} {
  func.func @_ln_kernel(%arg0: i32, %arg1: memref<16x32xbf16, #tpu.memory_space<vmem>>, %arg2: memref<1x32xf32, #tpu.memory_space<vmem>>, %arg3: memref<1x32xf32, #tpu.memory_space<vmem>>, %arg4: memref<16x32xbf16, #tpu.memory_space<vmem>>) attributes {dimension_semantics = [#tpu.dimension_semantics<parallel>], iteration_bounds = array<i64: 1>, scalar_prefetch = 0 : i64, scratch_operands = 0 : i64, tpu.core_type = #tpu.core_type<tc>, window_params = [{transform_indices = @transform_0, window_bounds = array<i64: 16, 32>}, {pipeline_mode = #tpu.pipeline_mode<synchronous>, transform_indices = @transform_1, window_bounds = array<i64: 1, 32>}, {pipeline_mode = #tpu.pipeline_mode<synchronous>, transform_indices = @transform_2, window_bounds = array<i64: 1, 32>}, {transform_indices = @transform_3, window_bounds = array<i64: 16, 32>}]} {
    %c0 = arith.constant 0 : index
    %c0_0 = arith.constant 0 : index
    %0 = vector.load %arg1[%c0, %c0_0] : memref<16x32xbf16, #tpu.memory_space<vmem>>, vector<16x32xbf16>
    %1 = arith.extf %0 : vector<16x32xbf16> to vector<16x32xf32>
    %cst = arith.constant dense<0.000000e+00> : vector<16xf32>
    %2 = vector.multi_reduction <add>, %1, %cst [1] : vector<16x32xf32> to vector<16xf32>
    %3 = vector.shape_cast %2 : vector<16xf32> to vector<16x1xf32>
    %cst_1 = arith.constant 3.200000e+01 : f32
    %4 = vector.broadcast %cst_1 : f32 to vector<16x1xf32>
    %5 = arith.divf %3, %4 : vector<16x1xf32>
    %6 = vector.broadcast %5 : vector<16x1xf32> to vector<16x32xf32>
    %7 = arith.subf %1, %6 : vector<16x32xf32>
    %8 = arith.mulf %7, %7 : vector<16x32xf32>
    %cst_2 = arith.constant dense<0.000000e+00> : vector<16xf32>
    %9 = vector.multi_reduction <add>, %8, %cst_2 [1] : vector<16x32xf32> to vector<16xf32>
    %10 = vector.shape_cast %9 : vector<16xf32> to vector<16x1xf32>
    %cst_3 = arith.constant 3.200000e+01 : f32
    %11 = vector.broadcast %cst_3 : f32 to vector<16x1xf32>
    %12 = arith.divf %10, %11 : vector<16x1xf32>
    %13 = vector.broadcast %5 : vector<16x1xf32> to vector<16x32xf32>
    %14 = arith.subf %1, %13 : vector<16x32xf32>
    %cst_4 = arith.constant 9.99999974E-6 : f32
    %15 = vector.broadcast %cst_4 : f32 to vector<16x1xf32>
    %16 = arith.addf %12, %15 : vector<16x1xf32>
    %17 = math.rsqrt %16 : vector<16x1xf32>
    %18 = vector.broadcast %17 : vector<16x1xf32> to vector<16x32xf32>
    %19 = arith.mulf %14, %18 : vector<16x32xf32>
    %c0_5 = arith.constant 0 : index
    %c0_6 = arith.constant 0 : index
    %20 = vector.load %arg2[%c0_5, %c0_6] : memref<1x32xf32, #tpu.memory_space<vmem>>, vector<1x32xf32>
    %21 = vector.broadcast %20 : vector<1x32xf32> to vector<16x32xf32>
    %22 = arith.mulf %19, %21 : vector<16x32xf32>
    %c0_7 = arith.constant 0 : index
    %c0_8 = arith.constant 0 : index
    %23 = vector.load %arg3[%c0_7, %c0_8] : memref<1x32xf32, #tpu.memory_space<vmem>>, vector<1x32xf32>
    %24 = vector.broadcast %23 : vector<1x32xf32> to vector<16x32xf32>
    %25 = arith.addf %22, %24 : vector<16x32xf32>
    %26 = arith.truncf %25 : vector<16x32xf32> to vector<16x32xbf16>
    %c0_9 = arith.constant 0 : index
    %c0_10 = arith.constant 0 : index
    %27 = vector.load %arg4[%c0_9, %c0_10] : memref<16x32xbf16, #tpu.memory_space<vmem>>, vector<16x32xbf16>
    tpu.vector_store %arg4[%c0_9, %c0_10], %26 {strides = array<i32>} : memref<16x32xbf16, #tpu.memory_space<vmem>>, vector<16x32xbf16>,
    return
  }
  func.func @transform_0(%arg0: i32) -> (i32, i32) {
    %c0_i32 = arith.constant 0 : i32
    %c0_i32_0 = arith.constant 0 : i32
    return %arg0, %c0_i32 : i32, i32
  }
  func.func @transform_1(%arg0: i32) -> (i32, i32) {
    %c0_i32 = arith.constant 0 : i32
    %c0_i32_0 = arith.constant 0 : i32
    %c0_i32_1 = arith.constant 0 : i32
    return %c0_i32, %c0_i32_0 : i32, i32
  }
  func.func @transform_2(%arg0: i32) -> (i32, i32) {
    %c0_i32 = arith.constant 0 : i32
    %c0_i32_0 = arith.constant 0 : i32
    %c0_i32_1 = arith.constant 0 : i32
    return %c0_i32, %c0_i32_0 : i32, i32
  }
  func.func @transform_3(%arg0: i32) -> (i32, i32) {
    %c0_i32 = arith.constant 0 : i32
    %c0_i32_0 = arith.constant 0 : i32
    return %arg0, %c0_i32 : i32, i32
  }
}

module attributes {stable_mosaic.version = 11 : i64} {
  func.func @_mm_add_ln_kernel(%arg0: i32, %arg1: i32, %arg2: memref<16x32xbf16, #tpu.memory_space<vmem>>, %arg3: memref<32x32xbf16, #tpu.memory_space<vmem>>, %arg4: memref<1x32xf32, #tpu.memory_space<vmem>>, %arg5: memref<16x32xbf16, #tpu.memory_space<vmem>>, %arg6: memref<1x32xf32, #tpu.memory_space<vmem>>, %arg7: memref<1x32xf32, #tpu.memory_space<vmem>>, %arg8: memref<16x32xbf16, #tpu.memory_space<vmem>>, %arg9: memref<16x32xf32, #tpu.memory_space<vmem>>) attributes {dimension_semantics = [#tpu.dimension_semantics<parallel>, #tpu.dimension_semantics<arbitrary>], iteration_bounds = array<i64: 1, 1>, scalar_prefetch = 0 : i64, scratch_operands = 1 : i64, tpu.core_type = #tpu.core_type<tc>, window_params = [{transform_indices = @transform_0, window_bounds = array<i64: 16, 32>}, {transform_indices = @transform_1, window_bounds = array<i64: 32, 32>}, {pipeline_mode = #tpu.pipeline_mode<synchronous>, transform_indices = @transform_2, window_bounds = array<i64: 1, 32>}, {transform_indices = @transform_3, window_bounds = array<i64: 16, 32>}, {pipeline_mode = #tpu.pipeline_mode<synchronous>, transform_indices = @transform_4, window_bounds = array<i64: 1, 32>}, {pipeline_mode = #tpu.pipeline_mode<synchronous>, transform_indices = @transform_5, window_bounds = array<i64: 1, 32>}, {transform_indices = @transform_6, window_bounds = array<i64: 16, 32>}]} {
    %c0_i32 = arith.constant 0 : i32
    %0 = arith.cmpi eq, %arg1, %c0_i32 : i32
    %1 = arith.extui %0 : i1 to i32
    %c0_i32_0 = arith.constant 0 : i32
    %2 = arith.cmpi ne, %1, %c0_i32_0 : i32
    scf.if %2 {
      %cst_10 = arith.constant 0.000000e+00 : f32
      %12 = vector.broadcast %cst_10 : f32 to vector<16x32xf32>
      %c0_11 = arith.constant 0 : index
      %c0_12 = arith.constant 0 : index
      %13 = vector.load %arg9[%c0_11, %c0_12] : memref<16x32xf32, #tpu.memory_space<vmem>>, vector<16x32xf32>
      tpu.vector_store %arg9[%c0_11, %c0_12], %12 {strides = array<i32>} : memref<16x32xf32, #tpu.memory_space<vmem>>, vector<16x32xf32>,
    } else {
    }
    %c0 = arith.constant 0 : index
    %c0_1 = arith.constant 0 : index
    %3 = vector.load %arg9[%c0, %c0_1] : memref<16x32xf32, #tpu.memory_space<vmem>>, vector<16x32xf32>
    %c0_2 = arith.constant 0 : index
    %c0_3 = arith.constant 0 : index
    %4 = vector.load %arg2[%c0_2, %c0_3] : memref<16x32xbf16, #tpu.memory_space<vmem>>, vector<16x32xbf16>
    %c0_4 = arith.constant 0 : index
    %c0_5 = arith.constant 0 : index
    %5 = vector.load %arg3[%c0_4, %c0_5] : memref<32x32xbf16, #tpu.memory_space<vmem>>, vector<32x32xbf16>
    %cst = arith.constant dense<0.000000e+00> : vector<16x32xf32>
    %6 = tpu.matmul %4, %5, %cst {dimension_numbers = #tpu.dot_dimension_numbers<[1], [0], [0], [1], [0, 0, 1, 1], [], []>} : vector<16x32xbf16>, vector<32x32xbf16>, vector<16x32xf32> -> vector<16x32xf32>
    %7 = arith.addf %3, %6 : vector<16x32xf32>
    %c0_6 = arith.constant 0 : index
    %c0_7 = arith.constant 0 : index
    %8 = vector.load %arg9[%c0_6, %c0_7] : memref<16x32xf32, #tpu.memory_space<vmem>>, vector<16x32xf32>
    tpu.vector_store %arg9[%c0_6, %c0_7], %7 {strides = array<i32>} : memref<16x32xf32, #tpu.memory_space<vmem>>, vector<16x32xf32>,
    %c0_i32_8 = arith.constant 0 : i32
    %9 = arith.cmpi eq, %arg1, %c0_i32_8 : i32
    %10 = arith.extui %9 : i1 to i32
    %c0_i32_9 = arith.constant 0 : i32
    %11 = arith.cmpi ne, %10, %c0_i32_9 : i32
    scf.if %11 {
      %c0_10 = arith.constant 0 : index
      %c0_11 = arith.constant 0 : index
      %12 = vector.load %arg9[%c0_10, %c0_11] : memref<16x32xf32, #tpu.memory_space<vmem>>, vector<16x32xf32>
      %c0_12 = arith.constant 0 : index
      %c0_13 = arith.constant 0 : index
      %13 = vector.load %arg4[%c0_12, %c0_13] : memref<1x32xf32, #tpu.memory_space<vmem>>, vector<1x32xf32>
      %14 = vector.broadcast %13 : vector<1x32xf32> to vector<16x32xf32>
      %15 = arith.addf %12, %14 : vector<16x32xf32>
      %c0_14 = arith.constant 0 : index
      %c0_15 = arith.constant 0 : index
      %16 = vector.load %arg5[%c0_14, %c0_15] : memref<16x32xbf16, #tpu.memory_space<vmem>>, vector<16x32xbf16>
      %17 = arith.extf %16 : vector<16x32xbf16> to vector<16x32xf32>
      %18 = arith.addf %15, %17 : vector<16x32xf32>
      %cst_16 = arith.constant dense<0.000000e+00> : vector<16xf32>
      %19 = vector.multi_reduction <add>, %18, %cst_16 [1] : vector<16x32xf32> to vector<16xf32>
      %20 = vector.shape_cast %19 : vector<16xf32> to vector<16x1xf32>
      %cst_17 = arith.constant 3.200000e+01 : f32
      %21 = vector.broadcast %cst_17 : f32 to vector<16x1xf32>
      %22 = arith.divf %20, %21 : vector<16x1xf32>
      %23 = vector.broadcast %22 : vector<16x1xf32> to vector<16x32xf32>
      %24 = arith.subf %18, %23 : vector<16x32xf32>
      %25 = arith.mulf %24, %24 : vector<16x32xf32>
      %cst_18 = arith.constant dense<0.000000e+00> : vector<16xf32>
      %26 = vector.multi_reduction <add>, %25, %cst_18 [1] : vector<16x32xf32> to vector<16xf32>
      %27 = vector.shape_cast %26 : vector<16xf32> to vector<16x1xf32>
      %cst_19 = arith.constant 3.200000e+01 : f32
      %28 = vector.broadcast %cst_19 : f32 to vector<16x1xf32>
      %29 = arith.divf %27, %28 : vector<16x1xf32>
      %30 = vector.broadcast %22 : vector<16x1xf32> to vector<16x32xf32>
      %31 = arith.subf %18, %30 : vector<16x32xf32>
      %cst_20 = arith.constant 9.99999974E-6 : f32
      %32 = vector.broadcast %cst_20 : f32 to vector<16x1xf32>
      %33 = arith.addf %29, %32 : vector<16x1xf32>
      %34 = math.rsqrt %33 : vector<16x1xf32>
      %35 = vector.broadcast %34 : vector<16x1xf32> to vector<16x32xf32>
      %36 = arith.mulf %31, %35 : vector<16x32xf32>
      %c0_21 = arith.constant 0 : index
      %c0_22 = arith.constant 0 : index
      %37 = vector.load %arg6[%c0_21, %c0_22] : memref<1x32xf32, #tpu.memory_space<vmem>>, vector<1x32xf32>
      %38 = vector.broadcast %37 : vector<1x32xf32> to vector<16x32xf32>
      %39 = arith.mulf %36, %38 : vector<16x32xf32>
      %c0_23 = arith.constant 0 : index
      %c0_24 = arith.constant 0 : index
      %40 = vector.load %arg7[%c0_23, %c0_24] : memref<1x32xf32, #tpu.memory_space<vmem>>, vector<1x32xf32>
      %41 = vector.broadcast %40 : vector<1x32xf32> to vector<16x32xf32>
      %42 = arith.addf %39, %41 : vector<16x32xf32>
      %43 = arith.truncf %42 : vector<16x32xf32> to vector<16x32xbf16>
      %c0_25 = arith.constant 0 : index
      %c0_26 = arith.constant 0 : index
      %44 = vector.load %arg8[%c0_25, %c0_26] : memref<16x32xbf16, #tpu.memory_space<vmem>>, vector<16x32xbf16>
      tpu.vector_store %arg8[%c0_25, %c0_26], %43 {strides = array<i32>} : memref<16x32xbf16, #tpu.memory_space<vmem>>, vector<16x32xbf16>,
    } else {
    }
    return
  }
  func.func @transform_0(%arg0: i32, %arg1: i32) -> (i32, i32) {
    %c0_i32 = arith.constant 0 : i32
    return %arg0, %arg1 : i32, i32
  }
  func.func @transform_1(%arg0: i32, %arg1: i32) -> (i32, i32) {
    %c0_i32 = arith.constant 0 : i32
    %c0_i32_0 = arith.constant 0 : i32
    return %arg1, %c0_i32 : i32, i32
  }
  func.func @transform_2(%arg0: i32, %arg1: i32) -> (i32, i32) {
    %c0_i32 = arith.constant 0 : i32
    %c0_i32_0 = arith.constant 0 : i32
    %c0_i32_1 = arith.constant 0 : i32
    return %c0_i32, %c0_i32_0 : i32, i32
  }
  func.func @transform_3(%arg0: i32, %arg1: i32) -> (i32, i32) {
    %c0_i32 = arith.constant 0 : i32
    %c0_i32_0 = arith.constant 0 : i32
    return %arg0, %c0_i32 : i32, i32
  }
  func.func @transform_4(%arg0: i32, %arg1: i32) -> (i32, i32) {
    %c0_i32 = arith.constant 0 : i32
    %c0_i32_0 = arith.constant 0 : i32
    %c0_i32_1 = arith.constant 0 : i32
    return %c0_i32, %c0_i32_0 : i32, i32
  }
  func.func @transform_5(%arg0: i32, %arg1: i32) -> (i32, i32) {
    %c0_i32 = arith.constant 0 : i32
    %c0_i32_0 = arith.constant 0 : i32
    %c0_i32_1 = arith.constant 0 : i32
    return %c0_i32, %c0_i32_0 : i32, i32
  }
  func.func @transform_6(%arg0: i32, %arg1: i32) -> (i32, i32) {
    %c0_i32 = arith.constant 0 : i32
    %c0_i32_0 = arith.constant 0 : i32
    return %arg0, %c0_i32 : i32, i32
  }
}

module attributes {stable_mosaic.version = 11 : i64} {
  func.func @_attn_kernel(%arg0: i32, %arg1: i32, %arg2: memref<1x8x96xbf16, #tpu.memory_space<vmem>>, %arg3: memref<1x8x96xbf16, #tpu.memory_space<vmem>>, %arg4: memref<1x8x96xbf16, #tpu.memory_space<vmem>>, %arg5: memref<1x1x8xf32, #tpu.memory_space<vmem>>, %arg6: memref<1x8x32xbf16, #tpu.memory_space<vmem>>) attributes {dimension_semantics = [#tpu.dimension_semantics<parallel>, #tpu.dimension_semantics<parallel>], iteration_bounds = array<i64: 2, 1>, scalar_prefetch = 0 : i64, scratch_operands = 0 : i64, tpu.core_type = #tpu.core_type<tc>, window_params = [{transform_indices = @transform_0, window_bounds = array<i64: 1, 8, 96>}, {transform_indices = @transform_1, window_bounds = array<i64: 1, 8, 96>}, {transform_indices = @transform_2, window_bounds = array<i64: 1, 8, 96>}, {transform_indices = @transform_3, window_bounds = array<i64: 1, 1, 8>}, {transform_indices = @transform_4, window_bounds = array<i64: 1, 8, 32>}]} {
    %c0 = arith.constant 0 : index
    %c0_0 = arith.constant 0 : index
    %c0_1 = arith.constant 0 : index
    %0 = vector.load %arg5[%c0, %c0_0, %c0_1] : memref<1x1x8xf32, #tpu.memory_space<vmem>>, vector<1x1x8xf32>
    %1 = vector.shape_cast %0 : vector<1x1x8xf32> to vector<1x8xf32>
    %cst = arith.constant 1.000000e+00 : f32
    %2 = vector.broadcast %cst : f32 to vector<1x8xf32>
    %3 = arith.subf %2, %1 : vector<1x8xf32>
    %cst_2 = arith.constant -1.000000e+09 : f32
    %4 = vector.broadcast %cst_2 : f32 to vector<1x8xf32>
    %5 = arith.mulf %3, %4 : vector<1x8xf32>
    %c8_i32 = arith.constant 8 : i32
    %6 = arith.muli %arg1, %c8_i32 : i32
    %7 = tpu.iota {dimensions = array<i32: 0>} : vector<8x8xi32>
    %8 = vector.broadcast %6 : i32 to vector<8x8xi32>
    %9 = arith.addi %7, %8 : vector<8x8xi32>
    %10 = tpu.iota {dimensions = array<i32: 1>} : vector<8x8xi32>
    %11 = arith.cmpi sgt, %10, %9 : vector<8x8xi32>
    %cst_3 = arith.constant -1.000000e+09 : f32
    %cst_4 = arith.constant 0.000000e+00 : f32
    %12 = vector.broadcast %cst_3 : f32 to vector<8x8xf32>
    %13 = vector.broadcast %cst_4 : f32 to vector<8x8xf32>
    %14 = arith.select %11, %12, %13 : vector<8x8xi1>, vector<8x8xf32>
    %15 = vector.broadcast %5 : vector<1x8xf32> to vector<8x8xf32>
    %16 = arith.addf %15, %14 : vector<8x8xf32>
    %c0_5 = arith.constant 0 : index
    %c0_6 = arith.constant 0 : index
    %c0_7 = arith.constant 0 : index
    %17 = vector.load %arg2[%c0_5, %c0_6, %c0_7] : memref<1x8x96xbf16, #tpu.memory_space<vmem>>, vector<1x8x8xbf16>
    %18 = vector.shape_cast %17 : vector<1x8x8xbf16> to vector<8x8xbf16>
    %c0_8 = arith.constant 0 : index
    %c0_9 = arith.constant 0 : index
    %c32 = arith.constant 32 : index
    %19 = vector.load %arg3[%c0_8, %c0_9, %c32] : memref<1x8x96xbf16, #tpu.memory_space<vmem>>, vector<1x8x8xbf16>
    %20 = vector.shape_cast %19 : vector<1x8x8xbf16> to vector<8x8xbf16>
    %c0_10 = arith.constant 0 : index
    %c0_11 = arith.constant 0 : index
    %c64 = arith.constant 64 : index
    %21 = vector.load %arg4[%c0_10, %c0_11, %c64] : memref<1x8x96xbf16, #tpu.memory_space<vmem>>, vector<1x8x8xbf16>
    %22 = vector.shape_cast %21 : vector<1x8x8xbf16> to vector<8x8xbf16>
    %cst_12 = arith.constant dense<0.000000e+00> : vector<8x8xf32>
    %23 = tpu.matmul %18, %20, %cst_12 {dimension_numbers = #tpu.dot_dimension_numbers<[1], [1], [0], [0], [0, 0, 1, 0], [], []>} : vector<8x8xbf16>, vector<8x8xbf16>, vector<8x8xf32> -> vector<8x8xf32>
    %cst_13 = arith.constant 0.353553385 : f32
    %24 = vector.broadcast %cst_13 : f32 to vector<8x8xf32>
    %25 = arith.mulf %23, %24 : vector<8x8xf32>
    %26 = arith.addf %25, %16 : vector<8x8xf32>
    %cst_14 = arith.constant dense<0xFF800000> : vector<8xf32>
    %27 = vector.multi_reduction <maximumf>, %26, %cst_14 [1] : vector<8x8xf32> to vector<8xf32>
    %28 = vector.shape_cast %27 : vector<8xf32> to vector<8x1xf32>
    %29 = vector.broadcast %28 : vector<8x1xf32> to vector<8x8xf32>
    %30 = arith.subf %26, %29 : vector<8x8xf32>
    %31 = math.exp %30 : vector<8x8xf32>
    %cst_15 = arith.constant dense<0.000000e+00> : vector<8xf32>
    %32 = vector.multi_reduction <add>, %31, %cst_15 [1] : vector<8x8xf32> to vector<8xf32>
    %33 = vector.shape_cast %32 : vector<8xf32> to vector<8x1xf32>
    %34 = tpu.reciprocal %33 {approx = true} : vector<8x1xf32> -> vector<8x1xf32>
    %35 = vector.broadcast %34 : vector<8x1xf32> to vector<8x8xf32>
    %36 = arith.mulf %31, %35 : vector<8x8xf32>
    %37 = arith.truncf %36 : vector<8x8xf32> to vector<8x8xbf16>
    %cst_16 = arith.constant dense<0.000000e+00> : vector<8x8xf32>
    %38 = tpu.matmul %37, %22, %cst_16 {dimension_numbers = #tpu.dot_dimension_numbers<[1], [0], [0], [1], [0, 0, 1, 1], [], []>} : vector<8x8xbf16>, vector<8x8xbf16>, vector<8x8xf32> -> vector<8x8xf32>
    %39 = arith.truncf %38 : vector<8x8xf32> to vector<8x8xbf16>
    %c0_17 = arith.constant 0 : index
    %c0_18 = arith.constant 0 : index
    %c0_19 = arith.constant 0 : index
    %40 = vector.load %arg6[%c0_17, %c0_18, %c0_19] : memref<1x8x32xbf16, #tpu.memory_space<vmem>>, vector<1x8x8xbf16>
    %41 = vector.shape_cast %40 : vector<1x8x8xbf16> to vector<8x8xbf16>
    %42 = vector.shape_cast %39 : vector<8x8xbf16> to vector<1x8x8xbf16>
    tpu.vector_store %arg6[%c0_17, %c0_18, %c0_19], %42 {strides = array<i32>} : memref<1x8x32xbf16, #tpu.memory_space<vmem>>, vector<1x8x8xbf16>,
    %c0_20 = arith.constant 0 : index
    %c0_21 = arith.constant 0 : index
    %c8 = arith.constant 8 : index
    %43 = vector.load %arg2[%c0_20, %c0_21, %c8] : memref<1x8x96xbf16, #tpu.memory_space<vmem>>, vector<1x8x8xbf16>
    %44 = vector.shape_cast %43 : vector<1x8x8xbf16> to vector<8x8xbf16>
    %c0_22 = arith.constant 0 : index
    %c0_23 = arith.constant 0 : index
    %c40 = arith.constant 40 : index
    %45 = vector.load %arg3[%c0_22, %c0_23, %c40] : memref<1x8x96xbf16, #tpu.memory_space<vmem>>, vector<1x8x8xbf16>
    %46 = vector.shape_cast %45 : vector<1x8x8xbf16> to vector<8x8xbf16>
    %c0_24 = arith.constant 0 : index
    %c0_25 = arith.constant 0 : index
    %c72 = arith.constant 72 : index
    %47 = vector.load %arg4[%c0_24, %c0_25, %c72] : memref<1x8x96xbf16, #tpu.memory_space<vmem>>, vector<1x8x8xbf16>
    %48 = vector.shape_cast %47 : vector<1x8x8xbf16> to vector<8x8xbf16>
    %cst_26 = arith.constant dense<0.000000e+00> : vector<8x8xf32>
    %49 = tpu.matmul %44, %46, %cst_26 {dimension_numbers = #tpu.dot_dimension_numbers<[1], [1], [0], [0], [0, 0, 1, 0], [], []>} : vector<8x8xbf16>, vector<8x8xbf16>, vector<8x8xf32> -> vector<8x8xf32>
    %cst_27 = arith.constant 0.353553385 : f32
    %50 = vector.broadcast %cst_27 : f32 to vector<8x8xf32>
    %51 = arith.mulf %49, %50 : vector<8x8xf32>
    %52 = arith.addf %51, %16 : vector<8x8xf32>
    %cst_28 = arith.constant dense<0xFF800000> : vector<8xf32>
    %53 = vector.multi_reduction <maximumf>, %52, %cst_28 [1] : vector<8x8xf32> to vector<8xf32>
    %54 = vector.shape_cast %53 : vector<8xf32> to vector<8x1xf32>
    %55 = vector.broadcast %54 : vector<8x1xf32> to vector<8x8xf32>
    %56 = arith.subf %52, %55 : vector<8x8xf32>
    %57 = math.exp %56 : vector<8x8xf32>
    %cst_29 = arith.constant dense<0.000000e+00> : vector<8xf32>
    %58 = vector.multi_reduction <add>, %57, %cst_29 [1] : vector<8x8xf32> to vector<8xf32>
    %59 = vector.shape_cast %58 : vector<8xf32> to vector<8x1xf32>
    %60 = tpu.reciprocal %59 {approx = true} : vector<8x1xf32> -> vector<8x1xf32>
    %61 = vector.broadcast %60 : vector<8x1xf32> to vector<8x8xf32>
    %62 = arith.mulf %57, %61 : vector<8x8xf32>
    %63 = arith.truncf %62 : vector<8x8xf32> to vector<8x8xbf16>
    %cst_30 = arith.constant dense<0.000000e+00> : vector<8x8xf32>
    %64 = tpu.matmul %63, %48, %cst_30 {dimension_numbers = #tpu.dot_dimension_numbers<[1], [0], [0], [1], [0, 0, 1, 1], [], []>} : vector<8x8xbf16>, vector<8x8xbf16>, vector<8x8xf32> -> vector<8x8xf32>
    %65 = arith.truncf %64 : vector<8x8xf32> to vector<8x8xbf16>
    %c0_31 = arith.constant 0 : index
    %c0_32 = arith.constant 0 : index
    %c8_33 = arith.constant 8 : index
    %66 = vector.load %arg6[%c0_31, %c0_32, %c8_33] : memref<1x8x32xbf16, #tpu.memory_space<vmem>>, vector<1x8x8xbf16>
    %67 = vector.shape_cast %66 : vector<1x8x8xbf16> to vector<8x8xbf16>
    %68 = vector.shape_cast %65 : vector<8x8xbf16> to vector<1x8x8xbf16>
    tpu.vector_store %arg6[%c0_31, %c0_32, %c8_33], %68 {strides = array<i32>} : memref<1x8x32xbf16, #tpu.memory_space<vmem>>, vector<1x8x8xbf16>,
    %c0_34 = arith.constant 0 : index
    %c0_35 = arith.constant 0 : index
    %c16 = arith.constant 16 : index
    %69 = vector.load %arg2[%c0_34, %c0_35, %c16] : memref<1x8x96xbf16, #tpu.memory_space<vmem>>, vector<1x8x8xbf16>
    %70 = vector.shape_cast %69 : vector<1x8x8xbf16> to vector<8x8xbf16>
    %c0_36 = arith.constant 0 : index
    %c0_37 = arith.constant 0 : index
    %c48 = arith.constant 48 : index
    %71 = vector.load %arg3[%c0_36, %c0_37, %c48] : memref<1x8x96xbf16, #tpu.memory_space<vmem>>, vector<1x8x8xbf16>
    %72 = vector.shape_cast %71 : vector<1x8x8xbf16> to vector<8x8xbf16>
    %c0_38 = arith.constant 0 : index
    %c0_39 = arith.constant 0 : index
    %c80 = arith.constant 80 : index
    %73 = vector.load %arg4[%c0_38, %c0_39, %c80] : memref<1x8x96xbf16, #tpu.memory_space<vmem>>, vector<1x8x8xbf16>
    %74 = vector.shape_cast %73 : vector<1x8x8xbf16> to vector<8x8xbf16>
    %cst_40 = arith.constant dense<0.000000e+00> : vector<8x8xf32>
    %75 = tpu.matmul %70, %72, %cst_40 {dimension_numbers = #tpu.dot_dimension_numbers<[1], [1], [0], [0], [0, 0, 1, 0], [], []>} : vector<8x8xbf16>, vector<8x8xbf16>, vector<8x8xf32> -> vector<8x8xf32>
    %cst_41 = arith.constant 0.353553385 : f32
    %76 = vector.broadcast %cst_41 : f32 to vector<8x8xf32>
    %77 = arith.mulf %75, %76 : vector<8x8xf32>
    %78 = arith.addf %77, %16 : vector<8x8xf32>
    %cst_42 = arith.constant dense<0xFF800000> : vector<8xf32>
    %79 = vector.multi_reduction <maximumf>, %78, %cst_42 [1] : vector<8x8xf32> to vector<8xf32>
    %80 = vector.shape_cast %79 : vector<8xf32> to vector<8x1xf32>
    %81 = vector.broadcast %80 : vector<8x1xf32> to vector<8x8xf32>
    %82 = arith.subf %78, %81 : vector<8x8xf32>
    %83 = math.exp %82 : vector<8x8xf32>
    %cst_43 = arith.constant dense<0.000000e+00> : vector<8xf32>
    %84 = vector.multi_reduction <add>, %83, %cst_43 [1] : vector<8x8xf32> to vector<8xf32>
    %85 = vector.shape_cast %84 : vector<8xf32> to vector<8x1xf32>
    %86 = tpu.reciprocal %85 {approx = true} : vector<8x1xf32> -> vector<8x1xf32>
    %87 = vector.broadcast %86 : vector<8x1xf32> to vector<8x8xf32>
    %88 = arith.mulf %83, %87 : vector<8x8xf32>
    %89 = arith.truncf %88 : vector<8x8xf32> to vector<8x8xbf16>
    %cst_44 = arith.constant dense<0.000000e+00> : vector<8x8xf32>
    %90 = tpu.matmul %89, %74, %cst_44 {dimension_numbers = #tpu.dot_dimension_numbers<[1], [0], [0], [1], [0, 0, 1, 1], [], []>} : vector<8x8xbf16>, vector<8x8xbf16>, vector<8x8xf32> -> vector<8x8xf32>
    %91 = arith.truncf %90 : vector<8x8xf32> to vector<8x8xbf16>
    %c0_45 = arith.constant 0 : index
    %c0_46 = arith.constant 0 : index
    %c16_47 = arith.constant 16 : index
    %92 = vector.load %arg6[%c0_45, %c0_46, %c16_47] : memref<1x8x32xbf16, #tpu.memory_space<vmem>>, vector<1x8x8xbf16>
    %93 = vector.shape_cast %92 : vector<1x8x8xbf16> to vector<8x8xbf16>
    %94 = vector.shape_cast %91 : vector<8x8xbf16> to vector<1x8x8xbf16>
    tpu.vector_store %arg6[%c0_45, %c0_46, %c16_47], %94 {strides = array<i32>} : memref<1x8x32xbf16, #tpu.memory_space<vmem>>, vector<1x8x8xbf16>,
    %c0_48 = arith.constant 0 : index
    %c0_49 = arith.constant 0 : index
    %c24 = arith.constant 24 : index
    %95 = vector.load %arg2[%c0_48, %c0_49, %c24] : memref<1x8x96xbf16, #tpu.memory_space<vmem>>, vector<1x8x8xbf16>
    %96 = vector.shape_cast %95 : vector<1x8x8xbf16> to vector<8x8xbf16>
    %c0_50 = arith.constant 0 : index
    %c0_51 = arith.constant 0 : index
    %c56 = arith.constant 56 : index
    %97 = vector.load %arg3[%c0_50, %c0_51, %c56] : memref<1x8x96xbf16, #tpu.memory_space<vmem>>, vector<1x8x8xbf16>
    %98 = vector.shape_cast %97 : vector<1x8x8xbf16> to vector<8x8xbf16>
    %c0_52 = arith.constant 0 : index
    %c0_53 = arith.constant 0 : index
    %c88 = arith.constant 88 : index
    %99 = vector.load %arg4[%c0_52, %c0_53, %c88] : memref<1x8x96xbf16, #tpu.memory_space<vmem>>, vector<1x8x8xbf16>
    %100 = vector.shape_cast %99 : vector<1x8x8xbf16> to vector<8x8xbf16>
    %cst_54 = arith.constant dense<0.000000e+00> : vector<8x8xf32>
    %101 = tpu.matmul %96, %98, %cst_54 {dimension_numbers = #tpu.dot_dimension_numbers<[1], [1], [0], [0], [0, 0, 1, 0], [], []>} : vector<8x8xbf16>, vector<8x8xbf16>, vector<8x8xf32> -> vector<8x8xf32>
    %cst_55 = arith.constant 0.353553385 : f32
    %102 = vector.broadcast %cst_55 : f32 to vector<8x8xf32>
    %103 = arith.mulf %101, %102 : vector<8x8xf32>
    %104 = arith.addf %103, %16 : vector<8x8xf32>
    %cst_56 = arith.constant dense<0xFF800000> : vector<8xf32>
    %105 = vector.multi_reduction <maximumf>, %104, %cst_56 [1] : vector<8x8xf32> to vector<8xf32>
    %106 = vector.shape_cast %105 : vector<8xf32> to vector<8x1xf32>
    %107 = vector.broadcast %106 : vector<8x1xf32> to vector<8x8xf32>
    %108 = arith.subf %104, %107 : vector<8x8xf32>
    %109 = math.exp %108 : vector<8x8xf32>
    %cst_57 = arith.constant dense<0.000000e+00> : vector<8xf32>
    %110 = vector.multi_reduction <add>, %109, %cst_57 [1] : vector<8x8xf32> to vector<8xf32>
    %111 = vector.shape_cast %110 : vector<8xf32> to vector<8x1xf32>
    %112 = tpu.reciprocal %111 {approx = true} : vector<8x1xf32> -> vector<8x1xf32>
    %113 = vector.broadcast %112 : vector<8x1xf32> to vector<8x8xf32>
    %114 = arith.mulf %109, %113 : vector<8x8xf32>
    %115 = arith.truncf %114 : vector<8x8xf32> to vector<8x8xbf16>
    %cst_58 = arith.constant dense<0.000000e+00> : vector<8x8xf32>
    %116 = tpu.matmul %115, %100, %cst_58 {dimension_numbers = #tpu.dot_dimension_numbers<[1], [0], [0], [1], [0, 0, 1, 1], [], []>} : vector<8x8xbf16>, vector<8x8xbf16>, vector<8x8xf32> -> vector<8x8xf32>
    %117 = arith.truncf %116 : vector<8x8xf32> to vector<8x8xbf16>
    %c0_59 = arith.constant 0 : index
    %c0_60 = arith.constant 0 : index
    %c24_61 = arith.constant 24 : index
    %118 = vector.load %arg6[%c0_59, %c0_60, %c24_61] : memref<1x8x32xbf16, #tpu.memory_space<vmem>>, vector<1x8x8xbf16>
    %119 = vector.shape_cast %118 : vector<1x8x8xbf16> to vector<8x8xbf16>
    %120 = vector.shape_cast %117 : vector<8x8xbf16> to vector<1x8x8xbf16>
    tpu.vector_store %arg6[%c0_59, %c0_60, %c24_61], %120 {strides = array<i32>} : memref<1x8x32xbf16, #tpu.memory_space<vmem>>, vector<1x8x8xbf16>,
    return
  }
  func.func @transform_0(%arg0: i32, %arg1: i32) -> (i32, i32, i32) {
    %c0_i32 = arith.constant 0 : i32
    %c0_i32_0 = arith.constant 0 : i32
    return %arg0, %arg1, %c0_i32 : i32, i32, i32
  }
  func.func @transform_1(%arg0: i32, %arg1: i32) -> (i32, i32, i32) {
    %c0_i32 = arith.constant 0 : i32
    %c0_i32_0 = arith.constant 0 : i32
    %c0_i32_1 = arith.constant 0 : i32
    return %arg0, %c0_i32, %c0_i32_0 : i32, i32, i32
  }
  func.func @transform_2(%arg0: i32, %arg1: i32) -> (i32, i32, i32) {
    %c0_i32 = arith.constant 0 : i32
    %c0_i32_0 = arith.constant 0 : i32
    %c0_i32_1 = arith.constant 0 : i32
    return %arg0, %c0_i32, %c0_i32_0 : i32, i32, i32
  }
  func.func @transform_3(%arg0: i32, %arg1: i32) -> (i32, i32, i32) {
    %c0_i32 = arith.constant 0 : i32
    %c0_i32_0 = arith.constant 0 : i32
    %c0_i32_1 = arith.constant 0 : i32
    return %arg0, %c0_i32, %c0_i32_0 : i32, i32, i32
  }
  func.func @transform_4(%arg0: i32, %arg1: i32) -> (i32, i32, i32) {
    %c0_i32 = arith.constant 0 : i32
    %c0_i32_0 = arith.constant 0 : i32
    return %arg0, %arg1, %c0_i32 : i32, i32, i32
  }
}

module attributes {stable_mosaic.version = 11 : i64} {
  func.func @_mm_kernel(%arg0: i32, %arg1: i32, %arg2: i32, %arg3: memref<16x32xbf16, #tpu.memory_space<vmem>>, %arg4: memref<32x32xbf16, #tpu.memory_space<vmem>>, %arg5: memref<1x32xf32, #tpu.memory_space<vmem>>, %arg6: memref<16x32xbf16, #tpu.memory_space<vmem>>, %arg7: memref<16x32xf32, #tpu.memory_space<vmem>>) attributes {dimension_semantics = [#tpu.dimension_semantics<parallel>, #tpu.dimension_semantics<parallel>, #tpu.dimension_semantics<arbitrary>], iteration_bounds = array<i64: 1, 1, 1>, scalar_prefetch = 0 : i64, scratch_operands = 1 : i64, tpu.core_type = #tpu.core_type<tc>, window_params = [{transform_indices = @transform_0, window_bounds = array<i64: 16, 32>}, {transform_indices = @transform_1, window_bounds = array<i64: 32, 32>}, {transform_indices = @transform_2, window_bounds = array<i64: 1, 32>}, {transform_indices = @transform_3, window_bounds = array<i64: 16, 32>}]} {
    %c0_i32 = arith.constant 0 : i32
    %0 = arith.cmpi eq, %arg2, %c0_i32 : i32
    %1 = arith.extui %0 : i1 to i32
    %c0_i32_0 = arith.constant 0 : i32
    %2 = arith.cmpi ne, %1, %c0_i32_0 : i32
    scf.if %2 {
      %cst_10 = arith.constant 0.000000e+00 : f32
      %12 = vector.broadcast %cst_10 : f32 to vector<16x32xf32>
      %c0_11 = arith.constant 0 : index
      %c0_12 = arith.constant 0 : index
      %13 = vector.load %arg7[%c0_11, %c0_12] : memref<16x32xf32, #tpu.memory_space<vmem>>, vector<16x32xf32>
      tpu.vector_store %arg7[%c0_11, %c0_12], %12 {strides = array<i32>} : memref<16x32xf32, #tpu.memory_space<vmem>>, vector<16x32xf32>,
    } else {
    }
    %c0 = arith.constant 0 : index
    %c0_1 = arith.constant 0 : index
    %3 = vector.load %arg7[%c0, %c0_1] : memref<16x32xf32, #tpu.memory_space<vmem>>, vector<16x32xf32>
    %c0_2 = arith.constant 0 : index
    %c0_3 = arith.constant 0 : index
    %4 = vector.load %arg3[%c0_2, %c0_3] : memref<16x32xbf16, #tpu.memory_space<vmem>>, vector<16x32xbf16>
    %c0_4 = arith.constant 0 : index
    %c0_5 = arith.constant 0 : index
    %5 = vector.load %arg4[%c0_4, %c0_5] : memref<32x32xbf16, #tpu.memory_space<vmem>>, vector<32x32xbf16>
    %cst = arith.constant dense<0.000000e+00> : vector<16x32xf32>
    %6 = tpu.matmul %4, %5, %cst {dimension_numbers = #tpu.dot_dimension_numbers<[1], [0], [0], [1], [0, 0, 1, 1], [], []>} : vector<16x32xbf16>, vector<32x32xbf16>, vector<16x32xf32> -> vector<16x32xf32>
    %7 = arith.addf %3, %6 : vector<16x32xf32>
    %c0_6 = arith.constant 0 : index
    %c0_7 = arith.constant 0 : index
    %8 = vector.load %arg7[%c0_6, %c0_7] : memref<16x32xf32, #tpu.memory_space<vmem>>, vector<16x32xf32>
    tpu.vector_store %arg7[%c0_6, %c0_7], %7 {strides = array<i32>} : memref<16x32xf32, #tpu.memory_space<vmem>>, vector<16x32xf32>,
    %c0_i32_8 = arith.constant 0 : i32
    %9 = arith.cmpi eq, %arg2, %c0_i32_8 : i32
    %10 = arith.extui %9 : i1 to i32
    %c0_i32_9 = arith.constant 0 : i32
    %11 = arith.cmpi ne, %10, %c0_i32_9 : i32
    scf.if %11 {
      %c0_10 = arith.constant 0 : index
      %c0_11 = arith.constant 0 : index
      %12 = vector.load %arg7[%c0_10, %c0_11] : memref<16x32xf32, #tpu.memory_space<vmem>>, vector<16x32xf32>
      %c0_12 = arith.constant 0 : index
      %c0_13 = arith.constant 0 : index
      %13 = vector.load %arg5[%c0_12, %c0_13] : memref<1x32xf32, #tpu.memory_space<vmem>>, vector<1x32xf32>
      %14 = vector.broadcast %13 : vector<1x32xf32> to vector<16x32xf32>
      %15 = arith.addf %12, %14 : vector<16x32xf32>
      %16 = arith.truncf %15 : vector<16x32xf32> to vector<16x32xbf16>
      %c0_14 = arith.constant 0 : index
      %c0_15 = arith.constant 0 : index
      %17 = vector.load %arg6[%c0_14, %c0_15] : memref<16x32xbf16, #tpu.memory_space<vmem>>, vector<16x32xbf16>
      tpu.vector_store %arg6[%c0_14, %c0_15], %16 {strides = array<i32>} : memref<16x32xbf16, #tpu.memory_space<vmem>>, vector<16x32xbf16>,
    } else {
    }
    return
  }
  func.func @transform_0(%arg0: i32, %arg1: i32, %arg2: i32) -> (i32, i32) {
    %c0_i32 = arith.constant 0 : i32
    return %arg0, %arg2 : i32, i32
  }
  func.func @transform_1(%arg0: i32, %arg1: i32, %arg2: i32) -> (i32, i32) {
    %c0_i32 = arith.constant 0 : i32
    return %arg2, %arg1 : i32, i32
  }
  func.func @transform_2(%arg0: i32, %arg1: i32, %arg2: i32) -> (i32, i32) {
    %c0_i32 = arith.constant 0 : i32
    %c0_i32_0 = arith.constant 0 : i32
    return %c0_i32, %arg1 : i32, i32
  }
  func.func @transform_3(%arg0: i32, %arg1: i32, %arg2: i32) -> (i32, i32) {
    %c0_i32 = arith.constant 0 : i32
    return %arg0, %arg1 : i32, i32
  }
}

module attributes {stable_mosaic.version = 11 : i64} {
  func.func @_attn_kernel(%arg0: i32, %arg1: i32, %arg2: memref<1x8x96xbf16, #tpu.memory_space<vmem>>, %arg3: memref<1x8x96xbf16, #tpu.memory_space<vmem>>, %arg4: memref<1x8x96xbf16, #tpu.memory_space<vmem>>, %arg5: memref<1x1x8xf32, #tpu.memory_space<vmem>>, %arg6: memref<1x8x32xbf16, #tpu.memory_space<vmem>>) attributes {dimension_semantics = [#tpu.dimension_semantics<parallel>, #tpu.dimension_semantics<parallel>], iteration_bounds = array<i64: 2, 1>, scalar_prefetch = 0 : i64, scratch_operands = 0 : i64, tpu.core_type = #tpu.core_type<tc>, window_params = [{transform_indices = @transform_0, window_bounds = array<i64: 1, 8, 96>}, {transform_indices = @transform_1, window_bounds = array<i64: 1, 8, 96>}, {transform_indices = @transform_2, window_bounds = array<i64: 1, 8, 96>}, {transform_indices = @transform_3, window_bounds = array<i64: 1, 1, 8>}, {transform_indices = @transform_4, window_bounds = array<i64: 1, 8, 32>}]} {
    %c0 = arith.constant 0 : index
    %c0_0 = arith.constant 0 : index
    %c0_1 = arith.constant 0 : index
    %0 = vector.load %arg5[%c0, %c0_0, %c0_1] : memref<1x1x8xf32, #tpu.memory_space<vmem>>, vector<1x1x8xf32>
    %1 = vector.shape_cast %0 : vector<1x1x8xf32> to vector<1x8xf32>
    %cst = arith.constant 1.000000e+00 : f32
    %2 = vector.broadcast %cst : f32 to vector<1x8xf32>
    %3 = arith.subf %2, %1 : vector<1x8xf32>
    %cst_2 = arith.constant -1.000000e+09 : f32
    %4 = vector.broadcast %cst_2 : f32 to vector<1x8xf32>
    %5 = arith.mulf %3, %4 : vector<1x8xf32>
    %6 = vector.shape_cast %5 : vector<1x8xf32> to vector<1x8xf32>
    %7 = vector.broadcast %6 : vector<1x8xf32> to vector<8x8xf32>
    %c0_3 = arith.constant 0 : index
    %c0_4 = arith.constant 0 : index
    %c0_5 = arith.constant 0 : index
    %8 = vector.load %arg2[%c0_3, %c0_4, %c0_5] : memref<1x8x96xbf16, #tpu.memory_space<vmem>>, vector<1x8x8xbf16>
    %9 = vector.shape_cast %8 : vector<1x8x8xbf16> to vector<8x8xbf16>
    %c0_6 = arith.constant 0 : index
    %c0_7 = arith.constant 0 : index
    %c32 = arith.constant 32 : index
    %10 = vector.load %arg3[%c0_6, %c0_7, %c32] : memref<1x8x96xbf16, #tpu.memory_space<vmem>>, vector<1x8x8xbf16>
    %11 = vector.shape_cast %10 : vector<1x8x8xbf16> to vector<8x8xbf16>
    %c0_8 = arith.constant 0 : index
    %c0_9 = arith.constant 0 : index
    %c64 = arith.constant 64 : index
    %12 = vector.load %arg4[%c0_8, %c0_9, %c64] : memref<1x8x96xbf16, #tpu.memory_space<vmem>>, vector<1x8x8xbf16>
    %13 = vector.shape_cast %12 : vector<1x8x8xbf16> to vector<8x8xbf16>
    %cst_10 = arith.constant dense<0.000000e+00> : vector<8x8xf32>
    %14 = tpu.matmul %9, %11, %cst_10 {dimension_numbers = #tpu.dot_dimension_numbers<[1], [1], [0], [0], [0, 0, 1, 0], [], []>} : vector<8x8xbf16>, vector<8x8xbf16>, vector<8x8xf32> -> vector<8x8xf32>
    %cst_11 = arith.constant 0.353553385 : f32
    %15 = vector.broadcast %cst_11 : f32 to vector<8x8xf32>
    %16 = arith.mulf %14, %15 : vector<8x8xf32>
    %17 = arith.addf %16, %7 : vector<8x8xf32>
    %cst_12 = arith.constant dense<0xFF800000> : vector<8xf32>
    %18 = vector.multi_reduction <maximumf>, %17, %cst_12 [1] : vector<8x8xf32> to vector<8xf32>
    %19 = vector.shape_cast %18 : vector<8xf32> to vector<8x1xf32>
    %20 = vector.broadcast %19 : vector<8x1xf32> to vector<8x8xf32>
    %21 = arith.subf %17, %20 : vector<8x8xf32>
    %22 = math.exp %21 : vector<8x8xf32>
    %cst_13 = arith.constant dense<0.000000e+00> : vector<8xf32>
    %23 = vector.multi_reduction <add>, %22, %cst_13 [1] : vector<8x8xf32> to vector<8xf32>
    %24 = vector.shape_cast %23 : vector<8xf32> to vector<8x1xf32>
    %25 = tpu.reciprocal %24 {approx = true} : vector<8x1xf32> -> vector<8x1xf32>
    %26 = vector.broadcast %25 : vector<8x1xf32> to vector<8x8xf32>
    %27 = arith.mulf %22, %26 : vector<8x8xf32>
    %28 = arith.truncf %27 : vector<8x8xf32> to vector<8x8xbf16>
    %cst_14 = arith.constant dense<0.000000e+00> : vector<8x8xf32>
    %29 = tpu.matmul %28, %13, %cst_14 {dimension_numbers = #tpu.dot_dimension_numbers<[1], [0], [0], [1], [0, 0, 1, 1], [], []>} : vector<8x8xbf16>, vector<8x8xbf16>, vector<8x8xf32> -> vector<8x8xf32>
    %30 = arith.truncf %29 : vector<8x8xf32> to vector<8x8xbf16>
    %c0_15 = arith.constant 0 : index
    %c0_16 = arith.constant 0 : index
    %c0_17 = arith.constant 0 : index
    %31 = vector.load %arg6[%c0_15, %c0_16, %c0_17] : memref<1x8x32xbf16, #tpu.memory_space<vmem>>, vector<1x8x8xbf16>
    %32 = vector.shape_cast %31 : vector<1x8x8xbf16> to vector<8x8xbf16>
    %33 = vector.shape_cast %30 : vector<8x8xbf16> to vector<1x8x8xbf16>
    tpu.vector_store %arg6[%c0_15, %c0_16, %c0_17], %33 {strides = array<i32>} : memref<1x8x32xbf16, #tpu.memory_space<vmem>>, vector<1x8x8xbf16>,
    %c0_18 = arith.constant 0 : index
    %c0_19 = arith.constant 0 : index
    %c8 = arith.constant 8 : index
    %34 = vector.load %arg2[%c0_18, %c0_19, %c8] : memref<1x8x96xbf16, #tpu.memory_space<vmem>>, vector<1x8x8xbf16>
    %35 = vector.shape_cast %34 : vector<1x8x8xbf16> to vector<8x8xbf16>
    %c0_20 = arith.constant 0 : index
    %c0_21 = arith.constant 0 : index
    %c40 = arith.constant 40 : index
    %36 = vector.load %arg3[%c0_20, %c0_21, %c40] : memref<1x8x96xbf16, #tpu.memory_space<vmem>>, vector<1x8x8xbf16>
    %37 = vector.shape_cast %36 : vector<1x8x8xbf16> to vector<8x8xbf16>
    %c0_22 = arith.constant 0 : index
    %c0_23 = arith.constant 0 : index
    %c72 = arith.constant 72 : index
    %38 = vector.load %arg4[%c0_22, %c0_23, %c72] : memref<1x8x96xbf16, #tpu.memory_space<vmem>>, vector<1x8x8xbf16>
    %39 = vector.shape_cast %38 : vector<1x8x8xbf16> to vector<8x8xbf16>
    %cst_24 = arith.constant dense<0.000000e+00> : vector<8x8xf32>
    %40 = tpu.matmul %35, %37, %cst_24 {dimension_numbers = #tpu.dot_dimension_numbers<[1], [1], [0], [0], [0, 0, 1, 0], [], []>} : vector<8x8xbf16>, vector<8x8xbf16>, vector<8x8xf32> -> vector<8x8xf32>
    %cst_25 = arith.constant 0.353553385 : f32
    %41 = vector.broadcast %cst_25 : f32 to vector<8x8xf32>
    %42 = arith.mulf %40, %41 : vector<8x8xf32>
    %43 = arith.addf %42, %7 : vector<8x8xf32>
    %cst_26 = arith.constant dense<0xFF800000> : vector<8xf32>
    %44 = vector.multi_reduction <maximumf>, %43, %cst_26 [1] : vector<8x8xf32> to vector<8xf32>
    %45 = vector.shape_cast %44 : vector<8xf32> to vector<8x1xf32>
    %46 = vector.broadcast %45 : vector<8x1xf32> to vector<8x8xf32>
    %47 = arith.subf %43, %46 : vector<8x8xf32>
    %48 = math.exp %47 : vector<8x8xf32>
    %cst_27 = arith.constant dense<0.000000e+00> : vector<8xf32>
    %49 = vector.multi_reduction <add>, %48, %cst_27 [1] : vector<8x8xf32> to vector<8xf32>
    %50 = vector.shape_cast %49 : vector<8xf32> to vector<8x1xf32>
    %51 = tpu.reciprocal %50 {approx = true} : vector<8x1xf32> -> vector<8x1xf32>
    %52 = vector.broadcast %51 : vector<8x1xf32> to vector<8x8xf32>
    %53 = arith.mulf %48, %52 : vector<8x8xf32>
    %54 = arith.truncf %53 : vector<8x8xf32> to vector<8x8xbf16>
    %cst_28 = arith.constant dense<0.000000e+00> : vector<8x8xf32>
    %55 = tpu.matmul %54, %39, %cst_28 {dimension_numbers = #tpu.dot_dimension_numbers<[1], [0], [0], [1], [0, 0, 1, 1], [], []>} : vector<8x8xbf16>, vector<8x8xbf16>, vector<8x8xf32> -> vector<8x8xf32>
    %56 = arith.truncf %55 : vector<8x8xf32> to vector<8x8xbf16>
    %c0_29 = arith.constant 0 : index
    %c0_30 = arith.constant 0 : index
    %c8_31 = arith.constant 8 : index
    %57 = vector.load %arg6[%c0_29, %c0_30, %c8_31] : memref<1x8x32xbf16, #tpu.memory_space<vmem>>, vector<1x8x8xbf16>
    %58 = vector.shape_cast %57 : vector<1x8x8xbf16> to vector<8x8xbf16>
    %59 = vector.shape_cast %56 : vector<8x8xbf16> to vector<1x8x8xbf16>
    tpu.vector_store %arg6[%c0_29, %c0_30, %c8_31], %59 {strides = array<i32>} : memref<1x8x32xbf16, #tpu.memory_space<vmem>>, vector<1x8x8xbf16>,
    %c0_32 = arith.constant 0 : index
    %c0_33 = arith.constant 0 : index
    %c16 = arith.constant 16 : index
    %60 = vector.load %arg2[%c0_32, %c0_33, %c16] : memref<1x8x96xbf16, #tpu.memory_space<vmem>>, vector<1x8x8xbf16>
    %61 = vector.shape_cast %60 : vector<1x8x8xbf16> to vector<8x8xbf16>
    %c0_34 = arith.constant 0 : index
    %c0_35 = arith.constant 0 : index
    %c48 = arith.constant 48 : index
    %62 = vector.load %arg3[%c0_34, %c0_35, %c48] : memref<1x8x96xbf16, #tpu.memory_space<vmem>>, vector<1x8x8xbf16>
    %63 = vector.shape_cast %62 : vector<1x8x8xbf16> to vector<8x8xbf16>
    %c0_36 = arith.constant 0 : index
    %c0_37 = arith.constant 0 : index
    %c80 = arith.constant 80 : index
    %64 = vector.load %arg4[%c0_36, %c0_37, %c80] : memref<1x8x96xbf16, #tpu.memory_space<vmem>>, vector<1x8x8xbf16>
    %65 = vector.shape_cast %64 : vector<1x8x8xbf16> to vector<8x8xbf16>
    %cst_38 = arith.constant dense<0.000000e+00> : vector<8x8xf32>
    %66 = tpu.matmul %61, %63, %cst_38 {dimension_numbers = #tpu.dot_dimension_numbers<[1], [1], [0], [0], [0, 0, 1, 0], [], []>} : vector<8x8xbf16>, vector<8x8xbf16>, vector<8x8xf32> -> vector<8x8xf32>
    %cst_39 = arith.constant 0.353553385 : f32
    %67 = vector.broadcast %cst_39 : f32 to vector<8x8xf32>
    %68 = arith.mulf %66, %67 : vector<8x8xf32>
    %69 = arith.addf %68, %7 : vector<8x8xf32>
    %cst_40 = arith.constant dense<0xFF800000> : vector<8xf32>
    %70 = vector.multi_reduction <maximumf>, %69, %cst_40 [1] : vector<8x8xf32> to vector<8xf32>
    %71 = vector.shape_cast %70 : vector<8xf32> to vector<8x1xf32>
    %72 = vector.broadcast %71 : vector<8x1xf32> to vector<8x8xf32>
    %73 = arith.subf %69, %72 : vector<8x8xf32>
    %74 = math.exp %73 : vector<8x8xf32>
    %cst_41 = arith.constant dense<0.000000e+00> : vector<8xf32>
    %75 = vector.multi_reduction <add>, %74, %cst_41 [1] : vector<8x8xf32> to vector<8xf32>
    %76 = vector.shape_cast %75 : vector<8xf32> to vector<8x1xf32>
    %77 = tpu.reciprocal %76 {approx = true} : vector<8x1xf32> -> vector<8x1xf32>
    %78 = vector.broadcast %77 : vector<8x1xf32> to vector<8x8xf32>
    %79 = arith.mulf %74, %78 : vector<8x8xf32>
    %80 = arith.truncf %79 : vector<8x8xf32> to vector<8x8xbf16>
    %cst_42 = arith.constant dense<0.000000e+00> : vector<8x8xf32>
    %81 = tpu.matmul %80, %65, %cst_42 {dimension_numbers = #tpu.dot_dimension_numbers<[1], [0], [0], [1], [0, 0, 1, 1], [], []>} : vector<8x8xbf16>, vector<8x8xbf16>, vector<8x8xf32> -> vector<8x8xf32>
    %82 = arith.truncf %81 : vector<8x8xf32> to vector<8x8xbf16>
    %c0_43 = arith.constant 0 : index
    %c0_44 = arith.constant 0 : index
    %c16_45 = arith.constant 16 : index
    %83 = vector.load %arg6[%c0_43, %c0_44, %c16_45] : memref<1x8x32xbf16, #tpu.memory_space<vmem>>, vector<1x8x8xbf16>
    %84 = vector.shape_cast %83 : vector<1x8x8xbf16> to vector<8x8xbf16>
    %85 = vector.shape_cast %82 : vector<8x8xbf16> to vector<1x8x8xbf16>
    tpu.vector_store %arg6[%c0_43, %c0_44, %c16_45], %85 {strides = array<i32>} : memref<1x8x32xbf16, #tpu.memory_space<vmem>>, vector<1x8x8xbf16>,
    %c0_46 = arith.constant 0 : index
    %c0_47 = arith.constant 0 : index
    %c24 = arith.constant 24 : index
    %86 = vector.load %arg2[%c0_46, %c0_47, %c24] : memref<1x8x96xbf16, #tpu.memory_space<vmem>>, vector<1x8x8xbf16>
    %87 = vector.shape_cast %86 : vector<1x8x8xbf16> to vector<8x8xbf16>
    %c0_48 = arith.constant 0 : index
    %c0_49 = arith.constant 0 : index
    %c56 = arith.constant 56 : index
    %88 = vector.load %arg3[%c0_48, %c0_49, %c56] : memref<1x8x96xbf16, #tpu.memory_space<vmem>>, vector<1x8x8xbf16>
    %89 = vector.shape_cast %88 : vector<1x8x8xbf16> to vector<8x8xbf16>
    %c0_50 = arith.constant 0 : index
    %c0_51 = arith.constant 0 : index
    %c88 = arith.constant 88 : index
    %90 = vector.load %arg4[%c0_50, %c0_51, %c88] : memref<1x8x96xbf16, #tpu.memory_space<vmem>>, vector<1x8x8xbf16>
    %91 = vector.shape_cast %90 : vector<1x8x8xbf16> to vector<8x8xbf16>
    %cst_52 = arith.constant dense<0.000000e+00> : vector<8x8xf32>
    %92 = tpu.matmul %87, %89, %cst_52 {dimension_numbers = #tpu.dot_dimension_numbers<[1], [1], [0], [0], [0, 0, 1, 0], [], []>} : vector<8x8xbf16>, vector<8x8xbf16>, vector<8x8xf32> -> vector<8x8xf32>
    %cst_53 = arith.constant 0.353553385 : f32
    %93 = vector.broadcast %cst_53 : f32 to vector<8x8xf32>
    %94 = arith.mulf %92, %93 : vector<8x8xf32>
    %95 = arith.addf %94, %7 : vector<8x8xf32>
    %cst_54 = arith.constant dense<0xFF800000> : vector<8xf32>
    %96 = vector.multi_reduction <maximumf>, %95, %cst_54 [1] : vector<8x8xf32> to vector<8xf32>
    %97 = vector.shape_cast %96 : vector<8xf32> to vector<8x1xf32>
    %98 = vector.broadcast %97 : vector<8x1xf32> to vector<8x8xf32>
    %99 = arith.subf %95, %98 : vector<8x8xf32>
    %100 = math.exp %99 : vector<8x8xf32>
    %cst_55 = arith.constant dense<0.000000e+00> : vector<8xf32>
    %101 = vector.multi_reduction <add>, %100, %cst_55 [1] : vector<8x8xf32> to vector<8xf32>
    %102 = vector.shape_cast %101 : vector<8xf32> to vector<8x1xf32>
    %103 = tpu.reciprocal %102 {approx = true} : vector<8x1xf32> -> vector<8x1xf32>
    %104 = vector.broadcast %103 : vector<8x1xf32> to vector<8x8xf32>
    %105 = arith.mulf %100, %104 : vector<8x8xf32>
    %106 = arith.truncf %105 : vector<8x8xf32> to vector<8x8xbf16>
    %cst_56 = arith.constant dense<0.000000e+00> : vector<8x8xf32>
    %107 = tpu.matmul %106, %91, %cst_56 {dimension_numbers = #tpu.dot_dimension_numbers<[1], [0], [0], [1], [0, 0, 1, 1], [], []>} : vector<8x8xbf16>, vector<8x8xbf16>, vector<8x8xf32> -> vector<8x8xf32>
    %108 = arith.truncf %107 : vector<8x8xf32> to vector<8x8xbf16>
    %c0_57 = arith.constant 0 : index
    %c0_58 = arith.constant 0 : index
    %c24_59 = arith.constant 24 : index
    %109 = vector.load %arg6[%c0_57, %c0_58, %c24_59] : memref<1x8x32xbf16, #tpu.memory_space<vmem>>, vector<1x8x8xbf16>
    %110 = vector.shape_cast %109 : vector<1x8x8xbf16> to vector<8x8xbf16>
    %111 = vector.shape_cast %108 : vector<8x8xbf16> to vector<1x8x8xbf16>
    tpu.vector_store %arg6[%c0_57, %c0_58, %c24_59], %111 {strides = array<i32>} : memref<1x8x32xbf16, #tpu.memory_space<vmem>>, vector<1x8x8xbf16>,
    return
  }
  func.func @transform_0(%arg0: i32, %arg1: i32) -> (i32, i32, i32) {
    %c0_i32 = arith.constant 0 : i32
    %c0_i32_0 = arith.constant 0 : i32
    return %arg0, %arg1, %c0_i32 : i32, i32, i32
  }
  func.func @transform_1(%arg0: i32, %arg1: i32) -> (i32, i32, i32) {
    %c0_i32 = arith.constant 0 : i32
    %c0_i32_0 = arith.constant 0 : i32
    %c0_i32_1 = arith.constant 0 : i32
    return %arg0, %c0_i32, %c0_i32_0 : i32, i32, i32
  }
  func.func @transform_2(%arg0: i32, %arg1: i32) -> (i32, i32, i32) {
    %c0_i32 = arith.constant 0 : i32
    %c0_i32_0 = arith.constant 0 : i32
    %c0_i32_1 = arith.constant 0 : i32
    return %arg0, %c0_i32, %c0_i32_0 : i32, i32, i32
  }
  func.func @transform_3(%arg0: i32, %arg1: i32) -> (i32, i32, i32) {
    %c0_i32 = arith.constant 0 : i32
    %c0_i32_0 = arith.constant 0 : i32
    %c0_i32_1 = arith.constant 0 : i32
    return %arg0, %c0_i32, %c0_i32_0 : i32, i32, i32
  }
  func.func @transform_4(%arg0: i32, %arg1: i32) -> (i32, i32, i32) {
    %c0_i32 = arith.constant 0 : i32
    %c0_i32_0 = arith.constant 0 : i32
    return %arg0, %arg1, %c0_i32 : i32, i32, i32
  }
}

module attributes {stable_mosaic.version = 11 : i64} {
  func.func @_mm_kernel(%arg0: i32, %arg1: i32, %arg2: i32, %arg3: memref<16x32xbf16, #tpu.memory_space<vmem>>, %arg4: memref<32x64xbf16, #tpu.memory_space<vmem>>, %arg5: memref<1x64xf32, #tpu.memory_space<vmem>>, %arg6: memref<16x64xbf16, #tpu.memory_space<vmem>>, %arg7: memref<16x64xf32, #tpu.memory_space<vmem>>) attributes {dimension_semantics = [#tpu.dimension_semantics<parallel>, #tpu.dimension_semantics<parallel>, #tpu.dimension_semantics<arbitrary>], iteration_bounds = array<i64: 1, 1, 1>, scalar_prefetch = 0 : i64, scratch_operands = 1 : i64, tpu.core_type = #tpu.core_type<tc>, window_params = [{transform_indices = @transform_0, window_bounds = array<i64: 16, 32>}, {transform_indices = @transform_1, window_bounds = array<i64: 32, 64>}, {transform_indices = @transform_2, window_bounds = array<i64: 1, 64>}, {transform_indices = @transform_3, window_bounds = array<i64: 16, 64>}]} {
    %c0_i32 = arith.constant 0 : i32
    %0 = arith.cmpi eq, %arg2, %c0_i32 : i32
    %1 = arith.extui %0 : i1 to i32
    %c0_i32_0 = arith.constant 0 : i32
    %2 = arith.cmpi ne, %1, %c0_i32_0 : i32
    scf.if %2 {
      %cst_10 = arith.constant 0.000000e+00 : f32
      %12 = vector.broadcast %cst_10 : f32 to vector<16x64xf32>
      %c0_11 = arith.constant 0 : index
      %c0_12 = arith.constant 0 : index
      %13 = vector.load %arg7[%c0_11, %c0_12] : memref<16x64xf32, #tpu.memory_space<vmem>>, vector<16x64xf32>
      tpu.vector_store %arg7[%c0_11, %c0_12], %12 {strides = array<i32>} : memref<16x64xf32, #tpu.memory_space<vmem>>, vector<16x64xf32>,
    } else {
    }
    %c0 = arith.constant 0 : index
    %c0_1 = arith.constant 0 : index
    %3 = vector.load %arg7[%c0, %c0_1] : memref<16x64xf32, #tpu.memory_space<vmem>>, vector<16x64xf32>
    %c0_2 = arith.constant 0 : index
    %c0_3 = arith.constant 0 : index
    %4 = vector.load %arg3[%c0_2, %c0_3] : memref<16x32xbf16, #tpu.memory_space<vmem>>, vector<16x32xbf16>
    %c0_4 = arith.constant 0 : index
    %c0_5 = arith.constant 0 : index
    %5 = vector.load %arg4[%c0_4, %c0_5] : memref<32x64xbf16, #tpu.memory_space<vmem>>, vector<32x64xbf16>
    %cst = arith.constant dense<0.000000e+00> : vector<16x64xf32>
    %6 = tpu.matmul %4, %5, %cst {dimension_numbers = #tpu.dot_dimension_numbers<[1], [0], [0], [1], [0, 0, 1, 1], [], []>} : vector<16x32xbf16>, vector<32x64xbf16>, vector<16x64xf32> -> vector<16x64xf32>
    %7 = arith.addf %3, %6 : vector<16x64xf32>
    %c0_6 = arith.constant 0 : index
    %c0_7 = arith.constant 0 : index
    %8 = vector.load %arg7[%c0_6, %c0_7] : memref<16x64xf32, #tpu.memory_space<vmem>>, vector<16x64xf32>
    tpu.vector_store %arg7[%c0_6, %c0_7], %7 {strides = array<i32>} : memref<16x64xf32, #tpu.memory_space<vmem>>, vector<16x64xf32>,
    %c0_i32_8 = arith.constant 0 : i32
    %9 = arith.cmpi eq, %arg2, %c0_i32_8 : i32
    %10 = arith.extui %9 : i1 to i32
    %c0_i32_9 = arith.constant 0 : i32
    %11 = arith.cmpi ne, %10, %c0_i32_9 : i32
    scf.if %11 {
      %c0_10 = arith.constant 0 : index
      %c0_11 = arith.constant 0 : index
      %12 = vector.load %arg7[%c0_10, %c0_11] : memref<16x64xf32, #tpu.memory_space<vmem>>, vector<16x64xf32>
      %c0_12 = arith.constant 0 : index
      %c0_13 = arith.constant 0 : index
      %13 = vector.load %arg5[%c0_12, %c0_13] : memref<1x64xf32, #tpu.memory_space<vmem>>, vector<1x64xf32>
      %14 = vector.broadcast %13 : vector<1x64xf32> to vector<16x64xf32>
      %15 = arith.addf %12, %14 : vector<16x64xf32>
      %16 = arith.mulf %15, %15 : vector<16x64xf32>
      %17 = arith.mulf %15, %16 : vector<16x64xf32>
      %cst_14 = arith.constant 4.471500e-02 : f32
      %18 = vector.broadcast %cst_14 : f32 to vector<16x64xf32>
      %19 = arith.mulf %18, %17 : vector<16x64xf32>
      %20 = arith.addf %15, %19 : vector<16x64xf32>
      %cst_15 = arith.constant 0.797884583 : f32
      %21 = vector.broadcast %cst_15 : f32 to vector<16x64xf32>
      %22 = arith.mulf %21, %20 : vector<16x64xf32>
      %23 = math.tanh %22 : vector<16x64xf32>
      %cst_16 = arith.constant 1.000000e+00 : f32
      %24 = vector.broadcast %cst_16 : f32 to vector<16x64xf32>
      %25 = arith.addf %24, %23 : vector<16x64xf32>
      %cst_17 = arith.constant 5.000000e-01 : f32
      %26 = vector.broadcast %cst_17 : f32 to vector<16x64xf32>
      %27 = arith.mulf %26, %25 : vector<16x64xf32>
      %28 = arith.mulf %15, %27 : vector<16x64xf32>
      %29 = arith.truncf %28 : vector<16x64xf32> to vector<16x64xbf16>
      %c0_18 = arith.constant 0 : index
      %c0_19 = arith.constant 0 : index
      %30 = vector.load %arg6[%c0_18, %c0_19] : memref<16x64xbf16, #tpu.memory_space<vmem>>, vector<16x64xbf16>
      tpu.vector_store %arg6[%c0_18, %c0_19], %29 {strides = array<i32>} : memref<16x64xbf16, #tpu.memory_space<vmem>>, vector<16x64xbf16>,
    } else {
    }
    return
  }
  func.func @transform_0(%arg0: i32, %arg1: i32, %arg2: i32) -> (i32, i32) {
    %c0_i32 = arith.constant 0 : i32
    return %arg0, %arg2 : i32, i32
  }
  func.func @transform_1(%arg0: i32, %arg1: i32, %arg2: i32) -> (i32, i32) {
    %c0_i32 = arith.constant 0 : i32
    return %arg2, %arg1 : i32, i32
  }
  func.func @transform_2(%arg0: i32, %arg1: i32, %arg2: i32) -> (i32, i32) {
    %c0_i32 = arith.constant 0 : i32
    %c0_i32_0 = arith.constant 0 : i32
    return %c0_i32, %arg1 : i32, i32
  }
  func.func @transform_3(%arg0: i32, %arg1: i32, %arg2: i32) -> (i32, i32) {
    %c0_i32 = arith.constant 0 : i32
    return %arg0, %arg1 : i32, i32
  }
}

module attributes {stable_mosaic.version = 11 : i64} {
  func.func @_mm_add_ln_kernel(%arg0: i32, %arg1: i32, %arg2: memref<16x64xbf16, #tpu.memory_space<vmem>>, %arg3: memref<64x32xbf16, #tpu.memory_space<vmem>>, %arg4: memref<1x32xf32, #tpu.memory_space<vmem>>, %arg5: memref<16x32xbf16, #tpu.memory_space<vmem>>, %arg6: memref<1x32xf32, #tpu.memory_space<vmem>>, %arg7: memref<1x32xf32, #tpu.memory_space<vmem>>, %arg8: memref<16x32xbf16, #tpu.memory_space<vmem>>, %arg9: memref<16x32xf32, #tpu.memory_space<vmem>>) attributes {dimension_semantics = [#tpu.dimension_semantics<parallel>, #tpu.dimension_semantics<arbitrary>], iteration_bounds = array<i64: 1, 1>, scalar_prefetch = 0 : i64, scratch_operands = 1 : i64, tpu.core_type = #tpu.core_type<tc>, window_params = [{transform_indices = @transform_0, window_bounds = array<i64: 16, 64>}, {transform_indices = @transform_1, window_bounds = array<i64: 64, 32>}, {pipeline_mode = #tpu.pipeline_mode<synchronous>, transform_indices = @transform_2, window_bounds = array<i64: 1, 32>}, {transform_indices = @transform_3, window_bounds = array<i64: 16, 32>}, {pipeline_mode = #tpu.pipeline_mode<synchronous>, transform_indices = @transform_4, window_bounds = array<i64: 1, 32>}, {pipeline_mode = #tpu.pipeline_mode<synchronous>, transform_indices = @transform_5, window_bounds = array<i64: 1, 32>}, {transform_indices = @transform_6, window_bounds = array<i64: 16, 32>}]} {
    %c0_i32 = arith.constant 0 : i32
    %0 = arith.cmpi eq, %arg1, %c0_i32 : i32
    %1 = arith.extui %0 : i1 to i32
    %c0_i32_0 = arith.constant 0 : i32
    %2 = arith.cmpi ne, %1, %c0_i32_0 : i32
    scf.if %2 {
      %cst_10 = arith.constant 0.000000e+00 : f32
      %12 = vector.broadcast %cst_10 : f32 to vector<16x32xf32>
      %c0_11 = arith.constant 0 : index
      %c0_12 = arith.constant 0 : index
      %13 = vector.load %arg9[%c0_11, %c0_12] : memref<16x32xf32, #tpu.memory_space<vmem>>, vector<16x32xf32>
      tpu.vector_store %arg9[%c0_11, %c0_12], %12 {strides = array<i32>} : memref<16x32xf32, #tpu.memory_space<vmem>>, vector<16x32xf32>,
    } else {
    }
    %c0 = arith.constant 0 : index
    %c0_1 = arith.constant 0 : index
    %3 = vector.load %arg9[%c0, %c0_1] : memref<16x32xf32, #tpu.memory_space<vmem>>, vector<16x32xf32>
    %c0_2 = arith.constant 0 : index
    %c0_3 = arith.constant 0 : index
    %4 = vector.load %arg2[%c0_2, %c0_3] : memref<16x64xbf16, #tpu.memory_space<vmem>>, vector<16x64xbf16>
    %c0_4 = arith.constant 0 : index
    %c0_5 = arith.constant 0 : index
    %5 = vector.load %arg3[%c0_4, %c0_5] : memref<64x32xbf16, #tpu.memory_space<vmem>>, vector<64x32xbf16>
    %cst = arith.constant dense<0.000000e+00> : vector<16x32xf32>
    %6 = tpu.matmul %4, %5, %cst {dimension_numbers = #tpu.dot_dimension_numbers<[1], [0], [0], [1], [0, 0, 1, 1], [], []>} : vector<16x64xbf16>, vector<64x32xbf16>, vector<16x32xf32> -> vector<16x32xf32>
    %7 = arith.addf %3, %6 : vector<16x32xf32>
    %c0_6 = arith.constant 0 : index
    %c0_7 = arith.constant 0 : index
    %8 = vector.load %arg9[%c0_6, %c0_7] : memref<16x32xf32, #tpu.memory_space<vmem>>, vector<16x32xf32>
    tpu.vector_store %arg9[%c0_6, %c0_7], %7 {strides = array<i32>} : memref<16x32xf32, #tpu.memory_space<vmem>>, vector<16x32xf32>,
    %c0_i32_8 = arith.constant 0 : i32
    %9 = arith.cmpi eq, %arg1, %c0_i32_8 : i32
    %10 = arith.extui %9 : i1 to i32
    %c0_i32_9 = arith.constant 0 : i32
    %11 = arith.cmpi ne, %10, %c0_i32_9 : i32
    scf.if %11 {
      %c0_10 = arith.constant 0 : index
      %c0_11 = arith.constant 0 : index
      %12 = vector.load %arg9[%c0_10, %c0_11] : memref<16x32xf32, #tpu.memory_space<vmem>>, vector<16x32xf32>
      %c0_12 = arith.constant 0 : index
      %c0_13 = arith.constant 0 : index
      %13 = vector.load %arg4[%c0_12, %c0_13] : memref<1x32xf32, #tpu.memory_space<vmem>>, vector<1x32xf32>
      %14 = vector.broadcast %13 : vector<1x32xf32> to vector<16x32xf32>
      %15 = arith.addf %12, %14 : vector<16x32xf32>
      %c0_14 = arith.constant 0 : index
      %c0_15 = arith.constant 0 : index
      %16 = vector.load %arg5[%c0_14, %c0_15] : memref<16x32xbf16, #tpu.memory_space<vmem>>, vector<16x32xbf16>
      %17 = arith.extf %16 : vector<16x32xbf16> to vector<16x32xf32>
      %18 = arith.addf %15, %17 : vector<16x32xf32>
      %cst_16 = arith.constant dense<0.000000e+00> : vector<16xf32>
      %19 = vector.multi_reduction <add>, %18, %cst_16 [1] : vector<16x32xf32> to vector<16xf32>
      %20 = vector.shape_cast %19 : vector<16xf32> to vector<16x1xf32>
      %cst_17 = arith.constant 3.200000e+01 : f32
      %21 = vector.broadcast %cst_17 : f32 to vector<16x1xf32>
      %22 = arith.divf %20, %21 : vector<16x1xf32>
      %23 = vector.broadcast %22 : vector<16x1xf32> to vector<16x32xf32>
      %24 = arith.subf %18, %23 : vector<16x32xf32>
      %25 = arith.mulf %24, %24 : vector<16x32xf32>
      %cst_18 = arith.constant dense<0.000000e+00> : vector<16xf32>
      %26 = vector.multi_reduction <add>, %25, %cst_18 [1] : vector<16x32xf32> to vector<16xf32>
      %27 = vector.shape_cast %26 : vector<16xf32> to vector<16x1xf32>
      %cst_19 = arith.constant 3.200000e+01 : f32
      %28 = vector.broadcast %cst_19 : f32 to vector<16x1xf32>
      %29 = arith.divf %27, %28 : vector<16x1xf32>
      %30 = vector.broadcast %22 : vector<16x1xf32> to vector<16x32xf32>
      %31 = arith.subf %18, %30 : vector<16x32xf32>
      %cst_20 = arith.constant 9.99999974E-6 : f32
      %32 = vector.broadcast %cst_20 : f32 to vector<16x1xf32>
      %33 = arith.addf %29, %32 : vector<16x1xf32>
      %34 = math.rsqrt %33 : vector<16x1xf32>
      %35 = vector.broadcast %34 : vector<16x1xf32> to vector<16x32xf32>
      %36 = arith.mulf %31, %35 : vector<16x32xf32>
      %c0_21 = arith.constant 0 : index
      %c0_22 = arith.constant 0 : index
      %37 = vector.load %arg6[%c0_21, %c0_22] : memref<1x32xf32, #tpu.memory_space<vmem>>, vector<1x32xf32>
      %38 = vector.broadcast %37 : vector<1x32xf32> to vector<16x32xf32>
      %39 = arith.mulf %36, %38 : vector<16x32xf32>
      %c0_23 = arith.constant 0 : index
      %c0_24 = arith.constant 0 : index
      %40 = vector.load %arg7[%c0_23, %c0_24] : memref<1x32xf32, #tpu.memory_space<vmem>>, vector<1x32xf32>
      %41 = vector.broadcast %40 : vector<1x32xf32> to vector<16x32xf32>
      %42 = arith.addf %39, %41 : vector<16x32xf32>
      %43 = arith.truncf %42 : vector<16x32xf32> to vector<16x32xbf16>
      %c0_25 = arith.constant 0 : index
      %c0_26 = arith.constant 0 : index
      %44 = vector.load %arg8[%c0_25, %c0_26] : memref<16x32xbf16, #tpu.memory_space<vmem>>, vector<16x32xbf16>
      tpu.vector_store %arg8[%c0_25, %c0_26], %43 {strides = array<i32>} : memref<16x32xbf16, #tpu.memory_space<vmem>>, vector<16x32xbf16>,
    } else {
    }
    return
  }
  func.func @transform_0(%arg0: i32, %arg1: i32) -> (i32, i32) {
    %c0_i32 = arith.constant 0 : i32
    return %arg0, %arg1 : i32, i32
  }
  func.func @transform_1(%arg0: i32, %arg1: i32) -> (i32, i32) {
    %c0_i32 = arith.constant 0 : i32
    %c0_i32_0 = arith.constant 0 : i32
    return %arg1, %c0_i32 : i32, i32
  }
  func.func @transform_2(%arg0: i32, %arg1: i32) -> (i32, i32) {
    %c0_i32 = arith.constant 0 : i32
    %c0_i32_0 = arith.constant 0 : i32
    %c0_i32_1 = arith.constant 0 : i32
    return %c0_i32, %c0_i32_0 : i32, i32
  }
  func.func @transform_3(%arg0: i32, %arg1: i32) -> (i32, i32) {
    %c0_i32 = arith.constant 0 : i32
    %c0_i32_0 = arith.constant 0 : i32
    return %arg0, %c0_i32 : i32, i32
  }
  func.func @transform_4(%arg0: i32, %arg1: i32) -> (i32, i32) {
    %c0_i32 = arith.constant 0 : i32
    %c0_i32_0 = arith.constant 0 : i32
    %c0_i32_1 = arith.constant 0 : i32
    return %c0_i32, %c0_i32_0 : i32, i32
  }
  func.func @transform_5(%arg0: i32, %arg1: i32) -> (i32, i32) {
    %c0_i32 = arith.constant 0 : i32
    %c0_i32_0 = arith.constant 0 : i32
    %c0_i32_1 = arith.constant 0 : i32
    return %c0_i32, %c0_i32_0 : i32, i32
  }
  func.func @transform_6(%arg0: i32, %arg1: i32) -> (i32, i32) {
    %c0_i32 = arith.constant 0 : i32
    %c0_i32_0 = arith.constant 0 : i32
    return %arg0, %c0_i32 : i32, i32
  }
}

module attributes {stable_mosaic.version = 11 : i64} {
  func.func @_mm_kernel(%arg0: i32, %arg1: i32, %arg2: i32, %arg3: memref<16x32xbf16, #tpu.memory_space<vmem>>, %arg4: memref<32x64xbf16, #tpu.memory_space<vmem>>, %arg5: memref<1x64xf32, #tpu.memory_space<vmem>>, %arg6: memref<16x64xbf16, #tpu.memory_space<vmem>>, %arg7: memref<16x64xf32, #tpu.memory_space<vmem>>) attributes {dimension_semantics = [#tpu.dimension_semantics<parallel>, #tpu.dimension_semantics<parallel>, #tpu.dimension_semantics<arbitrary>], iteration_bounds = array<i64: 1, 1, 1>, scalar_prefetch = 0 : i64, scratch_operands = 1 : i64, tpu.core_type = #tpu.core_type<tc>, window_params = [{transform_indices = @transform_0, window_bounds = array<i64: 16, 32>}, {transform_indices = @transform_1, window_bounds = array<i64: 32, 64>}, {transform_indices = @transform_2, window_bounds = array<i64: 1, 64>}, {transform_indices = @transform_3, window_bounds = array<i64: 16, 64>}]} {
    %c0_i32 = arith.constant 0 : i32
    %0 = arith.cmpi eq, %arg2, %c0_i32 : i32
    %1 = arith.extui %0 : i1 to i32
    %c0_i32_0 = arith.constant 0 : i32
    %2 = arith.cmpi ne, %1, %c0_i32_0 : i32
    scf.if %2 {
      %cst_10 = arith.constant 0.000000e+00 : f32
      %12 = vector.broadcast %cst_10 : f32 to vector<16x64xf32>
      %c0_11 = arith.constant 0 : index
      %c0_12 = arith.constant 0 : index
      %13 = vector.load %arg7[%c0_11, %c0_12] : memref<16x64xf32, #tpu.memory_space<vmem>>, vector<16x64xf32>
      tpu.vector_store %arg7[%c0_11, %c0_12], %12 {strides = array<i32>} : memref<16x64xf32, #tpu.memory_space<vmem>>, vector<16x64xf32>,
    } else {
    }
    %c0 = arith.constant 0 : index
    %c0_1 = arith.constant 0 : index
    %3 = vector.load %arg7[%c0, %c0_1] : memref<16x64xf32, #tpu.memory_space<vmem>>, vector<16x64xf32>
    %c0_2 = arith.constant 0 : index
    %c0_3 = arith.constant 0 : index
    %4 = vector.load %arg3[%c0_2, %c0_3] : memref<16x32xbf16, #tpu.memory_space<vmem>>, vector<16x32xbf16>
    %c0_4 = arith.constant 0 : index
    %c0_5 = arith.constant 0 : index
    %5 = vector.load %arg4[%c0_4, %c0_5] : memref<32x64xbf16, #tpu.memory_space<vmem>>, vector<32x64xbf16>
    %cst = arith.constant dense<0.000000e+00> : vector<16x64xf32>
    %6 = tpu.matmul %4, %5, %cst {dimension_numbers = #tpu.dot_dimension_numbers<[1], [0], [0], [1], [0, 0, 1, 1], [], []>} : vector<16x32xbf16>, vector<32x64xbf16>, vector<16x64xf32> -> vector<16x64xf32>
    %7 = arith.addf %3, %6 : vector<16x64xf32>
    %c0_6 = arith.constant 0 : index
    %c0_7 = arith.constant 0 : index
    %8 = vector.load %arg7[%c0_6, %c0_7] : memref<16x64xf32, #tpu.memory_space<vmem>>, vector<16x64xf32>
    tpu.vector_store %arg7[%c0_6, %c0_7], %7 {strides = array<i32>} : memref<16x64xf32, #tpu.memory_space<vmem>>, vector<16x64xf32>,
    %c0_i32_8 = arith.constant 0 : i32
    %9 = arith.cmpi eq, %arg2, %c0_i32_8 : i32
    %10 = arith.extui %9 : i1 to i32
    %c0_i32_9 = arith.constant 0 : i32
    %11 = arith.cmpi ne, %10, %c0_i32_9 : i32
    scf.if %11 {
      %c0_10 = arith.constant 0 : index
      %c0_11 = arith.constant 0 : index
      %12 = vector.load %arg7[%c0_10, %c0_11] : memref<16x64xf32, #tpu.memory_space<vmem>>, vector<16x64xf32>
      %c0_12 = arith.constant 0 : index
      %c0_13 = arith.constant 0 : index
      %13 = vector.load %arg5[%c0_12, %c0_13] : memref<1x64xf32, #tpu.memory_space<vmem>>, vector<1x64xf32>
      %14 = vector.broadcast %13 : vector<1x64xf32> to vector<16x64xf32>
      %15 = arith.addf %12, %14 : vector<16x64xf32>
      %16 = arith.truncf %15 : vector<16x64xf32> to vector<16x64xbf16>
      %c0_14 = arith.constant 0 : index
      %c0_15 = arith.constant 0 : index
      %17 = vector.load %arg6[%c0_14, %c0_15] : memref<16x64xbf16, #tpu.memory_space<vmem>>, vector<16x64xbf16>
      tpu.vector_store %arg6[%c0_14, %c0_15], %16 {strides = array<i32>} : memref<16x64xbf16, #tpu.memory_space<vmem>>, vector<16x64xbf16>,
    } else {
    }
    return
  }
  func.func @transform_0(%arg0: i32, %arg1: i32, %arg2: i32) -> (i32, i32) {
    %c0_i32 = arith.constant 0 : i32
    return %arg0, %arg2 : i32, i32
  }
  func.func @transform_1(%arg0: i32, %arg1: i32, %arg2: i32) -> (i32, i32) {
    %c0_i32 = arith.constant 0 : i32
    return %arg2, %arg1 : i32, i32
  }
  func.func @transform_2(%arg0: i32, %arg1: i32, %arg2: i32) -> (i32, i32) {
    %c0_i32 = arith.constant 0 : i32
    %c0_i32_0 = arith.constant 0 : i32
    return %c0_i32, %arg1 : i32, i32
  }
  func.func @transform_3(%arg0: i32, %arg1: i32, %arg2: i32) -> (i32, i32) {
    %c0_i32 = arith.constant 0 : i32
    return %arg0, %arg1 : i32, i32
  }
}

module attributes {stable_mosaic.version = 11 : i64} {
  func.func @_attn_kernel(%arg0: i32, %arg1: i32, %arg2: memref<1x8x32xbf16, #tpu.memory_space<vmem>>, %arg3: memref<1x8x64xbf16, #tpu.memory_space<vmem>>, %arg4: memref<1x8x64xbf16, #tpu.memory_space<vmem>>, %arg5: memref<1x1x8xf32, #tpu.memory_space<vmem>>, %arg6: memref<1x8x32xbf16, #tpu.memory_space<vmem>>) attributes {dimension_semantics = [#tpu.dimension_semantics<parallel>, #tpu.dimension_semantics<parallel>], iteration_bounds = array<i64: 2, 1>, scalar_prefetch = 0 : i64, scratch_operands = 0 : i64, tpu.core_type = #tpu.core_type<tc>, window_params = [{transform_indices = @transform_0, window_bounds = array<i64: 1, 8, 32>}, {transform_indices = @transform_1, window_bounds = array<i64: 1, 8, 64>}, {transform_indices = @transform_2, window_bounds = array<i64: 1, 8, 64>}, {transform_indices = @transform_3, window_bounds = array<i64: 1, 1, 8>}, {transform_indices = @transform_4, window_bounds = array<i64: 1, 8, 32>}]} {
    %c0 = arith.constant 0 : index
    %c0_0 = arith.constant 0 : index
    %c0_1 = arith.constant 0 : index
    %0 = vector.load %arg5[%c0, %c0_0, %c0_1] : memref<1x1x8xf32, #tpu.memory_space<vmem>>, vector<1x1x8xf32>
    %1 = vector.shape_cast %0 : vector<1x1x8xf32> to vector<1x8xf32>
    %cst = arith.constant 1.000000e+00 : f32
    %2 = vector.broadcast %cst : f32 to vector<1x8xf32>
    %3 = arith.subf %2, %1 : vector<1x8xf32>
    %cst_2 = arith.constant -1.000000e+09 : f32
    %4 = vector.broadcast %cst_2 : f32 to vector<1x8xf32>
    %5 = arith.mulf %3, %4 : vector<1x8xf32>
    %6 = vector.shape_cast %5 : vector<1x8xf32> to vector<1x8xf32>
    %7 = vector.broadcast %6 : vector<1x8xf32> to vector<8x8xf32>
    %c0_3 = arith.constant 0 : index
    %c0_4 = arith.constant 0 : index
    %c0_5 = arith.constant 0 : index
    %8 = vector.load %arg2[%c0_3, %c0_4, %c0_5] : memref<1x8x32xbf16, #tpu.memory_space<vmem>>, vector<1x8x8xbf16>
    %9 = vector.shape_cast %8 : vector<1x8x8xbf16> to vector<8x8xbf16>
    %c0_6 = arith.constant 0 : index
    %c0_7 = arith.constant 0 : index
    %c0_8 = arith.constant 0 : index
    %10 = vector.load %arg3[%c0_6, %c0_7, %c0_8] : memref<1x8x64xbf16, #tpu.memory_space<vmem>>, vector<1x8x8xbf16>
    %11 = vector.shape_cast %10 : vector<1x8x8xbf16> to vector<8x8xbf16>
    %c0_9 = arith.constant 0 : index
    %c0_10 = arith.constant 0 : index
    %c32 = arith.constant 32 : index
    %12 = vector.load %arg4[%c0_9, %c0_10, %c32] : memref<1x8x64xbf16, #tpu.memory_space<vmem>>, vector<1x8x8xbf16>
    %13 = vector.shape_cast %12 : vector<1x8x8xbf16> to vector<8x8xbf16>
    %cst_11 = arith.constant dense<0.000000e+00> : vector<8x8xf32>
    %14 = tpu.matmul %9, %11, %cst_11 {dimension_numbers = #tpu.dot_dimension_numbers<[1], [1], [0], [0], [0, 0, 1, 0], [], []>} : vector<8x8xbf16>, vector<8x8xbf16>, vector<8x8xf32> -> vector<8x8xf32>
    %cst_12 = arith.constant 0.353553385 : f32
    %15 = vector.broadcast %cst_12 : f32 to vector<8x8xf32>
    %16 = arith.mulf %14, %15 : vector<8x8xf32>
    %17 = arith.addf %16, %7 : vector<8x8xf32>
    %cst_13 = arith.constant dense<0xFF800000> : vector<8xf32>
    %18 = vector.multi_reduction <maximumf>, %17, %cst_13 [1] : vector<8x8xf32> to vector<8xf32>
    %19 = vector.shape_cast %18 : vector<8xf32> to vector<8x1xf32>
    %20 = vector.broadcast %19 : vector<8x1xf32> to vector<8x8xf32>
    %21 = arith.subf %17, %20 : vector<8x8xf32>
    %22 = math.exp %21 : vector<8x8xf32>
    %cst_14 = arith.constant dense<0.000000e+00> : vector<8xf32>
    %23 = vector.multi_reduction <add>, %22, %cst_14 [1] : vector<8x8xf32> to vector<8xf32>
    %24 = vector.shape_cast %23 : vector<8xf32> to vector<8x1xf32>
    %25 = tpu.reciprocal %24 {approx = true} : vector<8x1xf32> -> vector<8x1xf32>
    %26 = vector.broadcast %25 : vector<8x1xf32> to vector<8x8xf32>
    %27 = arith.mulf %22, %26 : vector<8x8xf32>
    %28 = arith.truncf %27 : vector<8x8xf32> to vector<8x8xbf16>
    %cst_15 = arith.constant dense<0.000000e+00> : vector<8x8xf32>
    %29 = tpu.matmul %28, %13, %cst_15 {dimension_numbers = #tpu.dot_dimension_numbers<[1], [0], [0], [1], [0, 0, 1, 1], [], []>} : vector<8x8xbf16>, vector<8x8xbf16>, vector<8x8xf32> -> vector<8x8xf32>
    %30 = arith.truncf %29 : vector<8x8xf32> to vector<8x8xbf16>
    %c0_16 = arith.constant 0 : index
    %c0_17 = arith.constant 0 : index
    %c0_18 = arith.constant 0 : index
    %31 = vector.load %arg6[%c0_16, %c0_17, %c0_18] : memref<1x8x32xbf16, #tpu.memory_space<vmem>>, vector<1x8x8xbf16>
    %32 = vector.shape_cast %31 : vector<1x8x8xbf16> to vector<8x8xbf16>
    %33 = vector.shape_cast %30 : vector<8x8xbf16> to vector<1x8x8xbf16>
    tpu.vector_store %arg6[%c0_16, %c0_17, %c0_18], %33 {strides = array<i32>} : memref<1x8x32xbf16, #tpu.memory_space<vmem>>, vector<1x8x8xbf16>,
    %c0_19 = arith.constant 0 : index
    %c0_20 = arith.constant 0 : index
    %c8 = arith.constant 8 : index
    %34 = vector.load %arg2[%c0_19, %c0_20, %c8] : memref<1x8x32xbf16, #tpu.memory_space<vmem>>, vector<1x8x8xbf16>
    %35 = vector.shape_cast %34 : vector<1x8x8xbf16> to vector<8x8xbf16>
    %c0_21 = arith.constant 0 : index
    %c0_22 = arith.constant 0 : index
    %c8_23 = arith.constant 8 : index
    %36 = vector.load %arg3[%c0_21, %c0_22, %c8_23] : memref<1x8x64xbf16, #tpu.memory_space<vmem>>, vector<1x8x8xbf16>
    %37 = vector.shape_cast %36 : vector<1x8x8xbf16> to vector<8x8xbf16>
    %c0_24 = arith.constant 0 : index
    %c0_25 = arith.constant 0 : index
    %c40 = arith.constant 40 : index
    %38 = vector.load %arg4[%c0_24, %c0_25, %c40] : memref<1x8x64xbf16, #tpu.memory_space<vmem>>, vector<1x8x8xbf16>
    %39 = vector.shape_cast %38 : vector<1x8x8xbf16> to vector<8x8xbf16>
    %cst_26 = arith.constant dense<0.000000e+00> : vector<8x8xf32>
    %40 = tpu.matmul %35, %37, %cst_26 {dimension_numbers = #tpu.dot_dimension_numbers<[1], [1], [0], [0], [0, 0, 1, 0], [], []>} : vector<8x8xbf16>, vector<8x8xbf16>, vector<8x8xf32> -> vector<8x8xf32>
    %cst_27 = arith.constant 0.353553385 : f32
    %41 = vector.broadcast %cst_27 : f32 to vector<8x8xf32>
    %42 = arith.mulf %40, %41 : vector<8x8xf32>
    %43 = arith.addf %42, %7 : vector<8x8xf32>
    %cst_28 = arith.constant dense<0xFF800000> : vector<8xf32>
    %44 = vector.multi_reduction <maximumf>, %43, %cst_28 [1] : vector<8x8xf32> to vector<8xf32>
    %45 = vector.shape_cast %44 : vector<8xf32> to vector<8x1xf32>
    %46 = vector.broadcast %45 : vector<8x1xf32> to vector<8x8xf32>
    %47 = arith.subf %43, %46 : vector<8x8xf32>
    %48 = math.exp %47 : vector<8x8xf32>
    %cst_29 = arith.constant dense<0.000000e+00> : vector<8xf32>
    %49 = vector.multi_reduction <add>, %48, %cst_29 [1] : vector<8x8xf32> to vector<8xf32>
    %50 = vector.shape_cast %49 : vector<8xf32> to vector<8x1xf32>
    %51 = tpu.reciprocal %50 {approx = true} : vector<8x1xf32> -> vector<8x1xf32>
    %52 = vector.broadcast %51 : vector<8x1xf32> to vector<8x8xf32>
    %53 = arith.mulf %48, %52 : vector<8x8xf32>
    %54 = arith.truncf %53 : vector<8x8xf32> to vector<8x8xbf16>
    %cst_30 = arith.constant dense<0.000000e+00> : vector<8x8xf32>
    %55 = tpu.matmul %54, %39, %cst_30 {dimension_numbers = #tpu.dot_dimension_numbers<[1], [0], [0], [1], [0, 0, 1, 1], [], []>} : vector<8x8xbf16>, vector<8x8xbf16>, vector<8x8xf32> -> vector<8x8xf32>
    %56 = arith.truncf %55 : vector<8x8xf32> to vector<8x8xbf16>
    %c0_31 = arith.constant 0 : index
    %c0_32 = arith.constant 0 : index
    %c8_33 = arith.constant 8 : index
    %57 = vector.load %arg6[%c0_31, %c0_32, %c8_33] : memref<1x8x32xbf16, #tpu.memory_space<vmem>>, vector<1x8x8xbf16>
    %58 = vector.shape_cast %57 : vector<1x8x8xbf16> to vector<8x8xbf16>
    %59 = vector.shape_cast %56 : vector<8x8xbf16> to vector<1x8x8xbf16>
    tpu.vector_store %arg6[%c0_31, %c0_32, %c8_33], %59 {strides = array<i32>} : memref<1x8x32xbf16, #tpu.memory_space<vmem>>, vector<1x8x8xbf16>,
    %c0_34 = arith.constant 0 : index
    %c0_35 = arith.constant 0 : index
    %c16 = arith.constant 16 : index
    %60 = vector.load %arg2[%c0_34, %c0_35, %c16] : memref<1x8x32xbf16, #tpu.memory_space<vmem>>, vector<1x8x8xbf16>
    %61 = vector.shape_cast %60 : vector<1x8x8xbf16> to vector<8x8xbf16>
    %c0_36 = arith.constant 0 : index
    %c0_37 = arith.constant 0 : index
    %c16_38 = arith.constant 16 : index
    %62 = vector.load %arg3[%c0_36, %c0_37, %c16_38] : memref<1x8x64xbf16, #tpu.memory_space<vmem>>, vector<1x8x8xbf16>
    %63 = vector.shape_cast %62 : vector<1x8x8xbf16> to vector<8x8xbf16>
    %c0_39 = arith.constant 0 : index
    %c0_40 = arith.constant 0 : index
    %c48 = arith.constant 48 : index
    %64 = vector.load %arg4[%c0_39, %c0_40, %c48] : memref<1x8x64xbf16, #tpu.memory_space<vmem>>, vector<1x8x8xbf16>
    %65 = vector.shape_cast %64 : vector<1x8x8xbf16> to vector<8x8xbf16>
    %cst_41 = arith.constant dense<0.000000e+00> : vector<8x8xf32>
    %66 = tpu.matmul %61, %63, %cst_41 {dimension_numbers = #tpu.dot_dimension_numbers<[1], [1], [0], [0], [0, 0, 1, 0], [], []>} : vector<8x8xbf16>, vector<8x8xbf16>, vector<8x8xf32> -> vector<8x8xf32>
    %cst_42 = arith.constant 0.353553385 : f32
    %67 = vector.broadcast %cst_42 : f32 to vector<8x8xf32>
    %68 = arith.mulf %66, %67 : vector<8x8xf32>
    %69 = arith.addf %68, %7 : vector<8x8xf32>
    %cst_43 = arith.constant dense<0xFF800000> : vector<8xf32>
    %70 = vector.multi_reduction <maximumf>, %69, %cst_43 [1] : vector<8x8xf32> to vector<8xf32>
    %71 = vector.shape_cast %70 : vector<8xf32> to vector<8x1xf32>
    %72 = vector.broadcast %71 : vector<8x1xf32> to vector<8x8xf32>
    %73 = arith.subf %69, %72 : vector<8x8xf32>
    %74 = math.exp %73 : vector<8x8xf32>
    %cst_44 = arith.constant dense<0.000000e+00> : vector<8xf32>
    %75 = vector.multi_reduction <add>, %74, %cst_44 [1] : vector<8x8xf32> to vector<8xf32>
    %76 = vector.shape_cast %75 : vector<8xf32> to vector<8x1xf32>
    %77 = tpu.reciprocal %76 {approx = true} : vector<8x1xf32> -> vector<8x1xf32>
    %78 = vector.broadcast %77 : vector<8x1xf32> to vector<8x8xf32>
    %79 = arith.mulf %74, %78 : vector<8x8xf32>
    %80 = arith.truncf %79 : vector<8x8xf32> to vector<8x8xbf16>
    %cst_45 = arith.constant dense<0.000000e+00> : vector<8x8xf32>
    %81 = tpu.matmul %80, %65, %cst_45 {dimension_numbers = #tpu.dot_dimension_numbers<[1], [0], [0], [1], [0, 0, 1, 1], [], []>} : vector<8x8xbf16>, vector<8x8xbf16>, vector<8x8xf32> -> vector<8x8xf32>
    %82 = arith.truncf %81 : vector<8x8xf32> to vector<8x8xbf16>
    %c0_46 = arith.constant 0 : index
    %c0_47 = arith.constant 0 : index
    %c16_48 = arith.constant 16 : index
    %83 = vector.load %arg6[%c0_46, %c0_47, %c16_48] : memref<1x8x32xbf16, #tpu.memory_space<vmem>>, vector<1x8x8xbf16>
    %84 = vector.shape_cast %83 : vector<1x8x8xbf16> to vector<8x8xbf16>
    %85 = vector.shape_cast %82 : vector<8x8xbf16> to vector<1x8x8xbf16>
    tpu.vector_store %arg6[%c0_46, %c0_47, %c16_48], %85 {strides = array<i32>} : memref<1x8x32xbf16, #tpu.memory_space<vmem>>, vector<1x8x8xbf16>,
    %c0_49 = arith.constant 0 : index
    %c0_50 = arith.constant 0 : index
    %c24 = arith.constant 24 : index
    %86 = vector.load %arg2[%c0_49, %c0_50, %c24] : memref<1x8x32xbf16, #tpu.memory_space<vmem>>, vector<1x8x8xbf16>
    %87 = vector.shape_cast %86 : vector<1x8x8xbf16> to vector<8x8xbf16>
    %c0_51 = arith.constant 0 : index
    %c0_52 = arith.constant 0 : index
    %c24_53 = arith.constant 24 : index
    %88 = vector.load %arg3[%c0_51, %c0_52, %c24_53] : memref<1x8x64xbf16, #tpu.memory_space<vmem>>, vector<1x8x8xbf16>
    %89 = vector.shape_cast %88 : vector<1x8x8xbf16> to vector<8x8xbf16>
    %c0_54 = arith.constant 0 : index
    %c0_55 = arith.constant 0 : index
    %c56 = arith.constant 56 : index
    %90 = vector.load %arg4[%c0_54, %c0_55, %c56] : memref<1x8x64xbf16, #tpu.memory_space<vmem>>, vector<1x8x8xbf16>
    %91 = vector.shape_cast %90 : vector<1x8x8xbf16> to vector<8x8xbf16>
    %cst_56 = arith.constant dense<0.000000e+00> : vector<8x8xf32>
    %92 = tpu.matmul %87, %89, %cst_56 {dimension_numbers = #tpu.dot_dimension_numbers<[1], [1], [0], [0], [0, 0, 1, 0], [], []>} : vector<8x8xbf16>, vector<8x8xbf16>, vector<8x8xf32> -> vector<8x8xf32>
    %cst_57 = arith.constant 0.353553385 : f32
    %93 = vector.broadcast %cst_57 : f32 to vector<8x8xf32>
    %94 = arith.mulf %92, %93 : vector<8x8xf32>
    %95 = arith.addf %94, %7 : vector<8x8xf32>
    %cst_58 = arith.constant dense<0xFF800000> : vector<8xf32>
    %96 = vector.multi_reduction <maximumf>, %95, %cst_58 [1] : vector<8x8xf32> to vector<8xf32>
    %97 = vector.shape_cast %96 : vector<8xf32> to vector<8x1xf32>
    %98 = vector.broadcast %97 : vector<8x1xf32> to vector<8x8xf32>
    %99 = arith.subf %95, %98 : vector<8x8xf32>
    %100 = math.exp %99 : vector<8x8xf32>
    %cst_59 = arith.constant dense<0.000000e+00> : vector<8xf32>
    %101 = vector.multi_reduction <add>, %100, %cst_59 [1] : vector<8x8xf32> to vector<8xf32>
    %102 = vector.shape_cast %101 : vector<8xf32> to vector<8x1xf32>
    %103 = tpu.reciprocal %102 {approx = true} : vector<8x1xf32> -> vector<8x1xf32>
    %104 = vector.broadcast %103 : vector<8x1xf32> to vector<8x8xf32>
    %105 = arith.mulf %100, %104 : vector<8x8xf32>
    %106 = arith.truncf %105 : vector<8x8xf32> to vector<8x8xbf16>
    %cst_60 = arith.constant dense<0.000000e+00> : vector<8x8xf32>
    %107 = tpu.matmul %106, %91, %cst_60 {dimension_numbers = #tpu.dot_dimension_numbers<[1], [0], [0], [1], [0, 0, 1, 1], [], []>} : vector<8x8xbf16>, vector<8x8xbf16>, vector<8x8xf32> -> vector<8x8xf32>
    %108 = arith.truncf %107 : vector<8x8xf32> to vector<8x8xbf16>
    %c0_61 = arith.constant 0 : index
    %c0_62 = arith.constant 0 : index
    %c24_63 = arith.constant 24 : index
    %109 = vector.load %arg6[%c0_61, %c0_62, %c24_63] : memref<1x8x32xbf16, #tpu.memory_space<vmem>>, vector<1x8x8xbf16>
    %110 = vector.shape_cast %109 : vector<1x8x8xbf16> to vector<8x8xbf16>
    %111 = vector.shape_cast %108 : vector<8x8xbf16> to vector<1x8x8xbf16>
    tpu.vector_store %arg6[%c0_61, %c0_62, %c24_63], %111 {strides = array<i32>} : memref<1x8x32xbf16, #tpu.memory_space<vmem>>, vector<1x8x8xbf16>,
    return
  }
  func.func @transform_0(%arg0: i32, %arg1: i32) -> (i32, i32, i32) {
    %c0_i32 = arith.constant 0 : i32
    %c0_i32_0 = arith.constant 0 : i32
    return %arg0, %arg1, %c0_i32 : i32, i32, i32
  }
  func.func @transform_1(%arg0: i32, %arg1: i32) -> (i32, i32, i32) {
    %c0_i32 = arith.constant 0 : i32
    %c0_i32_0 = arith.constant 0 : i32
    %c0_i32_1 = arith.constant 0 : i32
    return %arg0, %c0_i32, %c0_i32_0 : i32, i32, i32
  }
  func.func @transform_2(%arg0: i32, %arg1: i32) -> (i32, i32, i32) {
    %c0_i32 = arith.constant 0 : i32
    %c0_i32_0 = arith.constant 0 : i32
    %c0_i32_1 = arith.constant 0 : i32
    return %arg0, %c0_i32, %c0_i32_0 : i32, i32, i32
  }
  func.func @transform_3(%arg0: i32, %arg1: i32) -> (i32, i32, i32) {
    %c0_i32 = arith.constant 0 : i32
    %c0_i32_0 = arith.constant 0 : i32
    %c0_i32_1 = arith.constant 0 : i32
    return %arg0, %c0_i32, %c0_i32_0 : i32, i32, i32
  }
  func.func @transform_4(%arg0: i32, %arg1: i32) -> (i32, i32, i32) {
    %c0_i32 = arith.constant 0 : i32
    %c0_i32_0 = arith.constant 0 : i32
    return %arg0, %arg1, %c0_i32 : i32, i32, i32
  }
}

</mosaic_0001>

<llo_original>
// kernel: _lambda_.42
$region0: #{_lambda_.42}
  #allocation0 [shape = 'u32[]', space=smem, size = 0x4, offset = 0x4, fixed_abs, tag = 'smem constant byte address 0x4 - core index']
  #allocation1 [shape = 'u32[144,128]{1,0:T(1,128)}', space=vmem, size = 0x12000, scoped, tag = 'internal scratch']
  #allocation2 [shape = 'f32[16,96]{1,0:T(8,128)}', space=vmem, size = 0x2000, scoped, tag = 'scratch operand']
  %s0 = inlined_call_operand.vmem [shape: bf16[16,32], index: 0, kind: input, shape index: {}]
  %s1 = inlined_call_operand.vmem [shape: bf16[32,96], index: 1, kind: input, shape index: {}]
  %s2 = inlined_call_operand.vmem [shape: f32[1,96], index: 2, kind: input, shape index: {}]
  %s3 = inlined_call_operand.vmem [shape: bf16[16,96], index: 3, kind: output, shape index: {}]
  %s4 = sld [smem:[#allocation0]]
  $region30: #{_lambda_.42} parent=0
    _
  %s6 = ssub.s32 1, %s4
  %s7 = scalar_select 0, %s6, %s4
  // Predicated region
  $region2: #{_lambda_.42} parent=0 // pred_check
    _
  $region3: #{_lambda_.42} parent=0 // pred_check_branch
    %9 = sbr.rel (0) target = $region5
  $region4: #{_lambda_.42} parent=0 // pred_region
    _
  $region5: #{_lambda_.42} parent=0 // pred_fallthru
    _
  // Predicated region
  $region6: #{_lambda_.42} parent=0 // pred_check
    _
  $region7: #{_lambda_.42} parent=0 // pred_check_branch
    %11 = sbr.rel (0) target = $region9
  $region8: #{_lambda_.42} parent=0 // pred_region
    _
  $region9: #{_lambda_.42} parent=0 // pred_fallthru
    _
  // Predicated region
  $region10: #{_lambda_.42} parent=0 // pred_check
    _
  $region11: #{_lambda_.42} parent=0 // pred_check_branch
    %13 = sbr.rel (0) target = $region13
  $region12: #{_lambda_.42} parent=0 // pred_region
    _
  $region13: #{_lambda_.42} parent=0 // pred_fallthru
    _
  %p15 = scmp.eq.s32.totalorder 0, 0
  // Predicated region
  $region14: #{_lambda_.42} parent=0 // pred_check
    %p16 = pneg %p15
  $region15: #{_lambda_.42} parent=0 // pred_check_branch
    %18 = sbr.rel (%p16) target = $region17
  $region16: #{_lambda_.42} parent=0 // pred_region
    %vm19 = vcmask 785408
    %20 = vst.msk [vmem:[#allocation2] sm:$0xff] %vm19, 0.0
    %21 = vst.msk [vmem:[#allocation2 + $0x8] sm:$0xff] %vm19, 0.0
  $region17: #{_lambda_.42} parent=0 // pred_fallthru
    _
  %v22 = vld [vmem:[#allocation2] sm:$0xff]
  %v23 = vld [vmem:[#allocation2 + $0x8] sm:$0xff]
  %v24 = vld [vmem:[%s0] sm:$0xf]
  %v25 = vld [vmem:[%s0 + $0x4] sm:$0xf]
  %v26 = vld [vmem:[%s1] sm:$0xf]
  %v27 = vld [vmem:[%s1 + $0x4] sm:$0xf]
  %v28 = vld [vmem:[%s1 + $0x8] sm:$0xf]
  %v29 = vld [vmem:[%s1 + $0xc] sm:$0xf]
  %v32 = vunpack.c.l.b16 %v24
  %v33 = vunpack.c.l.b16 %v25
  %v34 = vpack.c.b16 %v33, %v32
  %v39 = vunpack.c.l.b16 %v26
  %v40 = vunpack.c.l.b16 %v27
  %v41 = vunpack.c.l.b16 %v28
  %v42 = vunpack.c.l.b16 %v29
  %v43 = vpack.c.b16 %v40, %v39
  %v44 = vpack.c.b16 %v42, %v41
  %vm47 = vcmask 261120
  %v49 = vsel %vm47, %v34, 0
  %51 = vmatprep.subr.bf16.mxu0 0
  %52 = vmatpush1.bf16.msra.mxu0 0
  %53 = vmatprep.subr.bf16.mxu0 0
  %54 = vmatpush1.bf16.msra.mxu0 0
  %55 = vmatprep.subr.bf16.mxu0 0
  %56 = vmatpush1.bf16.msra.mxu0 0
  %57 = vmatprep.subr.bf16.mxu0 0
  %58 = vmatpush1.bf16.msra.mxu0 0
  %59 = vmatprep.subr.bf16.mxu0 0
  %60 = vmatpush1.bf16.msra.mxu0 0
  %61 = vmatprep.subr.bf16.mxu0 0
  %62 = vmatpush1.bf16.msra.mxu0 0
  %63 = vmatprep.subr.bf16.mxu0 0
  %64 = vmatpush1.bf16.msra.mxu0 %v44
  %65 = vmatprep.subr.bf16.mxu0 0
  %66 = vmatpush1.bf16.msra.mxu0 %v43
  %67 = vmatprep.subr.bf16.mxu0 0
  %68 = vmatpush2.bf16.msra.mxu0 0
  %69 = vmatprep.subr.bf16.mxu0 0
  %70 = vmatpush2.bf16.msra.mxu0 0
  %71 = vmatprep.subr.bf16.mxu0 0
  %72 = vmatpush2.bf16.msra.mxu0 0
  %73 = vmatprep.subr.bf16.mxu0 0
  %74 = vmatpush2.bf16.msra.mxu0 0
  %75 = vmatprep.subr.bf16.mxu0 0
  %76 = vmatpush2.bf16.msra.mxu0 0
  %77 = vmatprep.subr.bf16.mxu0 0
  %78 = vmatpush2.bf16.msra.mxu0 0
  %79 = vmatprep.subr.bf16.mxu0 0
  %80 = vmatpush2.bf16.msra.mxu0 0
  %81 = vmatprep.subr.bf16.mxu0 0
  %82 = vmatpush2.bf16.msra.mxu0 0
  %83 = vmatprep.mubr.bf16.mxu0 0
  %84 = vmatmul.mubr.bf16.gmra.mxu0 %v49
  %v85 = vpop.f32.mrf.mxu0
  %v86 = vadd.f32 0.0, %v85
  %v87 = vpop.f32.mrf.mxu0
  %v88 = vpop.f32.mrf.mxu0
  %v89 = vadd.f32 0.0, %v88
  %v90 = vpop.f32.mrf.mxu0
  %91 = vdwg.mxu0
  %v92 = vadd.f32 %v22, %v86
  %v93 = vadd.f32 %v23, %v89
  %vm94 = vcmask 785408
  %95 = vst.msk [vmem:[#allocation2] sm:$0xff] %vm94, %v92
  %96 = vst.msk [vmem:[#allocation2 + $0x8] sm:$0xff] %vm94, %v93
  // Predicated region
  $region18: #{_lambda_.42} parent=0 // pred_check
    %p97 = pneg %p15
  $region19: #{_lambda_.42} parent=0 // pred_check_branch
    %99 = sbr.rel (%p97) target = $region21
  $region20: #{_lambda_.42} parent=0 // pred_region
    %v100 = vld [vmem:[#allocation2] sm:$0xff]
    %v101 = vld [vmem:[#allocation2 + $0x8] sm:$0xff]
    %v102 = vld [vmem:[%s2] sm:$0x1]
    %v104 = vlaneseq
    %v105 = vshrl.u32 %v104, 7
    %v106 = vsub.s32 0, %v105
    %v107 = vrot.slane %v102, %v106
    %v109 = vadd.f32 %v100, %v107
    %v110 = vadd.f32 %v101, %v107
    %v111 = vpack.c.bf16 %v110, %v109
    %v113 = vunpack.c.l.b16 %v111
    %v114 = vunpack.c.h.b16 %v111
    %v115 = vpack.c.b16 %v113, %v113
    %v116 = vpack.c.b16 %v114, %v114
    %vm119 = vcmask 781312
    %120 = vst.msk [vmem:[%s3] sm:$0xf] %vm119, %v115
    %121 = vst.msk [vmem:[%s3 + $0x4] sm:$0xf] %vm119, %v116
  $region21: #{_lambda_.42} parent=0 // pred_fallthru
    _
  // Predicated region
  $region22: #{_lambda_.42} parent=0 // pred_check
    _
  $region23: #{_lambda_.42} parent=0 // pred_check_branch
    %123 = sbr.rel (0) target = $region25
  $region24: #{_lambda_.42} parent=0 // pred_region
    _
  $region25: #{_lambda_.42} parent=0 // pred_fallthru
    _
  // Predicated region
  $region26: #{_lambda_.42} parent=0 // pred_check
    _
  $region27: #{_lambda_.42} parent=0 // pred_check_branch
    %125 = sbr.rel (0) target = $region29
  $region28: #{_lambda_.42} parent=0 // pred_region
    _
  $region29: #{_lambda_.42} parent=0 // pred_fallthru
    _

// kernel: _lambda_.41
$region0: #{_lambda_.41}
  #allocation0 [shape = 'u32[]', space=smem, size = 0x4, offset = 0x4, fixed_abs, tag = 'smem constant byte address 0x4 - core index']
  #allocation1 [shape = 'u32[144,128]{1,0:T(1,128)}', space=vmem, size = 0x12000, scoped, tag = 'internal scratch']
  %s0 = inlined_call_operand.vmem [shape: bf16[16,32], index: 0, kind: input, shape index: {}]
  %s1 = inlined_call_operand.vmem [shape: f32[1,32], index: 1, kind: input, shape index: {}]
  %s2 = inlined_call_operand.vmem [shape: f32[1,32], index: 2, kind: input, shape index: {}]
  %s3 = inlined_call_operand.vmem [shape: bf16[16,32], index: 3, kind: output, shape index: {}]
  %s4 = sld [smem:[#allocation0]]
  $region22: #{_lambda_.41} parent=0
    _
  %s6 = ssub.s32 1, %s4
  %s7 = scalar_select 0, %s6, %s4
  // Predicated region
  $region2: #{_lambda_.41} parent=0 // pred_check
    _
  $region3: #{_lambda_.41} parent=0 // pred_check_branch
    %9 = sbr.rel (0) target = $region5
  $region4: #{_lambda_.41} parent=0 // pred_region
    _
  $region5: #{_lambda_.41} parent=0 // pred_fallthru
    _
  // Predicated region
  $region6: #{_lambda_.41} parent=0 // pred_check
    _
  $region7: #{_lambda_.41} parent=0 // pred_check_branch
    %11 = sbr.rel (0) target = $region9
  $region8: #{_lambda_.41} parent=0 // pred_region
    _
  $region9: #{_lambda_.41} parent=0 // pred_fallthru
    _
  // Predicated region
  $region10: #{_lambda_.41} parent=0 // pred_check
    _
  $region11: #{_lambda_.41} parent=0 // pred_check_branch
    %13 = sbr.rel (0) target = $region13
  $region12: #{_lambda_.41} parent=0 // pred_region
    _
  $region13: #{_lambda_.41} parent=0 // pred_fallthru
    _
  %v14 = vld [vmem:[%s0] sm:$0xf]
  %v15 = vld [vmem:[%s0 + $0x4] sm:$0xf]
  %v16 = vunpack.c.l.bf16 %v14
  %v17 = vunpack.c.l.bf16 %v15
  %vm18 = vcmask 261120
  %v19 = vsel %vm18, %v16, 0.0
  %20 = vadd.xlane.f32.xlu0 %v19
  %v21 = vpop.xlane.xlu0 %20
  %v22 = vsel %vm18, %v17, 0.0
  %23 = vadd.xlane.f32.xlu0 %v22
  %v24 = vpop.xlane.xlu0 %23
  %v25 = vrcp.pop 32.0
  %v26 = vmul.f32 %v21, %v25
  %v27 = vmul.f32 %v24, %v25
  %v28 = vsub.f32 %v16, %v26
  %v29 = vsub.f32 %v17, %v27
  %v30 = vmul.f32 %v28, %v28
  %v31 = vmul.f32 %v29, %v29
  %v32 = vsel %vm18, %v30, 0.0
  %33 = vadd.xlane.f32.xlu0 %v32
  %v34 = vpop.xlane.xlu0 %33
  %v35 = vsel %vm18, %v31, 0.0
  %36 = vadd.xlane.f32.xlu0 %v35
  %v37 = vpop.xlane.xlu0 %36
  %v38 = vmul.f32 %v34, %v25
  %v39 = vmul.f32 %v37, %v25
  %v40 = vadd.f32 %v38, 1e-05
  %v41 = vadd.f32 %v39, 1e-05
  %v42 = vrsqrt.pop %v40
  %v43 = vrsqrt.pop %v41
  %v44 = vmul.f32 %v28, %v42
  %v45 = vmul.f32 %v29, %v43
  %v46 = vld [vmem:[%s1] sm:$0x1]
  %v48 = vlaneseq
  %v49 = vshrl.u32 %v48, 7
  %v50 = vsub.s32 0, %v49
  %v51 = vrot.slane %v46, %v50
  %v53 = vmul.f32 %v44, %v51
  %v54 = vmul.f32 %v45, %v51
  %v55 = vld [vmem:[%s2] sm:$0x1]
  %v57 = vlaneseq
  %v58 = vshrl.u32 %v57, 7
  %v59 = vsub.s32 0, %v58
  %v60 = vrot.slane %v55, %v59
  %v62 = vadd.f32 %v53, %v60
  %v63 = vadd.f32 %v54, %v60
  %v64 = vpack.c.bf16 %v63, %v62
  %v66 = vunpack.c.l.b16 %v64
  %v67 = vunpack.c.h.b16 %v64
  %v68 = vpack.c.b16 %v66, %v66
  %v69 = vpack.c.b16 %v67, %v67
  %vm72 = vcmask 257024
  %73 = vst.msk [vmem:[%s3] sm:$0xf] %vm72, %v68
  %74 = vst.msk [vmem:[%s3 + $0x4] sm:$0xf] %vm72, %v69
  // Predicated region
  $region14: #{_lambda_.41} parent=0 // pred_check
    _
  $region15: #{_lambda_.41} parent=0 // pred_check_branch
    %76 = sbr.rel (0) target = $region17
  $region16: #{_lambda_.41} parent=0 // pred_region
    _
  $region17: #{_lambda_.41} parent=0 // pred_fallthru
    _
  // Predicated region
  $region18: #{_lambda_.41} parent=0 // pred_check
    _
  $region19: #{_lambda_.41} parent=0 // pred_check_branch
    %78 = sbr.rel (0) target = $region21
  $region20: #{_lambda_.41} parent=0 // pred_region
    _
  $region21: #{_lambda_.41} parent=0 // pred_fallthru
    _

// kernel: _lambda_.44
$region0: #{_lambda_.44}
  #allocation0 [shape = 'u32[]', space=smem, size = 0x4, offset = 0x4, fixed_abs, tag = 'smem constant byte address 0x4 - core index']
  #allocation1 [shape = 'u32[144,128]{1,0:T(1,128)}', space=vmem, size = 0x12000, scoped, tag = 'internal scratch']
  #allocation2 [shape = 'f32[16,32]{1,0:T(8,128)}', space=vmem, size = 0x2000, scoped, tag = 'scratch operand']
  %s0 = inlined_call_operand.vmem [shape: bf16[16,32], index: 0, kind: input, shape index: {}]
  %s1 = inlined_call_operand.vmem [shape: bf16[32,32], index: 1, kind: input, shape index: {}]
  %s2 = inlined_call_operand.vmem [shape: f32[1,32], index: 2, kind: input, shape index: {}]
  %s3 = inlined_call_operand.vmem [shape: bf16[16,32], index: 3, kind: input, shape index: {}]
  %s4 = inlined_call_operand.vmem [shape: f32[1,32], index: 4, kind: input, shape index: {}]
  %s5 = inlined_call_operand.vmem [shape: f32[1,32], index: 5, kind: input, shape index: {}]
  %s6 = inlined_call_operand.vmem [shape: bf16[16,32], index: 6, kind: output, shape index: {}]
  %s7 = sld [smem:[#allocation0]]
  $region42: #{_lambda_.44} parent=0
    _
  %s9 = ssub.s32 1, %s7
  %s10 = scalar_select 0, %s9, %s7
  // Predicated region
  $region2: #{_lambda_.44} parent=0 // pred_check
    _
  $region3: #{_lambda_.44} parent=0 // pred_check_branch
    %12 = sbr.rel (0) target = $region5
  $region4: #{_lambda_.44} parent=0 // pred_region
    _
  $region5: #{_lambda_.44} parent=0 // pred_fallthru
    _
  // Predicated region
  $region6: #{_lambda_.44} parent=0 // pred_check
    _
  $region7: #{_lambda_.44} parent=0 // pred_check_branch
    %14 = sbr.rel (0) target = $region9
  $region8: #{_lambda_.44} parent=0 // pred_region
    _
  $region9: #{_lambda_.44} parent=0 // pred_fallthru
    _
  // Predicated region
  $region10: #{_lambda_.44} parent=0 // pred_check
    _
  $region11: #{_lambda_.44} parent=0 // pred_check_branch
    %16 = sbr.rel (0) target = $region13
  $region12: #{_lambda_.44} parent=0 // pred_region
    _
  $region13: #{_lambda_.44} parent=0 // pred_fallthru
    _
  // Predicated region
  $region14: #{_lambda_.44} parent=0 // pred_check
    _
  $region15: #{_lambda_.44} parent=0 // pred_check_branch
    %18 = sbr.rel (0) target = $region17
  $region16: #{_lambda_.44} parent=0 // pred_region
    _
  $region17: #{_lambda_.44} parent=0 // pred_fallthru
    _
  // Predicated region
  $region18: #{_lambda_.44} parent=0 // pred_check
    _
  $region19: #{_lambda_.44} parent=0 // pred_check_branch
    %20 = sbr.rel (0) target = $region21
  $region20: #{_lambda_.44} parent=0 // pred_region
    _
  $region21: #{_lambda_.44} parent=0 // pred_fallthru
    _
  // Predicated region
  $region22: #{_lambda_.44} parent=0 // pred_check
    _
  $region23: #{_lambda_.44} parent=0 // pred_check_branch
    %22 = sbr.rel (0) target = $region25
  $region24: #{_lambda_.44} parent=0 // pred_region
    _
  $region25: #{_lambda_.44} parent=0 // pred_fallthru
    _
  %p24 = scmp.eq.s32.totalorder 0, 0
  // Predicated region
  $region26: #{_lambda_.44} parent=0 // pred_check
    %p25 = pneg %p24
  $region27: #{_lambda_.44} parent=0 // pred_check_branch
    %27 = sbr.rel (%p25) target = $region29
  $region28: #{_lambda_.44} parent=0 // pred_region
    %vm28 = vcmask 261120
    %29 = vst.msk [vmem:[#allocation2] sm:$0xff] %vm28, 0.0
    %30 = vst.msk [vmem:[#allocation2 + $0x8] sm:$0xff] %vm28, 0.0
  $region29: #{_lambda_.44} parent=0 // pred_fallthru
    _
  %v31 = vld [vmem:[#allocation2] sm:$0xff]
  %v32 = vld [vmem:[#allocation2 + $0x8] sm:$0xff]
  %v33 = vld [vmem:[%s0] sm:$0xf]
  %v34 = vld [vmem:[%s0 + $0x4] sm:$0xf]
  %v35 = vld [vmem:[%s1] sm:$0xf]
  %v36 = vld [vmem:[%s1 + $0x4] sm:$0xf]
  %v37 = vld [vmem:[%s1 + $0x8] sm:$0xf]
  %v38 = vld [vmem:[%s1 + $0xc] sm:$0xf]
  %v41 = vunpack.c.l.b16 %v33
  %v42 = vunpack.c.l.b16 %v34
  %v43 = vpack.c.b16 %v42, %v41
  %v48 = vunpack.c.l.b16 %v35
  %v49 = vunpack.c.l.b16 %v36
  %v50 = vunpack.c.l.b16 %v37
  %v51 = vunpack.c.l.b16 %v38
  %v52 = vpack.c.b16 %v49, %v48
  %v53 = vpack.c.b16 %v51, %v50
  %vm56 = vcmask 261120
  %v58 = vsel %vm56, %v43, 0
  %60 = vmatprep.subr.bf16.mxu0 0
  %61 = vmatpush1.bf16.msra.mxu0 0
  %62 = vmatprep.subr.bf16.mxu0 0
  %63 = vmatpush1.bf16.msra.mxu0 0
  %64 = vmatprep.subr.bf16.mxu0 0
  %65 = vmatpush1.bf16.msra.mxu0 0
  %66 = vmatprep.subr.bf16.mxu0 0
  %67 = vmatpush1.bf16.msra.mxu0 0
  %68 = vmatprep.subr.bf16.mxu0 0
  %69 = vmatpush1.bf16.msra.mxu0 0
  %70 = vmatprep.subr.bf16.mxu0 0
  %71 = vmatpush1.bf16.msra.mxu0 0
  %72 = vmatprep.subr.bf16.mxu0 0
  %73 = vmatpush1.bf16.msra.mxu0 %v53
  %74 = vmatprep.subr.bf16.mxu0 0
  %75 = vmatpush1.bf16.msra.mxu0 %v52
  %76 = vmatprep.subr.bf16.mxu0 0
  %77 = vmatpush2.bf16.msra.mxu0 0
  %78 = vmatprep.subr.bf16.mxu0 0
  %79 = vmatpush2.bf16.msra.mxu0 0
  %80 = vmatprep.subr.bf16.mxu0 0
  %81 = vmatpush2.bf16.msra.mxu0 0
  %82 = vmatprep.subr.bf16.mxu0 0
  %83 = vmatpush2.bf16.msra.mxu0 0
  %84 = vmatprep.subr.bf16.mxu0 0
  %85 = vmatpush2.bf16.msra.mxu0 0
  %86 = vmatprep.subr.bf16.mxu0 0
  %87 = vmatpush2.bf16.msra.mxu0 0
  %88 = vmatprep.subr.bf16.mxu0 0
  %89 = vmatpush2.bf16.msra.mxu0 0
  %90 = vmatprep.subr.bf16.mxu0 0
  %91 = vmatpush2.bf16.msra.mxu0 0
  %92 = vmatprep.mubr.bf16.mxu0 0
  %93 = vmatmul.mubr.bf16.gmra.mxu0 %v58
  %v94 = vpop.f32.mrf.mxu0
  %v95 = vadd.f32 0.0, %v94
  %v96 = vpop.f32.mrf.mxu0
  %v97 = vpop.f32.mrf.mxu0
  %v98 = vadd.f32 0.0, %v97
  %v99 = vpop.f32.mrf.mxu0
  %100 = vdwg.mxu0
  %v101 = vadd.f32 %v31, %v95
  %v102 = vadd.f32 %v32, %v98
  %103 = vst.msk [vmem:[#allocation2] sm:$0xff] %vm56, %v101
  %104 = vst.msk [vmem:[#allocation2 + $0x8] sm:$0xff] %vm56, %v102
  // Predicated region
  $region30: #{_lambda_.44} parent=0 // pred_check
    %p105 = pneg %p24
  $region31: #{_lambda_.44} parent=0 // pred_check_branch
    %107 = sbr.rel (%p105) target = $region33
  $region32: #{_lambda_.44} parent=0 // pred_region
    %v108 = vld [vmem:[#allocation2] sm:$0xff]
    %v109 = vld [vmem:[#allocation2 + $0x8] sm:$0xff]
    %v110 = vld [vmem:[%s2] sm:$0x1]
    %v112 = vlaneseq
    %v113 = vshrl.u32 %v112, 7
    %v114 = vsub.s32 0, %v113
    %v115 = vrot.slane %v110, %v114
    %v117 = vadd.f32 %v108, %v115
    %v118 = vadd.f32 %v109, %v115
    %v119 = vld [vmem:[%s3] sm:$0xf]
    %v120 = vld [vmem:[%s3 + $0x4] sm:$0xf]
    %v121 = vunpack.c.l.bf16 %v119
    %v122 = vunpack.c.l.bf16 %v120
    %v123 = vadd.f32 %v117, %v121
    %v124 = vadd.f32 %v118, %v122
    %v125 = vsel %vm56, %v123, 0.0
    %126 = vadd.xlane.f32.xlu0 %v125
    %v127 = vpop.xlane.xlu0 %126
    %v128 = vsel %vm56, %v124, 0.0
    %129 = vadd.xlane.f32.xlu0 %v128
    %v130 = vpop.xlane.xlu0 %129
    %v131 = vrcp.pop 32.0
    %v132 = vmul.f32 %v127, %v131
    %v133 = vmul.f32 %v130, %v131
    %v134 = vsub.f32 %v123, %v132
    %v135 = vsub.f32 %v124, %v133
    %v136 = vmul.f32 %v134, %v134
    %v137 = vmul.f32 %v135, %v135
    %v138 = vsel %vm56, %v136, 0.0
    %139 = vadd.xlane.f32.xlu0 %v138
    %v140 = vpop.xlane.xlu0 %139
    %v141 = vsel %vm56, %v137, 0.0
    %142 = vadd.xlane.f32.xlu0 %v141
    %v143 = vpop.xlane.xlu0 %142
    %v144 = vmul.f32 %v140, %v131
    %v145 = vmul.f32 %v143, %v131
    %v146 = vadd.f32 %v144, 1e-05
    %v147 = vadd.f32 %v145, 1e-05
    %v148 = vrsqrt.pop %v146
    %v149 = vrsqrt.pop %v147
    %v150 = vmul.f32 %v134, %v148
    %v151 = vmul.f32 %v135, %v149
    %v152 = vld [vmem:[%s4] sm:$0x1]
    %v154 = vlaneseq
    %v155 = vshrl.u32 %v154, 7
    %v156 = vsub.s32 0, %v155
    %v157 = vrot.slane %v152, %v156
    %v159 = vmul.f32 %v150, %v157
    %v160 = vmul.f32 %v151, %v157
    %v161 = vld [vmem:[%s5] sm:$0x1]
    %v163 = vlaneseq
    %v164 = vshrl.u32 %v163, 7
    %v165 = vsub.s32 0, %v164
    %v166 = vrot.slane %v161, %v165
    %v168 = vadd.f32 %v159, %v166
    %v169 = vadd.f32 %v160, %v166
    %v170 = vpack.c.bf16 %v169, %v168
    %v172 = vunpack.c.l.b16 %v170
    %v173 = vunpack.c.h.b16 %v170
    %v174 = vpack.c.b16 %v172, %v172
    %v175 = vpack.c.b16 %v173, %v173
    %vm178 = vcmask 257024
    %179 = vst.msk [vmem:[%s6] sm:$0xf] %vm178, %v174
    %180 = vst.msk [vmem:[%s6 + $0x4] sm:$0xf] %vm178, %v175
  $region33: #{_lambda_.44} parent=0 // pred_fallthru
    _
  // Predicated region
  $region34: #{_lambda_.44} parent=0 // pred_check
    _
  $region35: #{_lambda_.44} parent=0 // pred_check_branch
    %182 = sbr.rel (0) target = $region37
  $region36: #{_lambda_.44} parent=0 // pred_region
    _
  $region37: #{_lambda_.44} parent=0 // pred_fallthru
    _
  // Predicated region
  $region38: #{_lambda_.44} parent=0 // pred_check
    _
  $region39: #{_lambda_.44} parent=0 // pred_check_branch
    %184 = sbr.rel (0) target = $region41
  $region40: #{_lambda_.44} parent=0 // pred_region
    _
  $region41: #{_lambda_.44} parent=0 // pred_fallthru
    _

// kernel: _lambda_.43
$region0: #{_lambda_.43}
  #allocation0 [shape = 'u32[]', space=smem, size = 0x4, offset = 0x4, fixed_abs, tag = 'smem constant byte address 0x4 - core index']
  #allocation1 [shape = 'u32[144,128]{1,0:T(1,128)}', space=vmem, size = 0x12000, scoped, tag = 'internal scratch']
  %s0 = inlined_call_operand.vmem [shape: bf16[2,8,96], index: 0, kind: input, shape index: {}, may-alias: {0,1,2}]
  %s1 = inlined_call_operand.vmem [shape: bf16[2,8,96], index: 1, kind: input, shape index: {}, may-alias: {0,1,2}]
  %s2 = inlined_call_operand.vmem [shape: bf16[2,8,96], index: 2, kind: input, shape index: {}, may-alias: {0,1,2}]
  %s3 = inlined_call_operand.vmem [shape: f32[2,1,8], index: 3, kind: input, shape index: {}]
  %s4 = inlined_call_operand.vmem [shape: bf16[2,8,32], index: 4, kind: output, shape index: {}]
  %s5 = sld [smem:[#allocation0]]
  $region49: #{_lambda_.43} parent=0
    _
  %s7 = ssub.s32 1, %s5
  %s8 = scalar_select 0, %s7, %s5
  loop: start=0, step=1, limit=4
  $region2: #{_lambda_.43} parent=0 // loop_pre_header
    _
  $region3: #{_lambda_.43} parent=0 // loop_header
    %s10 = sphi 0, %s14
    %p11 = scmp.ge.s32.totalorder %s10, 4
    %s17 = sphi 0, %s29
    %s18 = sphi 0, %s25
    %s19 = sphi 0, %s17
    %s20 = sphi 0, %s18
    %s21 = sphi 0, %s19
    %s22 = sphi 0, %s20
    %s34 = sphi 0, %s36
    %s37 = sphi 0, %s34
    %s38 = sphi 0, %s37
    %s54 = sphi 0, %s38
    %s60 = sphi 0, %s62
    %s63 = sphi 0, %s60
    %s64 = sphi 0, %s63
    %s80 = sphi 0, %s64
    %s86 = sphi 0, %s88
    %s89 = sphi 0, %s86
    %s90 = sphi 0, %s89
    %s106 = sphi 0, %s90
    %s112 = sphi 0, %s114
    %s115 = sphi 0, %s112
    %s116 = sphi 0, %s115
    %s132 = sphi 0, %s116
    %s140 = sphi 0, %s142
    %s143 = sphi 0, %s140
    %s144 = sphi 0, %s143
    %s160 = sphi 0, %s144
  $region4: #{_lambda_.43} parent=0 // loop_header_branch
    %13 = sbr.rel (%p11) target = $region8
  $region5: #{_lambda_.43} parent=0 // loop_body
    %s15 = ssub.s32 %s10, 1
    %s16 = ssub.s32 %s10, 2
    %s23 = sadd.s32 1, %s18
    %p24 = scmp.ge.s32.totalorder %s23, 1
    %s25 = scalar_select %p24, 0, %s23
    %s26 = sadd.s32 1, %s17
    %s27 = scalar_select %p24, %s26, %s17
    %p28 = scmp.ge.s32.totalorder %s27, 2
    %s29 = scalar_select %p28, 0, %s27
    %s30 = ssub.s32 %s17, %s29
    %s31 = ssub.s32 %s18, %s25
    %s32 = sor.u32 %s30, %s31
    %p33 = scmp.eq.s32.totalorder %s32, 0
    %s35 = sadd.s32 %s34, 1
    %s36 = scalar_select %p33, %s34, %s35
    %p39 = pneg %p33
    %p40 = scmp.eq.s32.totalorder %s10, 1
    %p41 = por %p39, %p40
    %p42 = scmp.ne.s32.totalorder %s34, %s37
    %p43 = scmp.eq.s32.totalorder %s10, 0
    %p44 = por %p42, %p43
    %p45 = scmp.ne.s32.totalorder %s34, %s37
    %p46 = scmp.eq.s32.totalorder %s15, 1
    %p47 = por %p45, %p46
    %p48 = scmp.ne.s32.totalorder %s37, %s38
    %p49 = scmp.eq.s32.totalorder %s15, 0
    %p50 = por %p48, %p49
    %p51 = scmp.ne.s32.totalorder %s37, %s38
    %p52 = scmp.eq.s32.totalorder %s16, 1
    %p53 = por %p51, %p52
    %p55 = scmp.ne.s32.totalorder %s38, %s54
    %p56 = scmp.eq.s32.totalorder %s16, 0
    %p57 = por %p55, %p56
    %s58 = ssub.s32 %s17, %s29
    %p59 = scmp.eq.s32.totalorder %s58, 0
    %s61 = sadd.s32 %s60, 1
    %s62 = scalar_select %p59, %s60, %s61
    %p65 = pneg %p59
    %p66 = scmp.eq.s32.totalorder %s10, 1
    %p67 = por %p65, %p66
    %p68 = scmp.ne.s32.totalorder %s60, %s63
    %p69 = scmp.eq.s32.totalorder %s10, 0
    %p70 = por %p68, %p69
    %p71 = scmp.ne.s32.totalorder %s60, %s63
    %p72 = scmp.eq.s32.totalorder %s15, 1
    %p73 = por %p71, %p72
    %p74 = scmp.ne.s32.totalorder %s63, %s64
    %p75 = scmp.eq.s32.totalorder %s15, 0
    %p76 = por %p74, %p75
    %p77 = scmp.ne.s32.totalorder %s63, %s64
    %p78 = scmp.eq.s32.totalorder %s16, 1
    %p79 = por %p77, %p78
    %p81 = scmp.ne.s32.totalorder %s64, %s80
    %p82 = scmp.eq.s32.totalorder %s16, 0
    %p83 = por %p81, %p82
    %s84 = ssub.s32 %s17, %s29
    %p85 = scmp.eq.s32.totalorder %s84, 0
    %s87 = sadd.s32 %s86, 1
    %s88 = scalar_select %p85, %s86, %s87
    %p91 = pneg %p85
    %p92 = scmp.eq.s32.totalorder %s10, 1
    %p93 = por %p91, %p92
    %p94 = scmp.ne.s32.totalorder %s86, %s89
    %p95 = scmp.eq.s32.totalorder %s10, 0
    %p96 = por %p94, %p95
    %p97 = scmp.ne.s32.totalorder %s86, %s89
    %p98 = scmp.eq.s32.totalorder %s15, 1
    %p99 = por %p97, %p98
    %p100 = scmp.ne.s32.totalorder %s89, %s90
    %p101 = scmp.eq.s32.totalorder %s15, 0
    %p102 = por %p100, %p101
    %p103 = scmp.ne.s32.totalorder %s89, %s90
    %p104 = scmp.eq.s32.totalorder %s16, 1
    %p105 = por %p103, %p104
    %p107 = scmp.ne.s32.totalorder %s90, %s106
    %p108 = scmp.eq.s32.totalorder %s16, 0
    %p109 = por %p107, %p108
    %s110 = ssub.s32 %s17, %s29
    %p111 = scmp.eq.s32.totalorder %s110, 0
    %s113 = sadd.s32 %s112, 1
    %s114 = scalar_select %p111, %s112, %s113
    %p117 = pneg %p111
    %p118 = scmp.eq.s32.totalorder %s10, 1
    %p119 = por %p117, %p118
    %p120 = scmp.ne.s32.totalorder %s112, %s115
    %p121 = scmp.eq.s32.totalorder %s10, 0
    %p122 = por %p120, %p121
    %p123 = scmp.ne.s32.totalorder %s112, %s115
    %p124 = scmp.eq.s32.totalorder %s15, 1
    %p125 = por %p123, %p124
    %p126 = scmp.ne.s32.totalorder %s115, %s116
    %p127 = scmp.eq.s32.totalorder %s15, 0
    %p128 = por %p126, %p127
    %p129 = scmp.ne.s32.totalorder %s115, %s116
    %p130 = scmp.eq.s32.totalorder %s16, 1
    %p131 = por %p129, %p130
    %p133 = scmp.ne.s32.totalorder %s116, %s132
    %p134 = scmp.eq.s32.totalorder %s16, 0
    %p135 = por %p133, %p134
    %s136 = ssub.s32 %s17, %s29
    %s137 = ssub.s32 %s18, %s25
    %s138 = sor.u32 %s136, %s137
    %p139 = scmp.eq.s32.totalorder %s138, 0
    %s141 = sadd.s32 %s140, 1
    %s142 = scalar_select %p139, %s140, %s141
    %p145 = pneg %p139
    %p146 = scmp.eq.s32.totalorder %s10, 1
    %p147 = por %p145, %p146
    %p148 = scmp.ne.s32.totalorder %s140, %s143
    %p149 = scmp.eq.s32.totalorder %s10, 0
    %p150 = por %p148, %p149
    %p151 = scmp.ne.s32.totalorder %s140, %s143
    %p152 = scmp.eq.s32.totalorder %s15, 1
    %p153 = por %p151, %p152
    %p154 = scmp.ne.s32.totalorder %s143, %s144
    %p155 = scmp.eq.s32.totalorder %s15, 0
    %p156 = por %p154, %p155
    %p157 = scmp.ne.s32.totalorder %s143, %s144
    %p158 = scmp.eq.s32.totalorder %s16, 1
    %p159 = por %p157, %p158
    %p161 = scmp.ne.s32.totalorder %s144, %s160
    %p162 = scmp.eq.s32.totalorder %s16, 0
    %p163 = por %p161, %p162
    %p164 = scmp.le.s32.totalorder 1, %s10
    %p165 = scmp.lt.s32.totalorder %s10, 3
    %p166 = pnand %p164, %p165
    %p167 = pneg %p166
    // Predicated region
    $region9: #{_lambda_.43} parent=5 // pred_check
      _
    $region10: #{_lambda_.43} parent=5 // pred_check_branch
      %169 = sbr.rel (%p166) target = $region12
    $region11: #{_lambda_.43} parent=5 // pred_region
      %s170 = ssub.s32 %s10, 1
    $region12: #{_lambda_.43} parent=5 // pred_fallthru
      _
    %p171 = scmp.lt.s32.totalorder %s10, 2
    // Predicated region
    $region13: #{_lambda_.43} parent=5 // pred_check
      %p172 = pneg %p171
    $region14: #{_lambda_.43} parent=5 // pred_check_branch
      %174 = sbr.rel (%p172) target = $region16
    $region15: #{_lambda_.43} parent=5 // pred_region
      // Predicated region
      $region17: #{_lambda_.43} parent=15 // pred_check
        %p175 = pneg %p44
      $region18: #{_lambda_.43} parent=15 // pred_check_branch
        %177 = sbr.rel (%p175) target = $region20
      $region19: #{_lambda_.43} parent=15 // pred_region
        %p178 = scmp.lt.s32.totalorder %s17, 1
        %s179 = scalar_select %p178, %s17, 1
        %p180 = scmp.lt.s32.totalorder %s18, 0
        %s181 = scalar_select %p180, %s18, 0
        %s182 = sadd.s32 %s181, %s179
        %s183 = smul.addr %s182, 4
        %s184 = scalar_lea.vmem %s0, %s183
      $region20: #{_lambda_.43} parent=15 // pred_fallthru
        _
      // Predicated region
      $region21: #{_lambda_.43} parent=15 // pred_check
        %p185 = pneg %p70
      $region22: #{_lambda_.43} parent=15 // pred_check_branch
        %187 = sbr.rel (%p185) target = $region24
      $region23: #{_lambda_.43} parent=15 // pred_region
        %p188 = scmp.lt.s32.totalorder %s17, 1
        %s189 = scalar_select %p188, %s17, 1
        %s190 = smul.addr %s189, 4
        %s191 = scalar_lea.vmem %s1, %s190
      $region24: #{_lambda_.43} parent=15 // pred_fallthru
        _
      // Predicated region
      $region25: #{_lambda_.43} parent=15 // pred_check
        %p192 = pneg %p96
      $region26: #{_lambda_.43} parent=15 // pred_check_branch
        %194 = sbr.rel (%p192) target = $region28
      $region27: #{_lambda_.43} parent=15 // pred_region
        %p195 = scmp.lt.s32.totalorder %s17, 1
        %s196 = scalar_select %p195, %s17, 1
        %s197 = smul.addr %s196, 4
        %s198 = scalar_lea.vmem %s2, %s197
      $region28: #{_lambda_.43} parent=15 // pred_fallthru
        _
      // Predicated region
      $region29: #{_lambda_.43} parent=15 // pred_check
        %p199 = pneg %p122
      $region30: #{_lambda_.43} parent=15 // pred_check_branch
        %201 = sbr.rel (%p199) target = $region32
      $region31: #{_lambda_.43} parent=15 // pred_region
        %p202 = scmp.lt.s32.totalorder %s17, 1
        %s203 = scalar_select %p202, %s17, 1
        %s204 = scalar_lea.vmem %s3, %s203
      $region32: #{_lambda_.43} parent=15 // pred_fallthru
        _
    $region16: #{_lambda_.43} parent=5 // pred_fallthru
      _
    %p205 = scmp.le.s32.totalorder 1, %s10
    %p206 = scmp.lt.s32.totalorder %s10, 3
    %p207 = pnand %p205, %p206
    %p208 = pneg %p207
    // Predicated region
    $region33: #{_lambda_.43} parent=5 // pred_check
      _
    $region34: #{_lambda_.43} parent=5 // pred_check_branch
      %210 = sbr.rel (%p207) target = $region36
    $region35: #{_lambda_.43} parent=5 // pred_region
      %s211 = ssub.s32 %s10, 1
      %p212 = scmp.lt.s32.totalorder %s19, 1
      %s213 = scalar_select %p212, %s19, 1
      %p214 = scmp.lt.s32.totalorder %s20, 0
      %s215 = scalar_select %p214, %s20, 0
      %s216 = sadd.s32 %s215, %s213
      %s217 = smul.addr %s216, 4
      %s218 = scalar_lea.vmem %s0, %s217
      %p219 = pneg %p50
      %p220 = pneg %p47
      %p221 = scmp.lt.s32.totalorder %s19, 1
      %s222 = scalar_select %p221, %s19, 1
      %s223 = smul.addr %s222, 4
      %s224 = scalar_lea.vmem %s1, %s223
      %p225 = pneg %p76
      %p226 = pneg %p73
      %p227 = scmp.lt.s32.totalorder %s19, 1
      %s228 = scalar_select %p227, %s19, 1
      %s229 = smul.addr %s228, 4
      %s230 = scalar_lea.vmem %s2, %s229
      %p231 = pneg %p102
      %p232 = pneg %p99
      %p233 = scmp.lt.s32.totalorder %s19, 1
      %s234 = scalar_select %p233, %s19, 1
      %s235 = scalar_lea.vmem %s3, %s234
      %p236 = pneg %p128
      %p237 = pneg %p125
      %p238 = pneg %p156
      %p239 = pneg %p153
      %p240 = scmp.lt.s32.totalorder %s19, 1
      %s241 = scalar_select %p240, %s19, 1
      %p242 = scmp.lt.s32.totalorder %s20, 0
      %s243 = scalar_select %p242, %s20, 0
      %s244 = sadd.s32 %s243, %s241
      %s245 = smul.addr %s244, 4
      %s246 = scalar_lea.vmem %s4, %s245
      %p247 = scmp.lt.s32.totalorder %s19, 1
      %s248 = scalar_select %p247, %s19, 1
      %p249 = scmp.lt.s32.totalorder %s20, 0
      %s250 = scalar_select %p249, %s20, 0
      %s251 = sadd.s32 %s250, %s248
      %s252 = smul.addr %s251, 4
      %s253 = scalar_lea.vmem %s0, %s252
      %p254 = scmp.lt.s32.totalorder %s19, 1
      %s255 = scalar_select %p254, %s19, 1
      %s256 = smul.addr %s255, 4
      %s257 = scalar_lea.vmem %s1, %s256
      %p258 = scmp.lt.s32.totalorder %s19, 1
      %s259 = scalar_select %p258, %s19, 1
      %s260 = smul.addr %s259, 4
      %s261 = scalar_lea.vmem %s2, %s260
      %p262 = scmp.lt.s32.totalorder %s19, 1
      %s263 = scalar_select %p262, %s19, 1
      %s264 = scalar_lea.vmem %s3, %s263
      %p265 = scmp.lt.s32.totalorder %s19, 1
      %s266 = scalar_select %p265, %s19, 1
      %p267 = scmp.lt.s32.totalorder %s20, 0
      %s268 = scalar_select %p267, %s20, 0
      %s269 = sadd.s32 %s268, %s266
      %s270 = smul.addr %s269, 4
      %s271 = scalar_lea.vmem %s4, %s270
      %v273 = vld [vmem:[%s264] sm:$0x1]
      %v274 = vsub.f32 1.0, %v273
      %v275 = vmul.f32 %v274, -1e+09
      %s276 = smul.u32 %s20, 8
      %v277 = vlaneseq
      %v278 = vshrl.u32 %v277, 7
      %v279 = vstv %s276
      %v280 = vadd.s32 %v278, %v279
      %v281 = vlaneseq
      %v282 = vand.u32 %v281, 127
      %vm283 = vcmp.gt.s32.totalorder %v282, %v280
      %v284 = vsel %vm283, -1e+09, 0.0
      %v286 = vlaneseq
      %v287 = vshrl.u32 %v286, 7
      %v288 = vsub.s32 0, %v287
      %v289 = vrot.slane %v275, %v288
      %v291 = vadd.f32 %v289, %v284
      %v292 = vld [vmem:[%s253] sm:$0xf]
      %v293 = vld [vmem:[%s257] sm:$0xf]
      %v294 = vld [vmem:[%s261] sm:$0xf]
      %v296 = vunpack.c.l.b16 %v293
      %v297 = vpack.c.b16 %v296, %v296
      %298 = vrot.lane.b32.xlu0 %v297, 96
      %v299 = vpop.permute.xlu0 %298
      %vm300 = vcmask 64512
      %v302 = vsel %vm300, %v292, 0
      %v305 = vsel %vm300, %v299, 0
      %307 = vmatprep.subr.bf16.mxu0 0
      %308 = vmatpush1.bf16.xpose.msra.mxu0 0
      %309 = vmatprep.subr.bf16.mxu0 0
      %310 = vmatpush1.bf16.xpose.msra.mxu0 0
      %311 = vmatprep.subr.bf16.mxu0 0
      %312 = vmatpush1.bf16.xpose.msra.mxu0 0
      %313 = vmatprep.subr.bf16.mxu0 0
      %314 = vmatpush1.bf16.xpose.msra.mxu0 0
      %315 = vmatprep.subr.bf16.mxu0 0
      %316 = vmatpush1.bf16.xpose.msra.mxu0 0
      %317 = vmatprep.subr.bf16.mxu0 0
      %318 = vmatpush1.bf16.xpose.msra.mxu0 0
      %319 = vmatprep.subr.bf16.mxu0 0
      %320 = vmatpush1.bf16.xpose.msra.mxu0 0
      %321 = vmatprep.subr.bf16.mxu0 0
      %322 = vmatpush1.bf16.xpose.msra.mxu0 %v305
      %323 = vmatprep.subr.bf16.mxu0 0
      %324 = vmatpush2.bf16.xpose.msra.mxu0 0
      %325 = vmatprep.subr.bf16.mxu0 0
      %326 = vmatpush2.bf16.xpose.msra.mxu0 0
      %327 = vmatprep.subr.bf16.mxu0 0
      %328 = vmatpush2.bf16.xpose.msra.mxu0 0
      %329 = vmatprep.subr.bf16.mxu0 0
      %330 = vmatpush2.bf16.xpose.msra.mxu0 0
      %331 = vmatprep.subr.bf16.mxu0 0
      %332 = vmatpush2.bf16.xpose.msra.mxu0 0
      %333 = vmatprep.subr.bf16.mxu0 0
      %334 = vmatpush2.bf16.xpose.msra.mxu0 0
      %335 = vmatprep.subr.bf16.mxu0 0
      %336 = vmatpush2.bf16.xpose.msra.mxu0 0
      %337 = vmatprep.subr.bf16.mxu0 0
      %338 = vmatpush2.bf16.xpose.msra.mxu0 0
      %339 = vmatprep.mubr.bf16.mxu0 0
      %340 = vmatmul.mubr.bf16.gmra.mxu0 %v302
      %v341 = vpop.f32.mrf.mxu0
      %v342 = vadd.f32 0.0, %v341
      %v343 = vpop.f32.mrf.mxu0
      %v344 = vpop.f32.mrf.mxu0
      %v345 = vpop.f32.mrf.mxu0
      %346 = vdwg.mxu0
      %v347 = vmul.f32 %v342, 0.35355338
      %v348 = vadd.f32 %v347, %v291
      %v349 = vsel %vm300, %v348, -inf
      %350 = vmax.xlane.f32.xlu0 %v349
      %v351 = vpop.xlane.xlu0 %350
      %v352 = vsub.f32 %v348, %v351
      %v353 = vmul.f32 %v352, 1.442695
      %v354 = vpow.pop %v353
      %v355 = vsel %vm300, %v354, 0.0
      %356 = vadd.xlane.f32.xlu0 %v355
      %v357 = vpop.xlane.xlu0 %356
      %v358 = vrcp.pop %v357
      %v359 = vmul.f32 %v354, %v358
      %v360 = vpack.c.bf16 %v359, %v359
      %v362 = vunpack.c.l.b16 %v294
      %v363 = vpack.c.b16 %v362, %v362
      %364 = vrot.lane.b32.xlu0 %v363, 64
      %v365 = vpop.permute.xlu0 %364
      %v367 = vsel %vm300, %v360, 0
      %vm369 = vcmask 1043456
      %v371 = vsel %vm369, %v365, 0
      %373 = vmatprep.subr.bf16.mxu0 0
      %374 = vmatpush1.bf16.msra.mxu0 0
      %375 = vmatprep.subr.bf16.mxu0 0
      %376 = vmatpush1.bf16.msra.mxu0 0
      %377 = vmatprep.subr.bf16.mxu0 0
      %378 = vmatpush1.bf16.msra.mxu0 0
      %379 = vmatprep.subr.bf16.mxu0 0
      %380 = vmatpush1.bf16.msra.mxu0 0
      %381 = vmatprep.subr.bf16.mxu0 0
      %382 = vmatpush1.bf16.msra.mxu0 0
      %383 = vmatprep.subr.bf16.mxu0 0
      %384 = vmatpush1.bf16.msra.mxu0 0
      %385 = vmatprep.subr.bf16.mxu0 0
      %386 = vmatpush1.bf16.msra.mxu0 0
      %387 = vmatprep.subr.bf16.mxu0 0
      %388 = vmatpush1.bf16.msra.mxu0 %v371
      %389 = vmatprep.subr.bf16.mxu0 0
      %390 = vmatpush2.bf16.msra.mxu0 0
      %391 = vmatprep.subr.bf16.mxu0 0
      %392 = vmatpush2.bf16.msra.mxu0 0
      %393 = vmatprep.subr.bf16.mxu0 0
      %394 = vmatpush2.bf16.msra.mxu0 0
      %395 = vmatprep.subr.bf16.mxu0 0
      %396 = vmatpush2.bf16.msra.mxu0 0
      %397 = vmatprep.subr.bf16.mxu0 0
      %398 = vmatpush2.bf16.msra.mxu0 0
      %399 = vmatprep.subr.bf16.mxu0 0
      %400 = vmatpush2.bf16.msra.mxu0 0
      %401 = vmatprep.subr.bf16.mxu0 0
      %402 = vmatpush2.bf16.msra.mxu0 0
      %403 = vmatprep.subr.bf16.mxu0 0
      %404 = vmatpush2.bf16.msra.mxu0 0
      %405 = vmatprep.mubr.bf16.mxu0 0
      %406 = vmatmul.mubr.bf16.gmra.mxu0 %v367
      %v407 = vpop.f32.mrf.mxu0
      %v408 = vadd.f32 0.0, %v407
      %v409 = vpop.f32.mrf.mxu0
      %v410 = vpop.f32.mrf.mxu0
      %v411 = vpop.f32.mrf.mxu0
      %412 = vdwg.mxu0
      %v413 = vpack.c.bf16 %v408, %v408
      %vm414 = vcmask 60416
      %415 = vst.msk [vmem:[%s271] sm:$0xf] %vm414, %v413
      %v416 = vld [vmem:[%s253] sm:$0xf]
      %v417 = vld [vmem:[%s257] sm:$0xf]
      %v418 = vld [vmem:[%s261] sm:$0xf]
      %v420 = vunpack.c.l.b16 %v416
      %v421 = vpack.c.b16 %v420, %v420
      %422 = vrot.lane.b32.xlu0 %v421, 120
      %v423 = vpop.permute.xlu0 %422
      %v425 = vunpack.c.l.b16 %v417
      %v426 = vpack.c.b16 %v425, %v425
      %427 = vrot.lane.b32.xlu0 %v426, 88
      %v428 = vpop.permute.xlu0 %427
      %v430 = vsel %vm300, %v423, 0
      %v433 = vsel %vm300, %v428, 0
      %435 = vmatprep.subr.bf16.mxu0 0
      %436 = vmatpush1.bf16.xpose.msra.mxu0 0
      %437 = vmatprep.subr.bf16.mxu0 0
      %438 = vmatpush1.bf16.xpose.msra.mxu0 0
      %439 = vmatprep.subr.bf16.mxu0 0
      %440 = vmatpush1.bf16.xpose.msra.mxu0 0
      %441 = vmatprep.subr.bf16.mxu0 0
      %442 = vmatpush1.bf16.xpose.msra.mxu0 0
      %443 = vmatprep.subr.bf16.mxu0 0
      %444 = vmatpush1.bf16.xpose.msra.mxu0 0
      %445 = vmatprep.subr.bf16.mxu0 0
      %446 = vmatpush1.bf16.xpose.msra.mxu0 0
      %447 = vmatprep.subr.bf16.mxu0 0
      %448 = vmatpush1.bf16.xpose.msra.mxu0 0
      %449 = vmatprep.subr.bf16.mxu0 0
      %450 = vmatpush1.bf16.xpose.msra.mxu0 %v433
      %451 = vmatprep.subr.bf16.mxu0 0
      %452 = vmatpush2.bf16.xpose.msra.mxu0 0
      %453 = vmatprep.subr.bf16.mxu0 0
      %454 = vmatpush2.bf16.xpose.msra.mxu0 0
      %455 = vmatprep.subr.bf16.mxu0 0
      %456 = vmatpush2.bf16.xpose.msra.mxu0 0
      %457 = vmatprep.subr.bf16.mxu0 0
      %458 = vmatpush2.bf16.xpose.msra.mxu0 0
      %459 = vmatprep.subr.bf16.mxu0 0
      %460 = vmatpush2.bf16.xpose.msra.mxu0 0
      %461 = vmatprep.subr.bf16.mxu0 0
      %462 = vmatpush2.bf16.xpose.msra.mxu0 0
      %463 = vmatprep.subr.bf16.mxu0 0
      %464 = vmatpush2.bf16.xpose.msra.mxu0 0
      %465 = vmatprep.subr.bf16.mxu0 0
      %466 = vmatpush2.bf16.xpose.msra.mxu0 0
      %467 = vmatprep.mubr.bf16.mxu0 0
      %468 = vmatmul.mubr.bf16.gmra.mxu0 %v430
      %v469 = vpop.f32.mrf.mxu0
      %v470 = vadd.f32 0.0, %v469
      %v471 = vpop.f32.mrf.mxu0
      %v472 = vpop.f32.mrf.mxu0
      %v473 = vpop.f32.mrf.mxu0
      %474 = vdwg.mxu0
      %v475 = vmul.f32 %v470, 0.35355338
      %v476 = vadd.f32 %v475, %v291
      %v477 = vsel %vm300, %v476, -inf
      %478 = vmax.xlane.f32.xlu0 %v477
      %v479 = vpop.xlane.xlu0 %478
      %v480 = vsub.f32 %v476, %v479
      %v481 = vmul.f32 %v480, 1.442695
      %v482 = vpow.pop %v481
      %v483 = vsel %vm300, %v482, 0.0
      %484 = vadd.xlane.f32.xlu0 %v483
      %v485 = vpop.xlane.xlu0 %484
      %v486 = vrcp.pop %v485
      %v487 = vmul.f32 %v482, %v486
      %v488 = vpack.c.bf16 %v487, %v487
      %v490 = vunpack.c.l.b16 %v418
      %v491 = vpack.c.b16 %v490, %v490
      %492 = vrot.lane.b32.xlu0 %v491, 56
      %v493 = vpop.permute.xlu0 %492
      %v495 = vsel %vm300, %v488, 0
      %v498 = vsel %vm369, %v493, 0
      %500 = vmatprep.subr.bf16.mxu0 0
      %501 = vmatpush1.bf16.msra.mxu0 0
      %502 = vmatprep.subr.bf16.mxu0 0
      %503 = vmatpush1.bf16.msra.mxu0 0
      %504 = vmatprep.subr.bf16.mxu0 0
      %505 = vmatpush1.bf16.msra.mxu0 0
      %506 = vmatprep.subr.bf16.mxu0 0
      %507 = vmatpush1.bf16.msra.mxu0 0
      %508 = vmatprep.subr.bf16.mxu0 0
      %509 = vmatpush1.bf16.msra.mxu0 0
      %510 = vmatprep.subr.bf16.mxu0 0
      %511 = vmatpush1.bf16.msra.mxu0 0
      %512 = vmatprep.subr.bf16.mxu0 0
      %513 = vmatpush1.bf16.msra.mxu0 0
      %514 = vmatprep.subr.bf16.mxu0 0
      %515 = vmatpush1.bf16.msra.mxu0 %v498
      %516 = vmatprep.subr.bf16.mxu0 0
      %517 = vmatpush2.bf16.msra.mxu0 0
      %518 = vmatprep.subr.bf16.mxu0 0
      %519 = vmatpush2.bf16.msra.mxu0 0
      %520 = vmatprep.subr.bf16.mxu0 0
      %521 = vmatpush2.bf16.msra.mxu0 0
      %522 = vmatprep.subr.bf16.mxu0 0
      %523 = vmatpush2.bf16.msra.mxu0 0
      %524 = vmatprep.subr.bf16.mxu0 0
      %525 = vmatpush2.bf16.msra.mxu0 0
      %526 = vmatprep.subr.bf16.mxu0 0
      %527 = vmatpush2.bf16.msra.mxu0 0
      %528 = vmatprep.subr.bf16.mxu0 0
      %529 = vmatpush2.bf16.msra.mxu0 0
      %530 = vmatprep.subr.bf16.mxu0 0
      %531 = vmatpush2.bf16.msra.mxu0 0
      %532 = vmatprep.mubr.bf16.mxu0 0
      %533 = vmatmul.mubr.bf16.gmra.mxu0 %v495
      %v534 = vpop.f32.mrf.mxu0
      %v535 = vadd.f32 0.0, %v534
      %v536 = vpop.f32.mrf.mxu0
      %v537 = vpop.f32.mrf.mxu0
      %v538 = vpop.f32.mrf.mxu0
      %539 = vdwg.mxu0
      %v540 = vpack.c.bf16 %v535, %v535
      %v542 = vunpack.c.l.b16 %v540
      %v543 = vpack.c.b16 %v542, %v542
      %544 = vrot.lane.b32.xlu0 %v543, 8
      %v545 = vpop.permute.xlu0 %544
      %vm547 = vcmask 126016
      %548 = vst.msk [vmem:[%s271] sm:$0xf] %vm547, %v545
      %v549 = vld [vmem:[%s253] sm:$0xf]
      %v550 = vld [vmem:[%s257] sm:$0xf]
      %v551 = vld [vmem:[%s261] sm:$0xf]
      %v553 = vunpack.c.l.b16 %v549
      %v554 = vpack.c.b16 %v553, %v553
      %555 = vrot.lane.b32.xlu0 %v554, 112
      %v556 = vpop.permute.xlu0 %555
      %v558 = vunpack.c.l.b16 %v550
      %v559 = vpack.c.b16 %v558, %v558
      %560 = vrot.lane.b32.xlu0 %v559, 80
      %v561 = vpop.permute.xlu0 %560
      %v563 = vsel %vm300, %v556, 0
      %v566 = vsel %vm300, %v561, 0
      %568 = vmatprep.subr.bf16.mxu0 0
      %569 = vmatpush1.bf16.xpose.msra.mxu0 0
      %570 = vmatprep.subr.bf16.mxu0 0
      %571 = vmatpush1.bf16.xpose.msra.mxu0 0
      %572 = vmatprep.subr.bf16.mxu0 0
      %573 = vmatpush1.bf16.xpose.msra.mxu0 0
      %574 = vmatprep.subr.bf16.mxu0 0
      %575 = vmatpush1.bf16.xpose.msra.mxu0 0
      %576 = vmatprep.subr.bf16.mxu0 0
      %577 = vmatpush1.bf16.xpose.msra.mxu0 0
      %578 = vmatprep.subr.bf16.mxu0 0
      %579 = vmatpush1.bf16.xpose.msra.mxu0 0
      %580 = vmatprep.subr.bf16.mxu0 0
      %581 = vmatpush1.bf16.xpose.msra.mxu0 0
      %582 = vmatprep.subr.bf16.mxu0 0
      %583 = vmatpush1.bf16.xpose.msra.mxu0 %v566
      %584 = vmatprep.subr.bf16.mxu0 0
      %585 = vmatpush2.bf16.xpose.msra.mxu0 0
      %586 = vmatprep.subr.bf16.mxu0 0
      %587 = vmatpush2.bf16.xpose.msra.mxu0 0
      %588 = vmatprep.subr.bf16.mxu0 0
      %589 = vmatpush2.bf16.xpose.msra.mxu0 0
      %590 = vmatprep.subr.bf16.mxu0 0
      %591 = vmatpush2.bf16.xpose.msra.mxu0 0
      %592 = vmatprep.subr.bf16.mxu0 0
      %593 = vmatpush2.bf16.xpose.msra.mxu0 0
      %594 = vmatprep.subr.bf16.mxu0 0
      %595 = vmatpush2.bf16.xpose.msra.mxu0 0
      %596 = vmatprep.subr.bf16.mxu0 0
      %597 = vmatpush2.bf16.xpose.msra.mxu0 0
      %598 = vmatprep.subr.bf16.mxu0 0
      %599 = vmatpush2.bf16.xpose.msra.mxu0 0
      %600 = vmatprep.mubr.bf16.mxu0 0
      %601 = vmatmul.mubr.bf16.gmra.mxu0 %v563
      %v602 = vpop.f32.mrf.mxu0
      %v603 = vadd.f32 0.0, %v602
      %v604 = vpop.f32.mrf.mxu0
      %v605 = vpop.f32.mrf.mxu0
      %v606 = vpop.f32.mrf.mxu0
      %607 = vdwg.mxu0
      %v608 = vmul.f32 %v603, 0.35355338
      %v609 = vadd.f32 %v608, %v291
      %v610 = vsel %vm300, %v609, -inf
      %611 = vmax.xlane.f32.xlu0 %v610
      %v612 = vpop.xlane.xlu0 %611
      %v613 = vsub.f32 %v609, %v612
      %v614 = vmul.f32 %v613, 1.442695
      %v615 = vpow.pop %v614
      %v616 = vsel %vm300, %v615, 0.0
      %617 = vadd.xlane.f32.xlu0 %v616
      %v618 = vpop.xlane.xlu0 %617
      %v619 = vrcp.pop %v618
      %v620 = vmul.f32 %v615, %v619
      %v621 = vpack.c.bf16 %v620, %v620
      %v623 = vunpack.c.l.b16 %v551
      %v624 = vpack.c.b16 %v623, %v623
      %625 = vrot.lane.b32.xlu0 %v624, 48
      %v626 = vpop.permute.xlu0 %625
      %v628 = vsel %vm300, %v621, 0
      %v631 = vsel %vm369, %v626, 0
      %633 = vmatprep.subr.bf16.mxu0 0
      %634 = vmatpush1.bf16.msra.mxu0 0
      %635 = vmatprep.subr.bf16.mxu0 0
      %636 = vmatpush1.bf16.msra.mxu0 0
      %637 = vmatprep.subr.bf16.mxu0 0
      %638 = vmatpush1.bf16.msra.mxu0 0
      %639 = vmatprep.subr.bf16.mxu0 0
      %640 = vmatpush1.bf16.msra.mxu0 0
      %641 = vmatprep.subr.bf16.mxu0 0
      %642 = vmatpush1.bf16.msra.mxu0 0
      %643 = vmatprep.subr.bf16.mxu0 0
      %644 = vmatpush1.bf16.msra.mxu0 0
      %645 = vmatprep.subr.bf16.mxu0 0
      %646 = vmatpush1.bf16.msra.mxu0 0
      %647 = vmatprep.subr.bf16.mxu0 0
      %648 = vmatpush1.bf16.msra.mxu0 %v631
      %649 = vmatprep.subr.bf16.mxu0 0
      %650 = vmatpush2.bf16.msra.mxu0 0
      %651 = vmatprep.subr.bf16.mxu0 0
      %652 = vmatpush2.bf16.msra.mxu0 0
      %653 = vmatprep.subr.bf16.mxu0 0
      %654 = vmatpush2.bf16.msra.mxu0 0
      %655 = vmatprep.subr.bf16.mxu0 0
      %656 = vmatpush2.bf16.msra.mxu0 0
      %657 = vmatprep.subr.bf16.mxu0 0
      %658 = vmatpush2.bf16.msra.mxu0 0
      %659 = vmatprep.subr.bf16.mxu0 0
      %660 = vmatpush2.bf16.msra.mxu0 0
      %661 = vmatprep.subr.bf16.mxu0 0
      %662 = vmatpush2.bf16.msra.mxu0 0
      %663 = vmatprep.subr.bf16.mxu0 0
      %664 = vmatpush2.bf16.msra.mxu0 0
      %665 = vmatprep.mubr.bf16.mxu0 0
      %666 = vmatmul.mubr.bf16.gmra.mxu0 %v628
      %v667 = vpop.f32.mrf.mxu0
      %v668 = vadd.f32 0.0, %v667
      %v669 = vpop.f32.mrf.mxu0
      %v670 = vpop.f32.mrf.mxu0
      %v671 = vpop.f32.mrf.mxu0
      %672 = vdwg.mxu0
      %v673 = vpack.c.bf16 %v668, %v668
      %v675 = vunpack.c.l.b16 %v673
      %v676 = vpack.c.b16 %v675, %v675
      %677 = vrot.lane.b32.xlu0 %v676, 16
      %v678 = vpop.permute.xlu0 %677
      %vm680 = vcmask 191616
      %681 = vst.msk [vmem:[%s271] sm:$0xf] %vm680, %v678
      %v682 = vld [vmem:[%s253] sm:$0xf]
      %v683 = vld [vmem:[%s257] sm:$0xf]
      %v684 = vld [vmem:[%s261] sm:$0xf]
      %v686 = vunpack.c.l.b16 %v682
      %v687 = vpack.c.b16 %v686, %v686
      %688 = vrot.lane.b32.xlu0 %v687, 104
      %v689 = vpop.permute.xlu0 %688
      %v691 = vunpack.c.l.b16 %v683
      %v692 = vpack.c.b16 %v691, %v691
      %693 = vrot.lane.b32.xlu0 %v692, 72
      %v694 = vpop.permute.xlu0 %693
      %v696 = vsel %vm300, %v689, 0
      %v699 = vsel %vm300, %v694, 0
      %701 = vmatprep.subr.bf16.mxu0 0
      %702 = vmatpush1.bf16.xpose.msra.mxu0 0
      %703 = vmatprep.subr.bf16.mxu0 0
      %704 = vmatpush1.bf16.xpose.msra.mxu0 0
      %705 = vmatprep.subr.bf16.mxu0 0
      %706 = vmatpush1.bf16.xpose.msra.mxu0 0
      %707 = vmatprep.subr.bf16.mxu0 0
      %708 = vmatpush1.bf16.xpose.msra.mxu0 0
      %709 = vmatprep.subr.bf16.mxu0 0
      %710 = vmatpush1.bf16.xpose.msra.mxu0 0
      %711 = vmatprep.subr.bf16.mxu0 0
      %712 = vmatpush1.bf16.xpose.msra.mxu0 0
      %713 = vmatprep.subr.bf16.mxu0 0
      %714 = vmatpush1.bf16.xpose.msra.mxu0 0
      %715 = vmatprep.subr.bf16.mxu0 0
      %716 = vmatpush1.bf16.xpose.msra.mxu0 %v699
      %717 = vmatprep.subr.bf16.mxu0 0
      %718 = vmatpush2.bf16.xpose.msra.mxu0 0
      %719 = vmatprep.subr.bf16.mxu0 0
      %720 = vmatpush2.bf16.xpose.msra.mxu0 0
      %721 = vmatprep.subr.bf16.mxu0 0
      %722 = vmatpush2.bf16.xpose.msra.mxu0 0
      %723 = vmatprep.subr.bf16.mxu0 0
      %724 = vmatpush2.bf16.xpose.msra.mxu0 0
      %725 = vmatprep.subr.bf16.mxu0 0
      %726 = vmatpush2.bf16.xpose.msra.mxu0 0
      %727 = vmatprep.subr.bf16.mxu0 0
      %728 = vmatpush2.bf16.xpose.msra.mxu0 0
      %729 = vmatprep.subr.bf16.mxu0 0
      %730 = vmatpush2.bf16.xpose.msra.mxu0 0
      %731 = vmatprep.subr.bf16.mxu0 0
      %732 = vmatpush2.bf16.xpose.msra.mxu0 0
      %733 = vmatprep.mubr.bf16.mxu0 0
      %734 = vmatmul.mubr.bf16.gmra.mxu0 %v696
      %v735 = vpop.f32.mrf.mxu0
      %v736 = vadd.f32 0.0, %v735
      %v737 = vpop.f32.mrf.mxu0
      %v738 = vpop.f32.mrf.mxu0
      %v739 = vpop.f32.mrf.mxu0
      %740 = vdwg.mxu0
      %v741 = vmul.f32 %v736, 0.35355338
      %v742 = vadd.f32 %v741, %v291
      %v743 = vsel %vm300, %v742, -inf
      %744 = vmax.xlane.f32.xlu0 %v743
      %v745 = vpop.xlane.xlu0 %744
      %v746 = vsub.f32 %v742, %v745
      %v747 = vmul.f32 %v746, 1.442695
      %v748 = vpow.pop %v747
      %v749 = vsel %vm300, %v748, 0.0
      %750 = vadd.xlane.f32.xlu0 %v749
      %v751 = vpop.xlane.xlu0 %750
      %v752 = vrcp.pop %v751
      %v753 = vmul.f32 %v748, %v752
      %v754 = vpack.c.bf16 %v753, %v753
      %v756 = vunpack.c.l.b16 %v684
      %v757 = vpack.c.b16 %v756, %v756
      %758 = vrot.lane.b32.xlu0 %v757, 40
      %v759 = vpop.permute.xlu0 %758
      %v761 = vsel %vm300, %v754, 0
      %v764 = vsel %vm369, %v759, 0
      %766 = vmatprep.subr.bf16.mxu0 0
      %767 = vmatpush1.bf16.msra.mxu0 0
      %768 = vmatprep.subr.bf16.mxu0 0
      %769 = vmatpush1.bf16.msra.mxu0 0
      %770 = vmatprep.subr.bf16.mxu0 0
      %771 = vmatpush1.bf16.msra.mxu0 0
      %772 = vmatprep.subr.bf16.mxu0 0
      %773 = vmatpush1.bf16.msra.mxu0 0
      %774 = vmatprep.subr.bf16.mxu0 0
      %775 = vmatpush1.bf16.msra.mxu0 0
      %776 = vmatprep.subr.bf16.mxu0 0
      %777 = vmatpush1.bf16.msra.mxu0 0
      %778 = vmatprep.subr.bf16.mxu0 0
      %779 = vmatpush1.bf16.msra.mxu0 0
      %780 = vmatprep.subr.bf16.mxu0 0
      %781 = vmatpush1.bf16.msra.mxu0 %v764
      %782 = vmatprep.subr.bf16.mxu0 0
      %783 = vmatpush2.bf16.msra.mxu0 0
      %784 = vmatprep.subr.bf16.mxu0 0
      %785 = vmatpush2.bf16.msra.mxu0 0
      %786 = vmatprep.subr.bf16.mxu0 0
      %787 = vmatpush2.bf16.msra.mxu0 0
      %788 = vmatprep.subr.bf16.mxu0 0
      %789 = vmatpush2.bf16.msra.mxu0 0
      %790 = vmatprep.subr.bf16.mxu0 0
      %791 = vmatpush2.bf16.msra.mxu0 0
      %792 = vmatprep.subr.bf16.mxu0 0
      %793 = vmatpush2.bf16.msra.mxu0 0
      %794 = vmatprep.subr.bf16.mxu0 0
      %795 = vmatpush2.bf16.msra.mxu0 0
      %796 = vmatprep.subr.bf16.mxu0 0
      %797 = vmatpush2.bf16.msra.mxu0 0
      %798 = vmatprep.mubr.bf16.mxu0 0
      %799 = vmatmul.mubr.bf16.gmra.mxu0 %v761
      %v800 = vpop.f32.mrf.mxu0
      %v801 = vadd.f32 0.0, %v800
      %v802 = vpop.f32.mrf.mxu0
      %v803 = vpop.f32.mrf.mxu0
      %v804 = vpop.f32.mrf.mxu0
      %805 = vdwg.mxu0
      %v806 = vpack.c.bf16 %v801, %v801
      %v808 = vunpack.c.l.b16 %v806
      %v809 = vpack.c.b16 %v808, %v808
      %810 = vrot.lane.b32.xlu0 %v809, 24
      %v811 = vpop.permute.xlu0 %810
      %vm813 = vcmask 257216
      %814 = vst.msk [vmem:[%s271] sm:$0xf] %vm813, %v811
      %p815 = scmp.lt.s32.totalorder %s19, 1
      %s816 = scalar_select %p815, %s19, 1
      %p817 = scmp.lt.s32.totalorder %s20, 0
      %s818 = scalar_select %p817, %s20, 0
      %s819 = sadd.s32 %s818, %s816
      %s820 = smul.addr %s819, 4
      %s821 = scalar_lea.vmem %s4, %s820
      // Predicated region
      $region37: #{_lambda_.43} parent=35 // pred_check
        %p822 = pneg %p153
      $region38: #{_lambda_.43} parent=35 // pred_check_branch
        %824 = sbr.rel (%p822) target = $region40
      $region39: #{_lambda_.43} parent=35 // pred_region
        _
      $region40: #{_lambda_.43} parent=35 // pred_fallthru
        _
    $region36: #{_lambda_.43} parent=5 // pred_fallthru
      _
    %p825 = scmp.le.s32.totalorder 2, %s10
    // Predicated region
    $region41: #{_lambda_.43} parent=5 // pred_check
      %p826 = pneg %p825
    $region42: #{_lambda_.43} parent=5 // pred_check_branch
      %828 = sbr.rel (%p826) target = $region44
    $region43: #{_lambda_.43} parent=5 // pred_region
      %s829 = ssub.s32 %s10, 2
      // Predicated region
      $region45: #{_lambda_.43} parent=43 // pred_check
        %p830 = pneg %p159
      $region46: #{_lambda_.43} parent=43 // pred_check_branch
        %832 = sbr.rel (%p830) target = $region48
      $region47: #{_lambda_.43} parent=43 // pred_region
        %p833 = scmp.lt.s32.totalorder %s21, 1
        %s834 = scalar_select %p833, %s21, 1
        %p835 = scmp.lt.s32.totalorder %s22, 0
        %s836 = scalar_select %p835, %s22, 0
        %s837 = sadd.s32 %s836, %s834
        %s838 = smul.addr %s837, 4
        %s839 = scalar_lea.vmem %s4, %s838
      $region48: #{_lambda_.43} parent=43 // pred_fallthru
        _
    $region44: #{_lambda_.43} parent=5 // pred_fallthru
      _
  $region6: #{_lambda_.43} parent=0 // loop_footer
    %s14 = sadd.s32 1, %s10
  $region7: #{_lambda_.43} parent=0 // loop_footer_branch
    %9 = sbr.rel target = $region3
  $region8: #{_lambda_.43} parent=0 // loop_exit
    _

// kernel: _lambda_.45
$region0: #{_lambda_.45}
  #allocation0 [shape = 'u32[]', space=smem, size = 0x4, offset = 0x4, fixed_abs, tag = 'smem constant byte address 0x4 - core index']
  #allocation1 [shape = 'u32[144,128]{1,0:T(1,128)}', space=vmem, size = 0x12000, scoped, tag = 'internal scratch']
  #allocation2 [shape = 'f32[16,32]{1,0:T(8,128)}', space=vmem, size = 0x2000, scoped, tag = 'scratch operand']
  %s0 = inlined_call_operand.vmem [shape: bf16[16,32], index: 0, kind: input, shape index: {}]
  %s1 = inlined_call_operand.vmem [shape: bf16[32,32], index: 1, kind: input, shape index: {}]
  %s2 = inlined_call_operand.vmem [shape: f32[1,32], index: 2, kind: input, shape index: {}]
  %s3 = inlined_call_operand.vmem [shape: bf16[16,32], index: 3, kind: output, shape index: {}]
  %s4 = sld [smem:[#allocation0]]
  $region30: #{_lambda_.45} parent=0
    _
  %s6 = ssub.s32 1, %s4
  %s7 = scalar_select 0, %s6, %s4
  // Predicated region
  $region2: #{_lambda_.45} parent=0 // pred_check
    _
  $region3: #{_lambda_.45} parent=0 // pred_check_branch
    %9 = sbr.rel (0) target = $region5
  $region4: #{_lambda_.45} parent=0 // pred_region
    _
  $region5: #{_lambda_.45} parent=0 // pred_fallthru
    _
  // Predicated region
  $region6: #{_lambda_.45} parent=0 // pred_check
    _
  $region7: #{_lambda_.45} parent=0 // pred_check_branch
    %11 = sbr.rel (0) target = $region9
  $region8: #{_lambda_.45} parent=0 // pred_region
    _
  $region9: #{_lambda_.45} parent=0 // pred_fallthru
    _
  // Predicated region
  $region10: #{_lambda_.45} parent=0 // pred_check
    _
  $region11: #{_lambda_.45} parent=0 // pred_check_branch
    %13 = sbr.rel (0) target = $region13
  $region12: #{_lambda_.45} parent=0 // pred_region
    _
  $region13: #{_lambda_.45} parent=0 // pred_fallthru
    _
  %p15 = scmp.eq.s32.totalorder 0, 0
  // Predicated region
  $region14: #{_lambda_.45} parent=0 // pred_check
    %p16 = pneg %p15
  $region15: #{_lambda_.45} parent=0 // pred_check_branch
    %18 = sbr.rel (%p16) target = $region17
  $region16: #{_lambda_.45} parent=0 // pred_region
    %vm19 = vcmask 261120
    %20 = vst.msk [vmem:[#allocation2] sm:$0xff] %vm19, 0.0
    %21 = vst.msk [vmem:[#allocation2 + $0x8] sm:$0xff] %vm19, 0.0
  $region17: #{_lambda_.45} parent=0 // pred_fallthru
    _
  %v22 = vld [vmem:[#allocation2] sm:$0xff]
  %v23 = vld [vmem:[#allocation2 + $0x8] sm:$0xff]
  %v24 = vld [vmem:[%s0] sm:$0xf]
  %v25 = vld [vmem:[%s0 + $0x4] sm:$0xf]
  %v26 = vld [vmem:[%s1] sm:$0xf]
  %v27 = vld [vmem:[%s1 + $0x4] sm:$0xf]
  %v28 = vld [vmem:[%s1 + $0x8] sm:$0xf]
  %v29 = vld [vmem:[%s1 + $0xc] sm:$0xf]
  %v32 = vunpack.c.l.b16 %v24
  %v33 = vunpack.c.l.b16 %v25
  %v34 = vpack.c.b16 %v33, %v32
  %v39 = vunpack.c.l.b16 %v26
  %v40 = vunpack.c.l.b16 %v27
  %v41 = vunpack.c.l.b16 %v28
  %v42 = vunpack.c.l.b16 %v29
  %v43 = vpack.c.b16 %v40, %v39
  %v44 = vpack.c.b16 %v42, %v41
  %vm47 = vcmask 261120
  %v49 = vsel %vm47, %v34, 0
  %51 = vmatprep.subr.bf16.mxu0 0
  %52 = vmatpush1.bf16.msra.mxu0 0
  %53 = vmatprep.subr.bf16.mxu0 0
  %54 = vmatpush1.bf16.msra.mxu0 0
  %55 = vmatprep.subr.bf16.mxu0 0
  %56 = vmatpush1.bf16.msra.mxu0 0
  %57 = vmatprep.subr.bf16.mxu0 0
  %58 = vmatpush1.bf16.msra.mxu0 0
  %59 = vmatprep.subr.bf16.mxu0 0
  %60 = vmatpush1.bf16.msra.mxu0 0
  %61 = vmatprep.subr.bf16.mxu0 0
  %62 = vmatpush1.bf16.msra.mxu0 0
  %63 = vmatprep.subr.bf16.mxu0 0
  %64 = vmatpush1.bf16.msra.mxu0 %v44
  %65 = vmatprep.subr.bf16.mxu0 0
  %66 = vmatpush1.bf16.msra.mxu0 %v43
  %67 = vmatprep.subr.bf16.mxu0 0
  %68 = vmatpush2.bf16.msra.mxu0 0
  %69 = vmatprep.subr.bf16.mxu0 0
  %70 = vmatpush2.bf16.msra.mxu0 0
  %71 = vmatprep.subr.bf16.mxu0 0
  %72 = vmatpush2.bf16.msra.mxu0 0
  %73 = vmatprep.subr.bf16.mxu0 0
  %74 = vmatpush2.bf16.msra.mxu0 0
  %75 = vmatprep.subr.bf16.mxu0 0
  %76 = vmatpush2.bf16.msra.mxu0 0
  %77 = vmatprep.subr.bf16.mxu0 0
  %78 = vmatpush2.bf16.msra.mxu0 0
  %79 = vmatprep.subr.bf16.mxu0 0
  %80 = vmatpush2.bf16.msra.mxu0 0
  %81 = vmatprep.subr.bf16.mxu0 0
  %82 = vmatpush2.bf16.msra.mxu0 0
  %83 = vmatprep.mubr.bf16.mxu0 0
  %84 = vmatmul.mubr.bf16.gmra.mxu0 %v49
  %v85 = vpop.f32.mrf.mxu0
  %v86 = vadd.f32 0.0, %v85
  %v87 = vpop.f32.mrf.mxu0
  %v88 = vpop.f32.mrf.mxu0
  %v89 = vadd.f32 0.0, %v88
  %v90 = vpop.f32.mrf.mxu0
  %91 = vdwg.mxu0
  %v92 = vadd.f32 %v22, %v86
  %v93 = vadd.f32 %v23, %v89
  %94 = vst.msk [vmem:[#allocation2] sm:$0xff] %vm47, %v92
  %95 = vst.msk [vmem:[#allocation2 + $0x8] sm:$0xff] %vm47, %v93
  // Predicated region
  $region18: #{_lambda_.45} parent=0 // pred_check
    %p96 = pneg %p15
  $region19: #{_lambda_.45} parent=0 // pred_check_branch
    %98 = sbr.rel (%p96) target = $region21
  $region20: #{_lambda_.45} parent=0 // pred_region
    %v99 = vld [vmem:[#allocation2] sm:$0xff]
    %v100 = vld [vmem:[#allocation2 + $0x8] sm:$0xff]
    %v101 = vld [vmem:[%s2] sm:$0x1]
    %v103 = vlaneseq
    %v104 = vshrl.u32 %v103, 7
    %v105 = vsub.s32 0, %v104
    %v106 = vrot.slane %v101, %v105
    %v108 = vadd.f32 %v99, %v106
    %v109 = vadd.f32 %v100, %v106
    %v110 = vpack.c.bf16 %v109, %v108
    %v112 = vunpack.c.l.b16 %v110
    %v113 = vunpack.c.h.b16 %v110
    %v114 = vpack.c.b16 %v112, %v112
    %v115 = vpack.c.b16 %v113, %v113
    %vm118 = vcmask 257024
    %119 = vst.msk [vmem:[%s3] sm:$0xf] %vm118, %v114
    %120 = vst.msk [vmem:[%s3 + $0x4] sm:$0xf] %vm118, %v115
  $region21: #{_lambda_.45} parent=0 // pred_fallthru
    _
  // Predicated region
  $region22: #{_lambda_.45} parent=0 // pred_check
    _
  $region23: #{_lambda_.45} parent=0 // pred_check_branch
    %122 = sbr.rel (0) target = $region25
  $region24: #{_lambda_.45} parent=0 // pred_region
    _
  $region25: #{_lambda_.45} parent=0 // pred_fallthru
    _
  // Predicated region
  $region26: #{_lambda_.45} parent=0 // pred_check
    _
  $region27: #{_lambda_.45} parent=0 // pred_check_branch
    %124 = sbr.rel (0) target = $region29
  $region28: #{_lambda_.45} parent=0 // pred_region
    _
  $region29: #{_lambda_.45} parent=0 // pred_fallthru
    _

// kernel: _lambda_.34
$region0: #{_lambda_.34}
  #allocation0 [shape = 'u32[]', space=smem, size = 0x4, offset = 0x4, fixed_abs, tag = 'smem constant byte address 0x4 - core index']
  #allocation1 [shape = 'u32[144,128]{1,0:T(1,128)}', space=vmem, size = 0x12000, scoped, tag = 'internal scratch']
  #allocation2 [shape = 'f32[16,64]{1,0:T(8,128)}', space=vmem, size = 0x2000, scoped, tag = 'scratch operand']
  %s0 = inlined_call_operand.vmem [shape: bf16[16,32], index: 0, kind: input, shape index: {}]
  %s1 = inlined_call_operand.vmem [shape: bf16[32,64], index: 1, kind: input, shape index: {}]
  %s2 = inlined_call_operand.vmem [shape: f32[1,64], index: 2, kind: input, shape index: {}]
  %s3 = inlined_call_operand.vmem [shape: bf16[16,64], index: 3, kind: output, shape index: {}]
  %s4 = sld [smem:[#allocation0]]
  $region30: #{_lambda_.34} parent=0
    _
  %s6 = ssub.s32 1, %s4
  %s7 = scalar_select 0, %s6, %s4
  // Predicated region
  $region2: #{_lambda_.34} parent=0 // pred_check
    _
  $region3: #{_lambda_.34} parent=0 // pred_check_branch
    %9 = sbr.rel (0) target = $region5
  $region4: #{_lambda_.34} parent=0 // pred_region
    _
  $region5: #{_lambda_.34} parent=0 // pred_fallthru
    _
  // Predicated region
  $region6: #{_lambda_.34} parent=0 // pred_check
    _
  $region7: #{_lambda_.34} parent=0 // pred_check_branch
    %11 = sbr.rel (0) target = $region9
  $region8: #{_lambda_.34} parent=0 // pred_region
    _
  $region9: #{_lambda_.34} parent=0 // pred_fallthru
    _
  // Predicated region
  $region10: #{_lambda_.34} parent=0 // pred_check
    _
  $region11: #{_lambda_.34} parent=0 // pred_check_branch
    %13 = sbr.rel (0) target = $region13
  $region12: #{_lambda_.34} parent=0 // pred_region
    _
  $region13: #{_lambda_.34} parent=0 // pred_fallthru
    _
  %p15 = scmp.eq.s32.totalorder 0, 0
  // Predicated region
  $region14: #{_lambda_.34} parent=0 // pred_check
    %p16 = pneg %p15
  $region15: #{_lambda_.34} parent=0 // pred_check_branch
    %18 = sbr.rel (%p16) target = $region17
  $region16: #{_lambda_.34} parent=0 // pred_region
    %vm19 = vcmask 523264
    %20 = vst.msk [vmem:[#allocation2] sm:$0xff] %vm19, 0.0
    %21 = vst.msk [vmem:[#allocation2 + $0x8] sm:$0xff] %vm19, 0.0
  $region17: #{_lambda_.34} parent=0 // pred_fallthru
    _
  %v22 = vld [vmem:[#allocation2] sm:$0xff]
  %v23 = vld [vmem:[#allocation2 + $0x8] sm:$0xff]
  %v24 = vld [vmem:[%s0] sm:$0xf]
  %v25 = vld [vmem:[%s0 + $0x4] sm:$0xf]
  %v26 = vld [vmem:[%s1] sm:$0xf]
  %v27 = vld [vmem:[%s1 + $0x4] sm:$0xf]
  %v28 = vld [vmem:[%s1 + $0x8] sm:$0xf]
  %v29 = vld [vmem:[%s1 + $0xc] sm:$0xf]
  %v32 = vunpack.c.l.b16 %v24
  %v33 = vunpack.c.l.b16 %v25
  %v34 = vpack.c.b16 %v33, %v32
  %v39 = vunpack.c.l.b16 %v26
  %v40 = vunpack.c.l.b16 %v27
  %v41 = vunpack.c.l.b16 %v28
  %v42 = vunpack.c.l.b16 %v29
  %v43 = vpack.c.b16 %v40, %v39
  %v44 = vpack.c.b16 %v42, %v41
  %vm47 = vcmask 261120
  %v49 = vsel %vm47, %v34, 0
  %51 = vmatprep.subr.bf16.mxu0 0
  %52 = vmatpush1.bf16.msra.mxu0 0
  %53 = vmatprep.subr.bf16.mxu0 0
  %54 = vmatpush1.bf16.msra.mxu0 0
  %55 = vmatprep.subr.bf16.mxu0 0
  %56 = vmatpush1.bf16.msra.mxu0 0
  %57 = vmatprep.subr.bf16.mxu0 0
  %58 = vmatpush1.bf16.msra.mxu0 0
  %59 = vmatprep.subr.bf16.mxu0 0
  %60 = vmatpush1.bf16.msra.mxu0 0
  %61 = vmatprep.subr.bf16.mxu0 0
  %62 = vmatpush1.bf16.msra.mxu0 0
  %63 = vmatprep.subr.bf16.mxu0 0
  %64 = vmatpush1.bf16.msra.mxu0 %v44
  %65 = vmatprep.subr.bf16.mxu0 0
  %66 = vmatpush1.bf16.msra.mxu0 %v43
  %67 = vmatprep.subr.bf16.mxu0 0
  %68 = vmatpush2.bf16.msra.mxu0 0
  %69 = vmatprep.subr.bf16.mxu0 0
  %70 = vmatpush2.bf16.msra.mxu0 0
  %71 = vmatprep.subr.bf16.mxu0 0
  %72 = vmatpush2.bf16.msra.mxu0 0
  %73 = vmatprep.subr.bf16.mxu0 0
  %74 = vmatpush2.bf16.msra.mxu0 0
  %75 = vmatprep.subr.bf16.mxu0 0
  %76 = vmatpush2.bf16.msra.mxu0 0
  %77 = vmatprep.subr.bf16.mxu0 0
  %78 = vmatpush2.bf16.msra.mxu0 0
  %79 = vmatprep.subr.bf16.mxu0 0
  %80 = vmatpush2.bf16.msra.mxu0 0
  %81 = vmatprep.subr.bf16.mxu0 0
  %82 = vmatpush2.bf16.msra.mxu0 0
  %83 = vmatprep.mubr.bf16.mxu0 0
  %84 = vmatmul.mubr.bf16.gmra.mxu0 %v49
  %v85 = vpop.f32.mrf.mxu0
  %v86 = vadd.f32 0.0, %v85
  %v87 = vpop.f32.mrf.mxu0
  %v88 = vpop.f32.mrf.mxu0
  %v89 = vadd.f32 0.0, %v88
  %v90 = vpop.f32.mrf.mxu0
  %91 = vdwg.mxu0
  %v92 = vadd.f32 %v22, %v86
  %v93 = vadd.f32 %v23, %v89
  %vm94 = vcmask 523264
  %95 = vst.msk [vmem:[#allocation2] sm:$0xff] %vm94, %v92
  %96 = vst.msk [vmem:[#allocation2 + $0x8] sm:$0xff] %vm94, %v93
  // Predicated region
  $region18: #{_lambda_.34} parent=0 // pred_check
    %p97 = pneg %p15
  $region19: #{_lambda_.34} parent=0 // pred_check_branch
    %99 = sbr.rel (%p97) target = $region21
  $region20: #{_lambda_.34} parent=0 // pred_region
    %v100 = vld [vmem:[#allocation2] sm:$0xff]
    %v101 = vld [vmem:[#allocation2 + $0x8] sm:$0xff]
    %v102 = vld [vmem:[%s2] sm:$0x1]
    %v104 = vlaneseq
    %v105 = vshrl.u32 %v104, 7
    %v106 = vsub.s32 0, %v105
    %v107 = vrot.slane %v102, %v106
    %v109 = vadd.f32 %v100, %v107
    %v110 = vadd.f32 %v101, %v107
    %v111 = vmul.f32 %v109, %v109
    %v112 = vmul.f32 %v110, %v110
    %v113 = vmul.f32 %v109, %v111
    %v114 = vmul.f32 %v110, %v112
    %v115 = vmul.f32 %v113, 0.044715
    %v116 = vmul.f32 %v114, 0.044715
    %v117 = vadd.f32 %v109, %v115
    %v118 = vadd.f32 %v110, %v116
    %v119 = vmul.f32 %v117, 0.7978846
    %v120 = vmul.f32 %v118, 0.7978846
    %v121 = vtanh.pop %v119
    %v122 = vtanh.pop %v120
    %v123 = vadd.f32 %v121, 1.0
    %v124 = vadd.f32 %v122, 1.0
    %v125 = vmul.f32 %v123, 0.5
    %v126 = vmul.f32 %v124, 0.5
    %v127 = vmul.f32 %v109, %v125
    %v128 = vmul.f32 %v110, %v126
    %v129 = vpack.c.bf16 %v128, %v127
    %v131 = vunpack.c.l.b16 %v129
    %v132 = vunpack.c.h.b16 %v129
    %v133 = vpack.c.b16 %v131, %v131
    %v134 = vpack.c.b16 %v132, %v132
    %vm137 = vcmask 519168
    %138 = vst.msk [vmem:[%s3] sm:$0xf] %vm137, %v133
    %139 = vst.msk [vmem:[%s3 + $0x4] sm:$0xf] %vm137, %v134
  $region21: #{_lambda_.34} parent=0 // pred_fallthru
    _
  // Predicated region
  $region22: #{_lambda_.34} parent=0 // pred_check
    _
  $region23: #{_lambda_.34} parent=0 // pred_check_branch
    %141 = sbr.rel (0) target = $region25
  $region24: #{_lambda_.34} parent=0 // pred_region
    _
  $region25: #{_lambda_.34} parent=0 // pred_fallthru
    _
  // Predicated region
  $region26: #{_lambda_.34} parent=0 // pred_check
    _
  $region27: #{_lambda_.34} parent=0 // pred_check_branch
    %143 = sbr.rel (0) target = $region29
  $region28: #{_lambda_.34} parent=0 // pred_region
    _
  $region29: #{_lambda_.34} parent=0 // pred_fallthru
    _

// kernel: _lambda_.32
$region0: #{_lambda_.32}
  #allocation0 [shape = 'u32[]', space=smem, size = 0x4, offset = 0x4, fixed_abs, tag = 'smem constant byte address 0x4 - core index']
  #allocation1 [shape = 'u32[144,128]{1,0:T(1,128)}', space=vmem, size = 0x12000, scoped, tag = 'internal scratch']
  %s0 = inlined_call_operand.vmem [shape: bf16[2,8,96], index: 0, kind: input, shape index: {}, may-alias: {0,1,2}]
  %s1 = inlined_call_operand.vmem [shape: bf16[2,8,96], index: 1, kind: input, shape index: {}, may-alias: {0,1,2}]
  %s2 = inlined_call_operand.vmem [shape: bf16[2,8,96], index: 2, kind: input, shape index: {}, may-alias: {0,1,2}]
  %s3 = inlined_call_operand.vmem [shape: f32[2,1,8], index: 3, kind: input, shape index: {}]
  %s4 = inlined_call_operand.vmem [shape: bf16[2,8,32], index: 4, kind: output, shape index: {}]
  %s5 = sld [smem:[#allocation0]]
  $region49: #{_lambda_.32} parent=0
    _
  %s7 = ssub.s32 1, %s5
  %s8 = scalar_select 0, %s7, %s5
  loop: start=0, step=1, limit=4
  $region2: #{_lambda_.32} parent=0 // loop_pre_header
    _
  $region3: #{_lambda_.32} parent=0 // loop_header
    %s10 = sphi 0, %s14
    %p11 = scmp.ge.s32.totalorder %s10, 4
    %s17 = sphi 0, %s29
    %s18 = sphi 0, %s25
    %s19 = sphi 0, %s17
    %s20 = sphi 0, %s18
    %s21 = sphi 0, %s19
    %s22 = sphi 0, %s20
    %s34 = sphi 0, %s36
    %s37 = sphi 0, %s34
    %s38 = sphi 0, %s37
    %s54 = sphi 0, %s38
    %s60 = sphi 0, %s62
    %s63 = sphi 0, %s60
    %s64 = sphi 0, %s63
    %s80 = sphi 0, %s64
    %s86 = sphi 0, %s88
    %s89 = sphi 0, %s86
    %s90 = sphi 0, %s89
    %s106 = sphi 0, %s90
    %s112 = sphi 0, %s114
    %s115 = sphi 0, %s112
    %s116 = sphi 0, %s115
    %s132 = sphi 0, %s116
    %s140 = sphi 0, %s142
    %s143 = sphi 0, %s140
    %s144 = sphi 0, %s143
    %s160 = sphi 0, %s144
  $region4: #{_lambda_.32} parent=0 // loop_header_branch
    %13 = sbr.rel (%p11) target = $region8
  $region5: #{_lambda_.32} parent=0 // loop_body
    %s15 = ssub.s32 %s10, 1
    %s16 = ssub.s32 %s10, 2
    %s23 = sadd.s32 1, %s18
    %p24 = scmp.ge.s32.totalorder %s23, 1
    %s25 = scalar_select %p24, 0, %s23
    %s26 = sadd.s32 1, %s17
    %s27 = scalar_select %p24, %s26, %s17
    %p28 = scmp.ge.s32.totalorder %s27, 2
    %s29 = scalar_select %p28, 0, %s27
    %s30 = ssub.s32 %s17, %s29
    %s31 = ssub.s32 %s18, %s25
    %s32 = sor.u32 %s30, %s31
    %p33 = scmp.eq.s32.totalorder %s32, 0
    %s35 = sadd.s32 %s34, 1
    %s36 = scalar_select %p33, %s34, %s35
    %p39 = pneg %p33
    %p40 = scmp.eq.s32.totalorder %s10, 1
    %p41 = por %p39, %p40
    %p42 = scmp.ne.s32.totalorder %s34, %s37
    %p43 = scmp.eq.s32.totalorder %s10, 0
    %p44 = por %p42, %p43
    %p45 = scmp.ne.s32.totalorder %s34, %s37
    %p46 = scmp.eq.s32.totalorder %s15, 1
    %p47 = por %p45, %p46
    %p48 = scmp.ne.s32.totalorder %s37, %s38
    %p49 = scmp.eq.s32.totalorder %s15, 0
    %p50 = por %p48, %p49
    %p51 = scmp.ne.s32.totalorder %s37, %s38
    %p52 = scmp.eq.s32.totalorder %s16, 1
    %p53 = por %p51, %p52
    %p55 = scmp.ne.s32.totalorder %s38, %s54
    %p56 = scmp.eq.s32.totalorder %s16, 0
    %p57 = por %p55, %p56
    %s58 = ssub.s32 %s17, %s29
    %p59 = scmp.eq.s32.totalorder %s58, 0
    %s61 = sadd.s32 %s60, 1
    %s62 = scalar_select %p59, %s60, %s61
    %p65 = pneg %p59
    %p66 = scmp.eq.s32.totalorder %s10, 1
    %p67 = por %p65, %p66
    %p68 = scmp.ne.s32.totalorder %s60, %s63
    %p69 = scmp.eq.s32.totalorder %s10, 0
    %p70 = por %p68, %p69
    %p71 = scmp.ne.s32.totalorder %s60, %s63
    %p72 = scmp.eq.s32.totalorder %s15, 1
    %p73 = por %p71, %p72
    %p74 = scmp.ne.s32.totalorder %s63, %s64
    %p75 = scmp.eq.s32.totalorder %s15, 0
    %p76 = por %p74, %p75
    %p77 = scmp.ne.s32.totalorder %s63, %s64
    %p78 = scmp.eq.s32.totalorder %s16, 1
    %p79 = por %p77, %p78
    %p81 = scmp.ne.s32.totalorder %s64, %s80
    %p82 = scmp.eq.s32.totalorder %s16, 0
    %p83 = por %p81, %p82
    %s84 = ssub.s32 %s17, %s29
    %p85 = scmp.eq.s32.totalorder %s84, 0
    %s87 = sadd.s32 %s86, 1
    %s88 = scalar_select %p85, %s86, %s87
    %p91 = pneg %p85
    %p92 = scmp.eq.s32.totalorder %s10, 1
    %p93 = por %p91, %p92
    %p94 = scmp.ne.s32.totalorder %s86, %s89
    %p95 = scmp.eq.s32.totalorder %s10, 0
    %p96 = por %p94, %p95
    %p97 = scmp.ne.s32.totalorder %s86, %s89
    %p98 = scmp.eq.s32.totalorder %s15, 1
    %p99 = por %p97, %p98
    %p100 = scmp.ne.s32.totalorder %s89, %s90
    %p101 = scmp.eq.s32.totalorder %s15, 0
    %p102 = por %p100, %p101
    %p103 = scmp.ne.s32.totalorder %s89, %s90
    %p104 = scmp.eq.s32.totalorder %s16, 1
    %p105 = por %p103, %p104
    %p107 = scmp.ne.s32.totalorder %s90, %s106
    %p108 = scmp.eq.s32.totalorder %s16, 0
    %p109 = por %p107, %p108
    %s110 = ssub.s32 %s17, %s29
    %p111 = scmp.eq.s32.totalorder %s110, 0
    %s113 = sadd.s32 %s112, 1
    %s114 = scalar_select %p111, %s112, %s113
    %p117 = pneg %p111
    %p118 = scmp.eq.s32.totalorder %s10, 1
    %p119 = por %p117, %p118
    %p120 = scmp.ne.s32.totalorder %s112, %s115
    %p121 = scmp.eq.s32.totalorder %s10, 0
    %p122 = por %p120, %p121
    %p123 = scmp.ne.s32.totalorder %s112, %s115
    %p124 = scmp.eq.s32.totalorder %s15, 1
    %p125 = por %p123, %p124
    %p126 = scmp.ne.s32.totalorder %s115, %s116
    %p127 = scmp.eq.s32.totalorder %s15, 0
    %p128 = por %p126, %p127
    %p129 = scmp.ne.s32.totalorder %s115, %s116
    %p130 = scmp.eq.s32.totalorder %s16, 1
    %p131 = por %p129, %p130
    %p133 = scmp.ne.s32.totalorder %s116, %s132
    %p134 = scmp.eq.s32.totalorder %s16, 0
    %p135 = por %p133, %p134
    %s136 = ssub.s32 %s17, %s29
    %s137 = ssub.s32 %s18, %s25
    %s138 = sor.u32 %s136, %s137
    %p139 = scmp.eq.s32.totalorder %s138, 0
    %s141 = sadd.s32 %s140, 1
    %s142 = scalar_select %p139, %s140, %s141
    %p145 = pneg %p139
    %p146 = scmp.eq.s32.totalorder %s10, 1
    %p147 = por %p145, %p146
    %p148 = scmp.ne.s32.totalorder %s140, %s143
    %p149 = scmp.eq.s32.totalorder %s10, 0
    %p150 = por %p148, %p149
    %p151 = scmp.ne.s32.totalorder %s140, %s143
    %p152 = scmp.eq.s32.totalorder %s15, 1
    %p153 = por %p151, %p152
    %p154 = scmp.ne.s32.totalorder %s143, %s144
    %p155 = scmp.eq.s32.totalorder %s15, 0
    %p156 = por %p154, %p155
    %p157 = scmp.ne.s32.totalorder %s143, %s144
    %p158 = scmp.eq.s32.totalorder %s16, 1
    %p159 = por %p157, %p158
    %p161 = scmp.ne.s32.totalorder %s144, %s160
    %p162 = scmp.eq.s32.totalorder %s16, 0
    %p163 = por %p161, %p162
    %p164 = scmp.le.s32.totalorder 1, %s10
    %p165 = scmp.lt.s32.totalorder %s10, 3
    %p166 = pnand %p164, %p165
    %p167 = pneg %p166
    // Predicated region
    $region9: #{_lambda_.32} parent=5 // pred_check
      _
    $region10: #{_lambda_.32} parent=5 // pred_check_branch
      %169 = sbr.rel (%p166) target = $region12
    $region11: #{_lambda_.32} parent=5 // pred_region
      %s170 = ssub.s32 %s10, 1
    $region12: #{_lambda_.32} parent=5 // pred_fallthru
      _
    %p171 = scmp.lt.s32.totalorder %s10, 2
    // Predicated region
    $region13: #{_lambda_.32} parent=5 // pred_check
      %p172 = pneg %p171
    $region14: #{_lambda_.32} parent=5 // pred_check_branch
      %174 = sbr.rel (%p172) target = $region16
    $region15: #{_lambda_.32} parent=5 // pred_region
      // Predicated region
      $region17: #{_lambda_.32} parent=15 // pred_check
        %p175 = pneg %p44
      $region18: #{_lambda_.32} parent=15 // pred_check_branch
        %177 = sbr.rel (%p175) target = $region20
      $region19: #{_lambda_.32} parent=15 // pred_region
        %p178 = scmp.lt.s32.totalorder %s17, 1
        %s179 = scalar_select %p178, %s17, 1
        %p180 = scmp.lt.s32.totalorder %s18, 0
        %s181 = scalar_select %p180, %s18, 0
        %s182 = sadd.s32 %s181, %s179
        %s183 = smul.addr %s182, 4
        %s184 = scalar_lea.vmem %s0, %s183
      $region20: #{_lambda_.32} parent=15 // pred_fallthru
        _
      // Predicated region
      $region21: #{_lambda_.32} parent=15 // pred_check
        %p185 = pneg %p70
      $region22: #{_lambda_.32} parent=15 // pred_check_branch
        %187 = sbr.rel (%p185) target = $region24
      $region23: #{_lambda_.32} parent=15 // pred_region
        %p188 = scmp.lt.s32.totalorder %s17, 1
        %s189 = scalar_select %p188, %s17, 1
        %s190 = smul.addr %s189, 4
        %s191 = scalar_lea.vmem %s1, %s190
      $region24: #{_lambda_.32} parent=15 // pred_fallthru
        _
      // Predicated region
      $region25: #{_lambda_.32} parent=15 // pred_check
        %p192 = pneg %p96
      $region26: #{_lambda_.32} parent=15 // pred_check_branch
        %194 = sbr.rel (%p192) target = $region28
      $region27: #{_lambda_.32} parent=15 // pred_region
        %p195 = scmp.lt.s32.totalorder %s17, 1
        %s196 = scalar_select %p195, %s17, 1
        %s197 = smul.addr %s196, 4
        %s198 = scalar_lea.vmem %s2, %s197
      $region28: #{_lambda_.32} parent=15 // pred_fallthru
        _
      // Predicated region
      $region29: #{_lambda_.32} parent=15 // pred_check
        %p199 = pneg %p122
      $region30: #{_lambda_.32} parent=15 // pred_check_branch
        %201 = sbr.rel (%p199) target = $region32
      $region31: #{_lambda_.32} parent=15 // pred_region
        %p202 = scmp.lt.s32.totalorder %s17, 1
        %s203 = scalar_select %p202, %s17, 1
        %s204 = scalar_lea.vmem %s3, %s203
      $region32: #{_lambda_.32} parent=15 // pred_fallthru
        _
    $region16: #{_lambda_.32} parent=5 // pred_fallthru
      _
    %p205 = scmp.le.s32.totalorder 1, %s10
    %p206 = scmp.lt.s32.totalorder %s10, 3
    %p207 = pnand %p205, %p206
    %p208 = pneg %p207
    // Predicated region
    $region33: #{_lambda_.32} parent=5 // pred_check
      _
    $region34: #{_lambda_.32} parent=5 // pred_check_branch
      %210 = sbr.rel (%p207) target = $region36
    $region35: #{_lambda_.32} parent=5 // pred_region
      %s211 = ssub.s32 %s10, 1
      %p212 = scmp.lt.s32.totalorder %s19, 1
      %s213 = scalar_select %p212, %s19, 1
      %p214 = scmp.lt.s32.totalorder %s20, 0
      %s215 = scalar_select %p214, %s20, 0
      %s216 = sadd.s32 %s215, %s213
      %s217 = smul.addr %s216, 4
      %s218 = scalar_lea.vmem %s0, %s217
      %p219 = pneg %p50
      %p220 = pneg %p47
      %p221 = scmp.lt.s32.totalorder %s19, 1
      %s222 = scalar_select %p221, %s19, 1
      %s223 = smul.addr %s222, 4
      %s224 = scalar_lea.vmem %s1, %s223
      %p225 = pneg %p76
      %p226 = pneg %p73
      %p227 = scmp.lt.s32.totalorder %s19, 1
      %s228 = scalar_select %p227, %s19, 1
      %s229 = smul.addr %s228, 4
      %s230 = scalar_lea.vmem %s2, %s229
      %p231 = pneg %p102
      %p232 = pneg %p99
      %p233 = scmp.lt.s32.totalorder %s19, 1
      %s234 = scalar_select %p233, %s19, 1
      %s235 = scalar_lea.vmem %s3, %s234
      %p236 = pneg %p128
      %p237 = pneg %p125
      %p238 = pneg %p156
      %p239 = pneg %p153
      %p240 = scmp.lt.s32.totalorder %s19, 1
      %s241 = scalar_select %p240, %s19, 1
      %p242 = scmp.lt.s32.totalorder %s20, 0
      %s243 = scalar_select %p242, %s20, 0
      %s244 = sadd.s32 %s243, %s241
      %s245 = smul.addr %s244, 4
      %s246 = scalar_lea.vmem %s4, %s245
      %p247 = scmp.lt.s32.totalorder %s19, 1
      %s248 = scalar_select %p247, %s19, 1
      %p249 = scmp.lt.s32.totalorder %s20, 0
      %s250 = scalar_select %p249, %s20, 0
      %s251 = sadd.s32 %s250, %s248
      %s252 = smul.addr %s251, 4
      %s253 = scalar_lea.vmem %s0, %s252
      %p254 = scmp.lt.s32.totalorder %s19, 1
      %s255 = scalar_select %p254, %s19, 1
      %s256 = smul.addr %s255, 4
      %s257 = scalar_lea.vmem %s1, %s256
      %p258 = scmp.lt.s32.totalorder %s19, 1
      %s259 = scalar_select %p258, %s19, 1
      %s260 = smul.addr %s259, 4
      %s261 = scalar_lea.vmem %s2, %s260
      %p262 = scmp.lt.s32.totalorder %s19, 1
      %s263 = scalar_select %p262, %s19, 1
      %s264 = scalar_lea.vmem %s3, %s263
      %p265 = scmp.lt.s32.totalorder %s19, 1
      %s266 = scalar_select %p265, %s19, 1
      %p267 = scmp.lt.s32.totalorder %s20, 0
      %s268 = scalar_select %p267, %s20, 0
      %s269 = sadd.s32 %s268, %s266
      %s270 = smul.addr %s269, 4
      %s271 = scalar_lea.vmem %s4, %s270
      %v273 = vld [vmem:[%s264] sm:$0x1]
      %v274 = vsub.f32 1.0, %v273
      %v275 = vmul.f32 %v274, -1e+09
      %v277 = vlaneseq
      %v278 = vshrl.u32 %v277, 7
      %v279 = vsub.s32 0, %v278
      %v280 = vrot.slane %v275, %v279
      %v282 = vld [vmem:[%s253] sm:$0xf]
      %v283 = vld [vmem:[%s257] sm:$0xf]
      %v284 = vld [vmem:[%s261] sm:$0xf]
      %v286 = vunpack.c.l.b16 %v283
      %v287 = vpack.c.b16 %v286, %v286
      %288 = vrot.lane.b32.xlu0 %v287, 96
      %v289 = vpop.permute.xlu0 %288
      %vm290 = vcmask 64512
      %v292 = vsel %vm290, %v282, 0
      %v295 = vsel %vm290, %v289, 0
      %297 = vmatprep.subr.bf16.mxu0 0
      %298 = vmatpush1.bf16.xpose.msra.mxu0 0
      %299 = vmatprep.subr.bf16.mxu0 0
      %300 = vmatpush1.bf16.xpose.msra.mxu0 0
      %301 = vmatprep.subr.bf16.mxu0 0
      %302 = vmatpush1.bf16.xpose.msra.mxu0 0
      %303 = vmatprep.subr.bf16.mxu0 0
      %304 = vmatpush1.bf16.xpose.msra.mxu0 0
      %305 = vmatprep.subr.bf16.mxu0 0
      %306 = vmatpush1.bf16.xpose.msra.mxu0 0
      %307 = vmatprep.subr.bf16.mxu0 0
      %308 = vmatpush1.bf16.xpose.msra.mxu0 0
      %309 = vmatprep.subr.bf16.mxu0 0
      %310 = vmatpush1.bf16.xpose.msra.mxu0 0
      %311 = vmatprep.subr.bf16.mxu0 0
      %312 = vmatpush1.bf16.xpose.msra.mxu0 %v295
      %313 = vmatprep.subr.bf16.mxu0 0
      %314 = vmatpush2.bf16.xpose.msra.mxu0 0
      %315 = vmatprep.subr.bf16.mxu0 0
      %316 = vmatpush2.bf16.xpose.msra.mxu0 0
      %317 = vmatprep.subr.bf16.mxu0 0
      %318 = vmatpush2.bf16.xpose.msra.mxu0 0
      %319 = vmatprep.subr.bf16.mxu0 0
      %320 = vmatpush2.bf16.xpose.msra.mxu0 0
      %321 = vmatprep.subr.bf16.mxu0 0
      %322 = vmatpush2.bf16.xpose.msra.mxu0 0
      %323 = vmatprep.subr.bf16.mxu0 0
      %324 = vmatpush2.bf16.xpose.msra.mxu0 0
      %325 = vmatprep.subr.bf16.mxu0 0
      %326 = vmatpush2.bf16.xpose.msra.mxu0 0
      %327 = vmatprep.subr.bf16.mxu0 0
      %328 = vmatpush2.bf16.xpose.msra.mxu0 0
      %329 = vmatprep.mubr.bf16.mxu0 0
      %330 = vmatmul.mubr.bf16.gmra.mxu0 %v292
      %v331 = vpop.f32.mrf.mxu0
      %v332 = vadd.f32 0.0, %v331
      %v333 = vpop.f32.mrf.mxu0
      %v334 = vpop.f32.mrf.mxu0
      %v335 = vpop.f32.mrf.mxu0
      %336 = vdwg.mxu0
      %v337 = vmul.f32 %v332, 0.35355338
      %v338 = vadd.f32 %v337, %v280
      %v339 = vsel %vm290, %v338, -inf
      %340 = vmax.xlane.f32.xlu0 %v339
      %v341 = vpop.xlane.xlu0 %340
      %v342 = vsub.f32 %v338, %v341
      %v343 = vmul.f32 %v342, 1.442695
      %v344 = vpow.pop %v343
      %v345 = vsel %vm290, %v344, 0.0
      %346 = vadd.xlane.f32.xlu0 %v345
      %v347 = vpop.xlane.xlu0 %346
      %v348 = vrcp.pop %v347
      %v349 = vmul.f32 %v344, %v348
      %v350 = vpack.c.bf16 %v349, %v349
      %v352 = vunpack.c.l.b16 %v284
      %v353 = vpack.c.b16 %v352, %v352
      %354 = vrot.lane.b32.xlu0 %v353, 64
      %v355 = vpop.permute.xlu0 %354
      %v357 = vsel %vm290, %v350, 0
      %vm359 = vcmask 1043456
      %v361 = vsel %vm359, %v355, 0
      %363 = vmatprep.subr.bf16.mxu0 0
      %364 = vmatpush1.bf16.msra.mxu0 0
      %365 = vmatprep.subr.bf16.mxu0 0
      %366 = vmatpush1.bf16.msra.mxu0 0
      %367 = vmatprep.subr.bf16.mxu0 0
      %368 = vmatpush1.bf16.msra.mxu0 0
      %369 = vmatprep.subr.bf16.mxu0 0
      %370 = vmatpush1.bf16.msra.mxu0 0
      %371 = vmatprep.subr.bf16.mxu0 0
      %372 = vmatpush1.bf16.msra.mxu0 0
      %373 = vmatprep.subr.bf16.mxu0 0
      %374 = vmatpush1.bf16.msra.mxu0 0
      %375 = vmatprep.subr.bf16.mxu0 0
      %376 = vmatpush1.bf16.msra.mxu0 0
      %377 = vmatprep.subr.bf16.mxu0 0
      %378 = vmatpush1.bf16.msra.mxu0 %v361
      %379 = vmatprep.subr.bf16.mxu0 0
      %380 = vmatpush2.bf16.msra.mxu0 0
      %381 = vmatprep.subr.bf16.mxu0 0
      %382 = vmatpush2.bf16.msra.mxu0 0
      %383 = vmatprep.subr.bf16.mxu0 0
      %384 = vmatpush2.bf16.msra.mxu0 0
      %385 = vmatprep.subr.bf16.mxu0 0
      %386 = vmatpush2.bf16.msra.mxu0 0
      %387 = vmatprep.subr.bf16.mxu0 0
      %388 = vmatpush2.bf16.msra.mxu0 0
      %389 = vmatprep.subr.bf16.mxu0 0
      %390 = vmatpush2.bf16.msra.mxu0 0
      %391 = vmatprep.subr.bf16.mxu0 0
      %392 = vmatpush2.bf16.msra.mxu0 0
      %393 = vmatprep.subr.bf16.mxu0 0
      %394 = vmatpush2.bf16.msra.mxu0 0
      %395 = vmatprep.mubr.bf16.mxu0 0
      %396 = vmatmul.mubr.bf16.gmra.mxu0 %v357
      %v397 = vpop.f32.mrf.mxu0
      %v398 = vadd.f32 0.0, %v397
      %v399 = vpop.f32.mrf.mxu0
      %v400 = vpop.f32.mrf.mxu0
      %v401 = vpop.f32.mrf.mxu0
      %402 = vdwg.mxu0
      %v403 = vpack.c.bf16 %v398, %v398
      %vm404 = vcmask 60416
      %405 = vst.msk [vmem:[%s271] sm:$0xf] %vm404, %v403
      %v406 = vld [vmem:[%s253] sm:$0xf]
      %v407 = vld [vmem:[%s257] sm:$0xf]
      %v408 = vld [vmem:[%s261] sm:$0xf]
      %v410 = vunpack.c.l.b16 %v406
      %v411 = vpack.c.b16 %v410, %v410
      %412 = vrot.lane.b32.xlu0 %v411, 120
      %v413 = vpop.permute.xlu0 %412
      %v415 = vunpack.c.l.b16 %v407
      %v416 = vpack.c.b16 %v415, %v415
      %417 = vrot.lane.b32.xlu0 %v416, 88
      %v418 = vpop.permute.xlu0 %417
      %v420 = vsel %vm290, %v413, 0
      %v423 = vsel %vm290, %v418, 0
      %425 = vmatprep.subr.bf16.mxu0 0
      %426 = vmatpush1.bf16.xpose.msra.mxu0 0
      %427 = vmatprep.subr.bf16.mxu0 0
      %428 = vmatpush1.bf16.xpose.msra.mxu0 0
      %429 = vmatprep.subr.bf16.mxu0 0
      %430 = vmatpush1.bf16.xpose.msra.mxu0 0
      %431 = vmatprep.subr.bf16.mxu0 0
      %432 = vmatpush1.bf16.xpose.msra.mxu0 0
      %433 = vmatprep.subr.bf16.mxu0 0
      %434 = vmatpush1.bf16.xpose.msra.mxu0 0
      %435 = vmatprep.subr.bf16.mxu0 0
      %436 = vmatpush1.bf16.xpose.msra.mxu0 0
      %437 = vmatprep.subr.bf16.mxu0 0
      %438 = vmatpush1.bf16.xpose.msra.mxu0 0
      %439 = vmatprep.subr.bf16.mxu0 0
      %440 = vmatpush1.bf16.xpose.msra.mxu0 %v423
      %441 = vmatprep.subr.bf16.mxu0 0
      %442 = vmatpush2.bf16.xpose.msra.mxu0 0
      %443 = vmatprep.subr.bf16.mxu0 0
      %444 = vmatpush2.bf16.xpose.msra.mxu0 0
      %445 = vmatprep.subr.bf16.mxu0 0
      %446 = vmatpush2.bf16.xpose.msra.mxu0 0
      %447 = vmatprep.subr.bf16.mxu0 0
      %448 = vmatpush2.bf16.xpose.msra.mxu0 0
      %449 = vmatprep.subr.bf16.mxu0 0
      %450 = vmatpush2.bf16.xpose.msra.mxu0 0
      %451 = vmatprep.subr.bf16.mxu0 0
      %452 = vmatpush2.bf16.xpose.msra.mxu0 0
      %453 = vmatprep.subr.bf16.mxu0 0
      %454 = vmatpush2.bf16.xpose.msra.mxu0 0
      %455 = vmatprep.subr.bf16.mxu0 0
      %456 = vmatpush2.bf16.xpose.msra.mxu0 0
      %457 = vmatprep.mubr.bf16.mxu0 0
      %458 = vmatmul.mubr.bf16.gmra.mxu0 %v420
      %v459 = vpop.f32.mrf.mxu0
      %v460 = vadd.f32 0.0, %v459
      %v461 = vpop.f32.mrf.mxu0
      %v462 = vpop.f32.mrf.mxu0
      %v463 = vpop.f32.mrf.mxu0
      %464 = vdwg.mxu0
      %v465 = vmul.f32 %v460, 0.35355338
      %v466 = vadd.f32 %v465, %v280
      %v467 = vsel %vm290, %v466, -inf
      %468 = vmax.xlane.f32.xlu0 %v467
      %v469 = vpop.xlane.xlu0 %468
      %v470 = vsub.f32 %v466, %v469
      %v471 = vmul.f32 %v470, 1.442695
      %v472 = vpow.pop %v471
      %v473 = vsel %vm290, %v472, 0.0
      %474 = vadd.xlane.f32.xlu0 %v473
      %v475 = vpop.xlane.xlu0 %474
      %v476 = vrcp.pop %v475
      %v477 = vmul.f32 %v472, %v476
      %v478 = vpack.c.bf16 %v477, %v477
      %v480 = vunpack.c.l.b16 %v408
      %v481 = vpack.c.b16 %v480, %v480
      %482 = vrot.lane.b32.xlu0 %v481, 56
      %v483 = vpop.permute.xlu0 %482
      %v485 = vsel %vm290, %v478, 0
      %v488 = vsel %vm359, %v483, 0
      %490 = vmatprep.subr.bf16.mxu0 0
      %491 = vmatpush1.bf16.msra.mxu0 0
      %492 = vmatprep.subr.bf16.mxu0 0
      %493 = vmatpush1.bf16.msra.mxu0 0
      %494 = vmatprep.subr.bf16.mxu0 0
      %495 = vmatpush1.bf16.msra.mxu0 0
      %496 = vmatprep.subr.bf16.mxu0 0
      %497 = vmatpush1.bf16.msra.mxu0 0
      %498 = vmatprep.subr.bf16.mxu0 0
      %499 = vmatpush1.bf16.msra.mxu0 0
      %500 = vmatprep.subr.bf16.mxu0 0
      %501 = vmatpush1.bf16.msra.mxu0 0
      %502 = vmatprep.subr.bf16.mxu0 0
      %503 = vmatpush1.bf16.msra.mxu0 0
      %504 = vmatprep.subr.bf16.mxu0 0
      %505 = vmatpush1.bf16.msra.mxu0 %v488
      %506 = vmatprep.subr.bf16.mxu0 0
      %507 = vmatpush2.bf16.msra.mxu0 0
      %508 = vmatprep.subr.bf16.mxu0 0
      %509 = vmatpush2.bf16.msra.mxu0 0
      %510 = vmatprep.subr.bf16.mxu0 0
      %511 = vmatpush2.bf16.msra.mxu0 0
      %512 = vmatprep.subr.bf16.mxu0 0
      %513 = vmatpush2.bf16.msra.mxu0 0
      %514 = vmatprep.subr.bf16.mxu0 0
      %515 = vmatpush2.bf16.msra.mxu0 0
      %516 = vmatprep.subr.bf16.mxu0 0
      %517 = vmatpush2.bf16.msra.mxu0 0
      %518 = vmatprep.subr.bf16.mxu0 0
      %519 = vmatpush2.bf16.msra.mxu0 0
      %520 = vmatprep.subr.bf16.mxu0 0
      %521 = vmatpush2.bf16.msra.mxu0 0
      %522 = vmatprep.mubr.bf16.mxu0 0
      %523 = vmatmul.mubr.bf16.gmra.mxu0 %v485
      %v524 = vpop.f32.mrf.mxu0
      %v525 = vadd.f32 0.0, %v524
      %v526 = vpop.f32.mrf.mxu0
      %v527 = vpop.f32.mrf.mxu0
      %v528 = vpop.f32.mrf.mxu0
      %529 = vdwg.mxu0
      %v530 = vpack.c.bf16 %v525, %v525
      %v532 = vunpack.c.l.b16 %v530
      %v533 = vpack.c.b16 %v532, %v532
      %534 = vrot.lane.b32.xlu0 %v533, 8
      %v535 = vpop.permute.xlu0 %534
      %vm537 = vcmask 126016
      %538 = vst.msk [vmem:[%s271] sm:$0xf] %vm537, %v535
      %v539 = vld [vmem:[%s253] sm:$0xf]
      %v540 = vld [vmem:[%s257] sm:$0xf]
      %v541 = vld [vmem:[%s261] sm:$0xf]
      %v543 = vunpack.c.l.b16 %v539
      %v544 = vpack.c.b16 %v543, %v543
      %545 = vrot.lane.b32.xlu0 %v544, 112
      %v546 = vpop.permute.xlu0 %545
      %v548 = vunpack.c.l.b16 %v540
      %v549 = vpack.c.b16 %v548, %v548
      %550 = vrot.lane.b32.xlu0 %v549, 80
      %v551 = vpop.permute.xlu0 %550
      %v553 = vsel %vm290, %v546, 0
      %v556 = vsel %vm290, %v551, 0
      %558 = vmatprep.subr.bf16.mxu0 0
      %559 = vmatpush1.bf16.xpose.msra.mxu0 0
      %560 = vmatprep.subr.bf16.mxu0 0
      %561 = vmatpush1.bf16.xpose.msra.mxu0 0
      %562 = vmatprep.subr.bf16.mxu0 0
      %563 = vmatpush1.bf16.xpose.msra.mxu0 0
      %564 = vmatprep.subr.bf16.mxu0 0
      %565 = vmatpush1.bf16.xpose.msra.mxu0 0
      %566 = vmatprep.subr.bf16.mxu0 0
      %567 = vmatpush1.bf16.xpose.msra.mxu0 0
      %568 = vmatprep.subr.bf16.mxu0 0
      %569 = vmatpush1.bf16.xpose.msra.mxu0 0
      %570 = vmatprep.subr.bf16.mxu0 0
      %571 = vmatpush1.bf16.xpose.msra.mxu0 0
      %572 = vmatprep.subr.bf16.mxu0 0
      %573 = vmatpush1.bf16.xpose.msra.mxu0 %v556
      %574 = vmatprep.subr.bf16.mxu0 0
      %575 = vmatpush2.bf16.xpose.msra.mxu0 0
      %576 = vmatprep.subr.bf16.mxu0 0
      %577 = vmatpush2.bf16.xpose.msra.mxu0 0
      %578 = vmatprep.subr.bf16.mxu0 0
      %579 = vmatpush2.bf16.xpose.msra.mxu0 0
      %580 = vmatprep.subr.bf16.mxu0 0
      %581 = vmatpush2.bf16.xpose.msra.mxu0 0
      %582 = vmatprep.subr.bf16.mxu0 0
      %583 = vmatpush2.bf16.xpose.msra.mxu0 0
      %584 = vmatprep.subr.bf16.mxu0 0
      %585 = vmatpush2.bf16.xpose.msra.mxu0 0
      %586 = vmatprep.subr.bf16.mxu0 0
      %587 = vmatpush2.bf16.xpose.msra.mxu0 0
      %588 = vmatprep.subr.bf16.mxu0 0
      %589 = vmatpush2.bf16.xpose.msra.mxu0 0
      %590 = vmatprep.mubr.bf16.mxu0 0
      %591 = vmatmul.mubr.bf16.gmra.mxu0 %v553
      %v592 = vpop.f32.mrf.mxu0
      %v593 = vadd.f32 0.0, %v592
      %v594 = vpop.f32.mrf.mxu0
      %v595 = vpop.f32.mrf.mxu0
      %v596 = vpop.f32.mrf.mxu0
      %597 = vdwg.mxu0
      %v598 = vmul.f32 %v593, 0.35355338
      %v599 = vadd.f32 %v598, %v280
      %v600 = vsel %vm290, %v599, -inf
      %601 = vmax.xlane.f32.xlu0 %v600
      %v602 = vpop.xlane.xlu0 %601
      %v603 = vsub.f32 %v599, %v602
      %v604 = vmul.f32 %v603, 1.442695
      %v605 = vpow.pop %v604
      %v606 = vsel %vm290, %v605, 0.0
      %607 = vadd.xlane.f32.xlu0 %v606
      %v608 = vpop.xlane.xlu0 %607
      %v609 = vrcp.pop %v608
      %v610 = vmul.f32 %v605, %v609
      %v611 = vpack.c.bf16 %v610, %v610
      %v613 = vunpack.c.l.b16 %v541
      %v614 = vpack.c.b16 %v613, %v613
      %615 = vrot.lane.b32.xlu0 %v614, 48
      %v616 = vpop.permute.xlu0 %615
      %v618 = vsel %vm290, %v611, 0
      %v621 = vsel %vm359, %v616, 0
      %623 = vmatprep.subr.bf16.mxu0 0
      %624 = vmatpush1.bf16.msra.mxu0 0
      %625 = vmatprep.subr.bf16.mxu0 0
      %626 = vmatpush1.bf16.msra.mxu0 0
      %627 = vmatprep.subr.bf16.mxu0 0
      %628 = vmatpush1.bf16.msra.mxu0 0
      %629 = vmatprep.subr.bf16.mxu0 0
      %630 = vmatpush1.bf16.msra.mxu0 0
      %631 = vmatprep.subr.bf16.mxu0 0
      %632 = vmatpush1.bf16.msra.mxu0 0
      %633 = vmatprep.subr.bf16.mxu0 0
      %634 = vmatpush1.bf16.msra.mxu0 0
      %635 = vmatprep.subr.bf16.mxu0 0
      %636 = vmatpush1.bf16.msra.mxu0 0
      %637 = vmatprep.subr.bf16.mxu0 0
      %638 = vmatpush1.bf16.msra.mxu0 %v621
      %639 = vmatprep.subr.bf16.mxu0 0
      %640 = vmatpush2.bf16.msra.mxu0 0
      %641 = vmatprep.subr.bf16.mxu0 0
      %642 = vmatpush2.bf16.msra.mxu0 0
      %643 = vmatprep.subr.bf16.mxu0 0
      %644 = vmatpush2.bf16.msra.mxu0 0
      %645 = vmatprep.subr.bf16.mxu0 0
      %646 = vmatpush2.bf16.msra.mxu0 0
      %647 = vmatprep.subr.bf16.mxu0 0
      %648 = vmatpush2.bf16.msra.mxu0 0
      %649 = vmatprep.subr.bf16.mxu0 0
      %650 = vmatpush2.bf16.msra.mxu0 0
      %651 = vmatprep.subr.bf16.mxu0 0
      %652 = vmatpush2.bf16.msra.mxu0 0
      %653 = vmatprep.subr.bf16.mxu0 0
      %654 = vmatpush2.bf16.msra.mxu0 0
      %655 = vmatprep.mubr.bf16.mxu0 0
      %656 = vmatmul.mubr.bf16.gmra.mxu0 %v618
      %v657 = vpop.f32.mrf.mxu0
      %v658 = vadd.f32 0.0, %v657
      %v659 = vpop.f32.mrf.mxu0
      %v660 = vpop.f32.mrf.mxu0
      %v661 = vpop.f32.mrf.mxu0
      %662 = vdwg.mxu0
      %v663 = vpack.c.bf16 %v658, %v658
      %v665 = vunpack.c.l.b16 %v663
      %v666 = vpack.c.b16 %v665, %v665
      %667 = vrot.lane.b32.xlu0 %v666, 16
      %v668 = vpop.permute.xlu0 %667
      %vm670 = vcmask 191616
      %671 = vst.msk [vmem:[%s271] sm:$0xf] %vm670, %v668
      %v672 = vld [vmem:[%s253] sm:$0xf]
      %v673 = vld [vmem:[%s257] sm:$0xf]
      %v674 = vld [vmem:[%s261] sm:$0xf]
      %v676 = vunpack.c.l.b16 %v672
      %v677 = vpack.c.b16 %v676, %v676
      %678 = vrot.lane.b32.xlu0 %v677, 104
      %v679 = vpop.permute.xlu0 %678
      %v681 = vunpack.c.l.b16 %v673
      %v682 = vpack.c.b16 %v681, %v681
      %683 = vrot.lane.b32.xlu0 %v682, 72
      %v684 = vpop.permute.xlu0 %683
      %v686 = vsel %vm290, %v679, 0
      %v689 = vsel %vm290, %v684, 0
      %691 = vmatprep.subr.bf16.mxu0 0
      %692 = vmatpush1.bf16.xpose.msra.mxu0 0
      %693 = vmatprep.subr.bf16.mxu0 0
      %694 = vmatpush1.bf16.xpose.msra.mxu0 0
      %695 = vmatprep.subr.bf16.mxu0 0
      %696 = vmatpush1.bf16.xpose.msra.mxu0 0
      %697 = vmatprep.subr.bf16.mxu0 0
      %698 = vmatpush1.bf16.xpose.msra.mxu0 0
      %699 = vmatprep.subr.bf16.mxu0 0
      %700 = vmatpush1.bf16.xpose.msra.mxu0 0
      %701 = vmatprep.subr.bf16.mxu0 0
      %702 = vmatpush1.bf16.xpose.msra.mxu0 0
      %703 = vmatprep.subr.bf16.mxu0 0
      %704 = vmatpush1.bf16.xpose.msra.mxu0 0
      %705 = vmatprep.subr.bf16.mxu0 0
      %706 = vmatpush1.bf16.xpose.msra.mxu0 %v689
      %707 = vmatprep.subr.bf16.mxu0 0
      %708 = vmatpush2.bf16.xpose.msra.mxu0 0
      %709 = vmatprep.subr.bf16.mxu0 0
      %710 = vmatpush2.bf16.xpose.msra.mxu0 0
      %711 = vmatprep.subr.bf16.mxu0 0
      %712 = vmatpush2.bf16.xpose.msra.mxu0 0
      %713 = vmatprep.subr.bf16.mxu0 0
      %714 = vmatpush2.bf16.xpose.msra.mxu0 0
      %715 = vmatprep.subr.bf16.mxu0 0
      %716 = vmatpush2.bf16.xpose.msra.mxu0 0
      %717 = vmatprep.subr.bf16.mxu0 0
      %718 = vmatpush2.bf16.xpose.msra.mxu0 0
      %719 = vmatprep.subr.bf16.mxu0 0
      %720 = vmatpush2.bf16.xpose.msra.mxu0 0
      %721 = vmatprep.subr.bf16.mxu0 0
      %722 = vmatpush2.bf16.xpose.msra.mxu0 0
      %723 = vmatprep.mubr.bf16.mxu0 0
      %724 = vmatmul.mubr.bf16.gmra.mxu0 %v686
      %v725 = vpop.f32.mrf.mxu0
      %v726 = vadd.f32 0.0, %v725
      %v727 = vpop.f32.mrf.mxu0
      %v728 = vpop.f32.mrf.mxu0
      %v729 = vpop.f32.mrf.mxu0
      %730 = vdwg.mxu0
      %v731 = vmul.f32 %v726, 0.35355338
      %v732 = vadd.f32 %v731, %v280
      %v733 = vsel %vm290, %v732, -inf
      %734 = vmax.xlane.f32.xlu0 %v733
      %v735 = vpop.xlane.xlu0 %734
      %v736 = vsub.f32 %v732, %v735
      %v737 = vmul.f32 %v736, 1.442695
      %v738 = vpow.pop %v737
      %v739 = vsel %vm290, %v738, 0.0
      %740 = vadd.xlane.f32.xlu0 %v739
      %v741 = vpop.xlane.xlu0 %740
      %v742 = vrcp.pop %v741
      %v743 = vmul.f32 %v738, %v742
      %v744 = vpack.c.bf16 %v743, %v743
      %v746 = vunpack.c.l.b16 %v674
      %v747 = vpack.c.b16 %v746, %v746
      %748 = vrot.lane.b32.xlu0 %v747, 40
      %v749 = vpop.permute.xlu0 %748
      %v751 = vsel %vm290, %v744, 0
      %v754 = vsel %vm359, %v749, 0
      %756 = vmatprep.subr.bf16.mxu0 0
      %757 = vmatpush1.bf16.msra.mxu0 0
      %758 = vmatprep.subr.bf16.mxu0 0
      %759 = vmatpush1.bf16.msra.mxu0 0
      %760 = vmatprep.subr.bf16.mxu0 0
      %761 = vmatpush1.bf16.msra.mxu0 0
      %762 = vmatprep.subr.bf16.mxu0 0
      %763 = vmatpush1.bf16.msra.mxu0 0
      %764 = vmatprep.subr.bf16.mxu0 0
      %765 = vmatpush1.bf16.msra.mxu0 0
      %766 = vmatprep.subr.bf16.mxu0 0
      %767 = vmatpush1.bf16.msra.mxu0 0
      %768 = vmatprep.subr.bf16.mxu0 0
      %769 = vmatpush1.bf16.msra.mxu0 0
      %770 = vmatprep.subr.bf16.mxu0 0
      %771 = vmatpush1.bf16.msra.mxu0 %v754
      %772 = vmatprep.subr.bf16.mxu0 0
      %773 = vmatpush2.bf16.msra.mxu0 0
      %774 = vmatprep.subr.bf16.mxu0 0
      %775 = vmatpush2.bf16.msra.mxu0 0
      %776 = vmatprep.subr.bf16.mxu0 0
      %777 = vmatpush2.bf16.msra.mxu0 0
      %778 = vmatprep.subr.bf16.mxu0 0
      %779 = vmatpush2.bf16.msra.mxu0 0
      %780 = vmatprep.subr.bf16.mxu0 0
      %781 = vmatpush2.bf16.msra.mxu0 0
      %782 = vmatprep.subr.bf16.mxu0 0
      %783 = vmatpush2.bf16.msra.mxu0 0
      %784 = vmatprep.subr.bf16.mxu0 0
      %785 = vmatpush2.bf16.msra.mxu0 0
      %786 = vmatprep.subr.bf16.mxu0 0
      %787 = vmatpush2.bf16.msra.mxu0 0
      %788 = vmatprep.mubr.bf16.mxu0 0
      %789 = vmatmul.mubr.bf16.gmra.mxu0 %v751
      %v790 = vpop.f32.mrf.mxu0
      %v791 = vadd.f32 0.0, %v790
      %v792 = vpop.f32.mrf.mxu0
      %v793 = vpop.f32.mrf.mxu0
      %v794 = vpop.f32.mrf.mxu0
      %795 = vdwg.mxu0
      %v796 = vpack.c.bf16 %v791, %v791
      %v798 = vunpack.c.l.b16 %v796
      %v799 = vpack.c.b16 %v798, %v798
      %800 = vrot.lane.b32.xlu0 %v799, 24
      %v801 = vpop.permute.xlu0 %800
      %vm803 = vcmask 257216
      %804 = vst.msk [vmem:[%s271] sm:$0xf] %vm803, %v801
      %p805 = scmp.lt.s32.totalorder %s19, 1
      %s806 = scalar_select %p805, %s19, 1
      %p807 = scmp.lt.s32.totalorder %s20, 0
      %s808 = scalar_select %p807, %s20, 0
      %s809 = sadd.s32 %s808, %s806
      %s810 = smul.addr %s809, 4
      %s811 = scalar_lea.vmem %s4, %s810
      // Predicated region
      $region37: #{_lambda_.32} parent=35 // pred_check
        %p812 = pneg %p153
      $region38: #{_lambda_.32} parent=35 // pred_check_branch
        %814 = sbr.rel (%p812) target = $region40
      $region39: #{_lambda_.32} parent=35 // pred_region
        _
      $region40: #{_lambda_.32} parent=35 // pred_fallthru
        _
    $region36: #{_lambda_.32} parent=5 // pred_fallthru
      _
    %p815 = scmp.le.s32.totalorder 2, %s10
    // Predicated region
    $region41: #{_lambda_.32} parent=5 // pred_check
      %p816 = pneg %p815
    $region42: #{_lambda_.32} parent=5 // pred_check_branch
      %818 = sbr.rel (%p816) target = $region44
    $region43: #{_lambda_.32} parent=5 // pred_region
      %s819 = ssub.s32 %s10, 2
      // Predicated region
      $region45: #{_lambda_.32} parent=43 // pred_check
        %p820 = pneg %p159
      $region46: #{_lambda_.32} parent=43 // pred_check_branch
        %822 = sbr.rel (%p820) target = $region48
      $region47: #{_lambda_.32} parent=43 // pred_region
        %p823 = scmp.lt.s32.totalorder %s21, 1
        %s824 = scalar_select %p823, %s21, 1
        %p825 = scmp.lt.s32.totalorder %s22, 0
        %s826 = scalar_select %p825, %s22, 0
        %s827 = sadd.s32 %s826, %s824
        %s828 = smul.addr %s827, 4
        %s829 = scalar_lea.vmem %s4, %s828
      $region48: #{_lambda_.32} parent=43 // pred_fallthru
        _
    $region44: #{_lambda_.32} parent=5 // pred_fallthru
      _
  $region6: #{_lambda_.32} parent=0 // loop_footer
    %s14 = sadd.s32 1, %s10
  $region7: #{_lambda_.32} parent=0 // loop_footer_branch
    %9 = sbr.rel target = $region3
  $region8: #{_lambda_.32} parent=0 // loop_exit
    _

// kernel: _lambda_.35
$region0: #{_lambda_.35}
  #allocation0 [shape = 'u32[]', space=smem, size = 0x4, offset = 0x4, fixed_abs, tag = 'smem constant byte address 0x4 - core index']
  #allocation1 [shape = 'u32[144,128]{1,0:T(1,128)}', space=vmem, size = 0x12000, scoped, tag = 'internal scratch']
  #allocation2 [shape = 'f32[16,32]{1,0:T(8,128)}', space=vmem, size = 0x2000, scoped, tag = 'scratch operand']
  %s0 = inlined_call_operand.vmem [shape: bf16[16,64], index: 0, kind: input, shape index: {}]
  %s1 = inlined_call_operand.vmem [shape: bf16[64,32], index: 1, kind: input, shape index: {}]
  %s2 = inlined_call_operand.vmem [shape: f32[1,32], index: 2, kind: input, shape index: {}]
  %s3 = inlined_call_operand.vmem [shape: bf16[16,32], index: 3, kind: input, shape index: {}]
  %s4 = inlined_call_operand.vmem [shape: f32[1,32], index: 4, kind: input, shape index: {}]
  %s5 = inlined_call_operand.vmem [shape: f32[1,32], index: 5, kind: input, shape index: {}]
  %s6 = inlined_call_operand.vmem [shape: bf16[16,32], index: 6, kind: output, shape index: {}]
  %s7 = sld [smem:[#allocation0]]
  $region42: #{_lambda_.35} parent=0
    _
  %s9 = ssub.s32 1, %s7
  %s10 = scalar_select 0, %s9, %s7
  // Predicated region
  $region2: #{_lambda_.35} parent=0 // pred_check
    _
  $region3: #{_lambda_.35} parent=0 // pred_check_branch
    %12 = sbr.rel (0) target = $region5
  $region4: #{_lambda_.35} parent=0 // pred_region
    _
  $region5: #{_lambda_.35} parent=0 // pred_fallthru
    _
  // Predicated region
  $region6: #{_lambda_.35} parent=0 // pred_check
    _
  $region7: #{_lambda_.35} parent=0 // pred_check_branch
    %14 = sbr.rel (0) target = $region9
  $region8: #{_lambda_.35} parent=0 // pred_region
    _
  $region9: #{_lambda_.35} parent=0 // pred_fallthru
    _
  // Predicated region
  $region10: #{_lambda_.35} parent=0 // pred_check
    _
  $region11: #{_lambda_.35} parent=0 // pred_check_branch
    %16 = sbr.rel (0) target = $region13
  $region12: #{_lambda_.35} parent=0 // pred_region
    _
  $region13: #{_lambda_.35} parent=0 // pred_fallthru
    _
  // Predicated region
  $region14: #{_lambda_.35} parent=0 // pred_check
    _
  $region15: #{_lambda_.35} parent=0 // pred_check_branch
    %18 = sbr.rel (0) target = $region17
  $region16: #{_lambda_.35} parent=0 // pred_region
    _
  $region17: #{_lambda_.35} parent=0 // pred_fallthru
    _
  // Predicated region
  $region18: #{_lambda_.35} parent=0 // pred_check
    _
  $region19: #{_lambda_.35} parent=0 // pred_check_branch
    %20 = sbr.rel (0) target = $region21
  $region20: #{_lambda_.35} parent=0 // pred_region
    _
  $region21: #{_lambda_.35} parent=0 // pred_fallthru
    _
  // Predicated region
  $region22: #{_lambda_.35} parent=0 // pred_check
    _
  $region23: #{_lambda_.35} parent=0 // pred_check_branch
    %22 = sbr.rel (0) target = $region25
  $region24: #{_lambda_.35} parent=0 // pred_region
    _
  $region25: #{_lambda_.35} parent=0 // pred_fallthru
    _
  %p24 = scmp.eq.s32.totalorder 0, 0
  // Predicated region
  $region26: #{_lambda_.35} parent=0 // pred_check
    %p25 = pneg %p24
  $region27: #{_lambda_.35} parent=0 // pred_check_branch
    %27 = sbr.rel (%p25) target = $region29
  $region28: #{_lambda_.35} parent=0 // pred_region
    %vm28 = vcmask 261120
    %29 = vst.msk [vmem:[#allocation2] sm:$0xff] %vm28, 0.0
    %30 = vst.msk [vmem:[#allocation2 + $0x8] sm:$0xff] %vm28, 0.0
  $region29: #{_lambda_.35} parent=0 // pred_fallthru
    _
  %v31 = vld [vmem:[#allocation2] sm:$0xff]
  %v32 = vld [vmem:[#allocation2 + $0x8] sm:$0xff]
  %v33 = vld [vmem:[%s0] sm:$0xf]
  %v34 = vld [vmem:[%s0 + $0x4] sm:$0xf]
  %v35 = vld [vmem:[%s1] sm:$0xf]
  %v36 = vld [vmem:[%s1 + $0x4] sm:$0xf]
  %v37 = vld [vmem:[%s1 + $0x8] sm:$0xf]
  %v38 = vld [vmem:[%s1 + $0xc] sm:$0xf]
  %v39 = vld [vmem:[%s1 + $0x10] sm:$0xf]
  %v40 = vld [vmem:[%s1 + $0x14] sm:$0xf]
  %v41 = vld [vmem:[%s1 + $0x18] sm:$0xf]
  %v42 = vld [vmem:[%s1 + $0x1c] sm:$0xf]
  %v45 = vunpack.c.l.b16 %v33
  %v46 = vunpack.c.l.b16 %v34
  %v47 = vpack.c.b16 %v46, %v45
  %v56 = vunpack.c.l.b16 %v35
  %v57 = vunpack.c.l.b16 %v36
  %v58 = vunpack.c.l.b16 %v37
  %v59 = vunpack.c.l.b16 %v38
  %v60 = vunpack.c.l.b16 %v39
  %v61 = vunpack.c.l.b16 %v40
  %v62 = vunpack.c.l.b16 %v41
  %v63 = vunpack.c.l.b16 %v42
  %v64 = vpack.c.b16 %v57, %v56
  %v65 = vpack.c.b16 %v59, %v58
  %v66 = vpack.c.b16 %v61, %v60
  %v67 = vpack.c.b16 %v63, %v62
  %vm72 = vcmask 523264
  %v74 = vsel %vm72, %v47, 0
  %76 = vmatprep.subr.bf16.mxu0 0
  %77 = vmatpush1.bf16.msra.mxu0 0
  %78 = vmatprep.subr.bf16.mxu0 0
  %79 = vmatpush1.bf16.msra.mxu0 0
  %80 = vmatprep.subr.bf16.mxu0 0
  %81 = vmatpush1.bf16.msra.mxu0 0
  %82 = vmatprep.subr.bf16.mxu0 0
  %83 = vmatpush1.bf16.msra.mxu0 0
  %84 = vmatprep.subr.bf16.mxu0 0
  %85 = vmatpush1.bf16.msra.mxu0 %v67
  %86 = vmatprep.subr.bf16.mxu0 0
  %87 = vmatpush1.bf16.msra.mxu0 %v66
  %88 = vmatprep.subr.bf16.mxu0 0
  %89 = vmatpush1.bf16.msra.mxu0 %v65
  %90 = vmatprep.subr.bf16.mxu0 0
  %91 = vmatpush1.bf16.msra.mxu0 %v64
  %92 = vmatprep.subr.bf16.mxu0 0
  %93 = vmatpush2.bf16.msra.mxu0 0
  %94 = vmatprep.subr.bf16.mxu0 0
  %95 = vmatpush2.bf16.msra.mxu0 0
  %96 = vmatprep.subr.bf16.mxu0 0
  %97 = vmatpush2.bf16.msra.mxu0 0
  %98 = vmatprep.subr.bf16.mxu0 0
  %99 = vmatpush2.bf16.msra.mxu0 0
  %100 = vmatprep.subr.bf16.mxu0 0
  %101 = vmatpush2.bf16.msra.mxu0 0
  %102 = vmatprep.subr.bf16.mxu0 0
  %103 = vmatpush2.bf16.msra.mxu0 0
  %104 = vmatprep.subr.bf16.mxu0 0
  %105 = vmatpush2.bf16.msra.mxu0 0
  %106 = vmatprep.subr.bf16.mxu0 0
  %107 = vmatpush2.bf16.msra.mxu0 0
  %108 = vmatprep.mubr.bf16.mxu0 0
  %109 = vmatmul.mubr.bf16.gmra.mxu0 %v74
  %v110 = vpop.f32.mrf.mxu0
  %v111 = vadd.f32 0.0, %v110
  %v112 = vpop.f32.mrf.mxu0
  %v113 = vpop.f32.mrf.mxu0
  %v114 = vadd.f32 0.0, %v113
  %v115 = vpop.f32.mrf.mxu0
  %116 = vdwg.mxu0
  %v117 = vadd.f32 %v31, %v111
  %v118 = vadd.f32 %v32, %v114
  %vm119 = vcmask 261120
  %120 = vst.msk [vmem:[#allocation2] sm:$0xff] %vm119, %v117
  %121 = vst.msk [vmem:[#allocation2 + $0x8] sm:$0xff] %vm119, %v118
  // Predicated region
  $region30: #{_lambda_.35} parent=0 // pred_check
    %p122 = pneg %p24
  $region31: #{_lambda_.35} parent=0 // pred_check_branch
    %124 = sbr.rel (%p122) target = $region33
  $region32: #{_lambda_.35} parent=0 // pred_region
    %v125 = vld [vmem:[#allocation2] sm:$0xff]
    %v126 = vld [vmem:[#allocation2 + $0x8] sm:$0xff]
    %v127 = vld [vmem:[%s2] sm:$0x1]
    %v129 = vlaneseq
    %v130 = vshrl.u32 %v129, 7
    %v131 = vsub.s32 0, %v130
    %v132 = vrot.slane %v127, %v131
    %v134 = vadd.f32 %v125, %v132
    %v135 = vadd.f32 %v126, %v132
    %v136 = vld [vmem:[%s3] sm:$0xf]
    %v137 = vld [vmem:[%s3 + $0x4] sm:$0xf]
    %v138 = vunpack.c.l.bf16 %v136
    %v139 = vunpack.c.l.bf16 %v137
    %v140 = vadd.f32 %v134, %v138
    %v141 = vadd.f32 %v135, %v139
    %v142 = vsel %vm119, %v140, 0.0
    %143 = vadd.xlane.f32.xlu0 %v142
    %v144 = vpop.xlane.xlu0 %143
    %v145 = vsel %vm119, %v141, 0.0
    %146 = vadd.xlane.f32.xlu0 %v145
    %v147 = vpop.xlane.xlu0 %146
    %v148 = vrcp.pop 32.0
    %v149 = vmul.f32 %v144, %v148
    %v150 = vmul.f32 %v147, %v148
    %v151 = vsub.f32 %v140, %v149
    %v152 = vsub.f32 %v141, %v150
    %v153 = vmul.f32 %v151, %v151
    %v154 = vmul.f32 %v152, %v152
    %v155 = vsel %vm119, %v153, 0.0
    %156 = vadd.xlane.f32.xlu0 %v155
    %v157 = vpop.xlane.xlu0 %156
    %v158 = vsel %vm119, %v154, 0.0
    %159 = vadd.xlane.f32.xlu0 %v158
    %v160 = vpop.xlane.xlu0 %159
    %v161 = vmul.f32 %v157, %v148
    %v162 = vmul.f32 %v160, %v148
    %v163 = vadd.f32 %v161, 1e-05
    %v164 = vadd.f32 %v162, 1e-05
    %v165 = vrsqrt.pop %v163
    %v166 = vrsqrt.pop %v164
    %v167 = vmul.f32 %v151, %v165
    %v168 = vmul.f32 %v152, %v166
    %v169 = vld [vmem:[%s4] sm:$0x1]
    %v171 = vlaneseq
    %v172 = vshrl.u32 %v171, 7
    %v173 = vsub.s32 0, %v172
    %v174 = vrot.slane %v169, %v173
    %v176 = vmul.f32 %v167, %v174
    %v177 = vmul.f32 %v168, %v174
    %v178 = vld [vmem:[%s5] sm:$0x1]
    %v180 = vlaneseq
    %v181 = vshrl.u32 %v180, 7
    %v182 = vsub.s32 0, %v181
    %v183 = vrot.slane %v178, %v182
    %v185 = vadd.f32 %v176, %v183
    %v186 = vadd.f32 %v177, %v183
    %v187 = vpack.c.bf16 %v186, %v185
    %v189 = vunpack.c.l.b16 %v187
    %v190 = vunpack.c.h.b16 %v187
    %v191 = vpack.c.b16 %v189, %v189
    %v192 = vpack.c.b16 %v190, %v190
    %vm195 = vcmask 257024
    %196 = vst.msk [vmem:[%s6] sm:$0xf] %vm195, %v191
    %197 = vst.msk [vmem:[%s6 + $0x4] sm:$0xf] %vm195, %v192
  $region33: #{_lambda_.35} parent=0 // pred_fallthru
    _
  // Predicated region
  $region34: #{_lambda_.35} parent=0 // pred_check
    _
  $region35: #{_lambda_.35} parent=0 // pred_check_branch
    %199 = sbr.rel (0) target = $region37
  $region36: #{_lambda_.35} parent=0 // pred_region
    _
  $region37: #{_lambda_.35} parent=0 // pred_fallthru
    _
  // Predicated region
  $region38: #{_lambda_.35} parent=0 // pred_check
    _
  $region39: #{_lambda_.35} parent=0 // pred_check_branch
    %201 = sbr.rel (0) target = $region41
  $region40: #{_lambda_.35} parent=0 // pred_region
    _
  $region41: #{_lambda_.35} parent=0 // pred_fallthru
    _

// kernel: _lambda_.46
$region0: #{_lambda_.46}
  #allocation0 [shape = 'u32[]', space=smem, size = 0x4, offset = 0x4, fixed_abs, tag = 'smem constant byte address 0x4 - core index']
  #allocation1 [shape = 'u32[144,128]{1,0:T(1,128)}', space=vmem, size = 0x12000, scoped, tag = 'internal scratch']
  #allocation2 [shape = 'f32[16,64]{1,0:T(8,128)}', space=vmem, size = 0x2000, scoped, tag = 'scratch operand']
  %s0 = inlined_call_operand.vmem [shape: bf16[16,32], index: 0, kind: input, shape index: {}]
  %s1 = inlined_call_operand.vmem [shape: bf16[32,64], index: 1, kind: input, shape index: {}]
  %s2 = inlined_call_operand.vmem [shape: f32[1,64], index: 2, kind: input, shape index: {}]
  %s3 = inlined_call_operand.vmem [shape: bf16[16,64], index: 3, kind: output, shape index: {}]
  %s4 = sld [smem:[#allocation0]]
  $region30: #{_lambda_.46} parent=0
    _
  %s6 = ssub.s32 1, %s4
  %s7 = scalar_select 0, %s6, %s4
  // Predicated region
  $region2: #{_lambda_.46} parent=0 // pred_check
    _
  $region3: #{_lambda_.46} parent=0 // pred_check_branch
    %9 = sbr.rel (0) target = $region5
  $region4: #{_lambda_.46} parent=0 // pred_region
    _
  $region5: #{_lambda_.46} parent=0 // pred_fallthru
    _
  // Predicated region
  $region6: #{_lambda_.46} parent=0 // pred_check
    _
  $region7: #{_lambda_.46} parent=0 // pred_check_branch
    %11 = sbr.rel (0) target = $region9
  $region8: #{_lambda_.46} parent=0 // pred_region
    _
  $region9: #{_lambda_.46} parent=0 // pred_fallthru
    _
  // Predicated region
  $region10: #{_lambda_.46} parent=0 // pred_check
    _
  $region11: #{_lambda_.46} parent=0 // pred_check_branch
    %13 = sbr.rel (0) target = $region13
  $region12: #{_lambda_.46} parent=0 // pred_region
    _
  $region13: #{_lambda_.46} parent=0 // pred_fallthru
    _
  %p15 = scmp.eq.s32.totalorder 0, 0
  // Predicated region
  $region14: #{_lambda_.46} parent=0 // pred_check
    %p16 = pneg %p15
  $region15: #{_lambda_.46} parent=0 // pred_check_branch
    %18 = sbr.rel (%p16) target = $region17
  $region16: #{_lambda_.46} parent=0 // pred_region
    %vm19 = vcmask 523264
    %20 = vst.msk [vmem:[#allocation2] sm:$0xff] %vm19, 0.0
    %21 = vst.msk [vmem:[#allocation2 + $0x8] sm:$0xff] %vm19, 0.0
  $region17: #{_lambda_.46} parent=0 // pred_fallthru
    _
  %v22 = vld [vmem:[#allocation2] sm:$0xff]
  %v23 = vld [vmem:[#allocation2 + $0x8] sm:$0xff]
  %v24 = vld [vmem:[%s0] sm:$0xf]
  %v25 = vld [vmem:[%s0 + $0x4] sm:$0xf]
  %v26 = vld [vmem:[%s1] sm:$0xf]
  %v27 = vld [vmem:[%s1 + $0x4] sm:$0xf]
  %v28 = vld [vmem:[%s1 + $0x8] sm:$0xf]
  %v29 = vld [vmem:[%s1 + $0xc] sm:$0xf]
  %v32 = vunpack.c.l.b16 %v24
  %v33 = vunpack.c.l.b16 %v25
  %v34 = vpack.c.b16 %v33, %v32
  %v39 = vunpack.c.l.b16 %v26
  %v40 = vunpack.c.l.b16 %v27
  %v41 = vunpack.c.l.b16 %v28
  %v42 = vunpack.c.l.b16 %v29
  %v43 = vpack.c.b16 %v40, %v39
  %v44 = vpack.c.b16 %v42, %v41
  %vm47 = vcmask 261120
  %v49 = vsel %vm47, %v34, 0
  %51 = vmatprep.subr.bf16.mxu0 0
  %52 = vmatpush1.bf16.msra.mxu0 0
  %53 = vmatprep.subr.bf16.mxu0 0
  %54 = vmatpush1.bf16.msra.mxu0 0
  %55 = vmatprep.subr.bf16.mxu0 0
  %56 = vmatpush1.bf16.msra.mxu0 0
  %57 = vmatprep.subr.bf16.mxu0 0
  %58 = vmatpush1.bf16.msra.mxu0 0
  %59 = vmatprep.subr.bf16.mxu0 0
  %60 = vmatpush1.bf16.msra.mxu0 0
  %61 = vmatprep.subr.bf16.mxu0 0
  %62 = vmatpush1.bf16.msra.mxu0 0
  %63 = vmatprep.subr.bf16.mxu0 0
  %64 = vmatpush1.bf16.msra.mxu0 %v44
  %65 = vmatprep.subr.bf16.mxu0 0
  %66 = vmatpush1.bf16.msra.mxu0 %v43
  %67 = vmatprep.subr.bf16.mxu0 0
  %68 = vmatpush2.bf16.msra.mxu0 0
  %69 = vmatprep.subr.bf16.mxu0 0
  %70 = vmatpush2.bf16.msra.mxu0 0
  %71 = vmatprep.subr.bf16.mxu0 0
  %72 = vmatpush2.bf16.msra.mxu0 0
  %73 = vmatprep.subr.bf16.mxu0 0
  %74 = vmatpush2.bf16.msra.mxu0 0
  %75 = vmatprep.subr.bf16.mxu0 0
  %76 = vmatpush2.bf16.msra.mxu0 0
  %77 = vmatprep.subr.bf16.mxu0 0
  %78 = vmatpush2.bf16.msra.mxu0 0
  %79 = vmatprep.subr.bf16.mxu0 0
  %80 = vmatpush2.bf16.msra.mxu0 0
  %81 = vmatprep.subr.bf16.mxu0 0
  %82 = vmatpush2.bf16.msra.mxu0 0
  %83 = vmatprep.mubr.bf16.mxu0 0
  %84 = vmatmul.mubr.bf16.gmra.mxu0 %v49
  %v85 = vpop.f32.mrf.mxu0
  %v86 = vadd.f32 0.0, %v85
  %v87 = vpop.f32.mrf.mxu0
  %v88 = vpop.f32.mrf.mxu0
  %v89 = vadd.f32 0.0, %v88
  %v90 = vpop.f32.mrf.mxu0
  %91 = vdwg.mxu0
  %v92 = vadd.f32 %v22, %v86
  %v93 = vadd.f32 %v23, %v89
  %vm94 = vcmask 523264
  %95 = vst.msk [vmem:[#allocation2] sm:$0xff] %vm94, %v92
  %96 = vst.msk [vmem:[#allocation2 + $0x8] sm:$0xff] %vm94, %v93
  // Predicated region
  $region18: #{_lambda_.46} parent=0 // pred_check
    %p97 = pneg %p15
  $region19: #{_lambda_.46} parent=0 // pred_check_branch
    %99 = sbr.rel (%p97) target = $region21
  $region20: #{_lambda_.46} parent=0 // pred_region
    %v100 = vld [vmem:[#allocation2] sm:$0xff]
    %v101 = vld [vmem:[#allocation2 + $0x8] sm:$0xff]
    %v102 = vld [vmem:[%s2] sm:$0x1]
    %v104 = vlaneseq
    %v105 = vshrl.u32 %v104, 7
    %v106 = vsub.s32 0, %v105
    %v107 = vrot.slane %v102, %v106
    %v109 = vadd.f32 %v100, %v107
    %v110 = vadd.f32 %v101, %v107
    %v111 = vpack.c.bf16 %v110, %v109
    %v113 = vunpack.c.l.b16 %v111
    %v114 = vunpack.c.h.b16 %v111
    %v115 = vpack.c.b16 %v113, %v113
    %v116 = vpack.c.b16 %v114, %v114
    %vm119 = vcmask 519168
    %120 = vst.msk [vmem:[%s3] sm:$0xf] %vm119, %v115
    %121 = vst.msk [vmem:[%s3 + $0x4] sm:$0xf] %vm119, %v116
  $region21: #{_lambda_.46} parent=0 // pred_fallthru
    _
  // Predicated region
  $region22: #{_lambda_.46} parent=0 // pred_check
    _
  $region23: #{_lambda_.46} parent=0 // pred_check_branch
    %123 = sbr.rel (0) target = $region25
  $region24: #{_lambda_.46} parent=0 // pred_region
    _
  $region25: #{_lambda_.46} parent=0 // pred_fallthru
    _
  // Predicated region
  $region26: #{_lambda_.46} parent=0 // pred_check
    _
  $region27: #{_lambda_.46} parent=0 // pred_check_branch
    %125 = sbr.rel (0) target = $region29
  $region28: #{_lambda_.46} parent=0 // pred_region
    _
  $region29: #{_lambda_.46} parent=0 // pred_fallthru
    _

// kernel: _lambda_.47
$region0: #{_lambda_.47}
  #allocation0 [shape = 'u32[]', space=smem, size = 0x4, offset = 0x4, fixed_abs, tag = 'smem constant byte address 0x4 - core index']
  #allocation1 [shape = 'u32[144,128]{1,0:T(1,128)}', space=vmem, size = 0x12000, scoped, tag = 'internal scratch']
  %s0 = inlined_call_operand.vmem [shape: bf16[2,8,32], index: 0, kind: input, shape index: {}]
  %s1 = inlined_call_operand.vmem [shape: bf16[2,8,64], index: 1, kind: input, shape index: {}, may-alias: {1,2}]
  %s2 = inlined_call_operand.vmem [shape: bf16[2,8,64], index: 2, kind: input, shape index: {}, may-alias: {1,2}]
  %s3 = inlined_call_operand.vmem [shape: f32[2,1,8], index: 3, kind: input, shape index: {}]
  %s4 = inlined_call_operand.vmem [shape: bf16[2,8,32], index: 4, kind: output, shape index: {}]
  %s5 = sld [smem:[#allocation0]]
  $region49: #{_lambda_.47} parent=0
    _
  %s7 = ssub.s32 1, %s5
  %s8 = scalar_select 0, %s7, %s5
  loop: start=0, step=1, limit=4
  $region2: #{_lambda_.47} parent=0 // loop_pre_header
    _
  $region3: #{_lambda_.47} parent=0 // loop_header
    %s10 = sphi 0, %s14
    %p11 = scmp.ge.s32.totalorder %s10, 4
    %s17 = sphi 0, %s29
    %s18 = sphi 0, %s25
    %s19 = sphi 0, %s17
    %s20 = sphi 0, %s18
    %s21 = sphi 0, %s19
    %s22 = sphi 0, %s20
    %s34 = sphi 0, %s36
    %s37 = sphi 0, %s34
    %s38 = sphi 0, %s37
    %s54 = sphi 0, %s38
    %s60 = sphi 0, %s62
    %s63 = sphi 0, %s60
    %s64 = sphi 0, %s63
    %s80 = sphi 0, %s64
    %s86 = sphi 0, %s88
    %s89 = sphi 0, %s86
    %s90 = sphi 0, %s89
    %s106 = sphi 0, %s90
    %s112 = sphi 0, %s114
    %s115 = sphi 0, %s112
    %s116 = sphi 0, %s115
    %s132 = sphi 0, %s116
    %s140 = sphi 0, %s142
    %s143 = sphi 0, %s140
    %s144 = sphi 0, %s143
    %s160 = sphi 0, %s144
  $region4: #{_lambda_.47} parent=0 // loop_header_branch
    %13 = sbr.rel (%p11) target = $region8
  $region5: #{_lambda_.47} parent=0 // loop_body
    %s15 = ssub.s32 %s10, 1
    %s16 = ssub.s32 %s10, 2
    %s23 = sadd.s32 1, %s18
    %p24 = scmp.ge.s32.totalorder %s23, 1
    %s25 = scalar_select %p24, 0, %s23
    %s26 = sadd.s32 1, %s17
    %s27 = scalar_select %p24, %s26, %s17
    %p28 = scmp.ge.s32.totalorder %s27, 2
    %s29 = scalar_select %p28, 0, %s27
    %s30 = ssub.s32 %s17, %s29
    %s31 = ssub.s32 %s18, %s25
    %s32 = sor.u32 %s30, %s31
    %p33 = scmp.eq.s32.totalorder %s32, 0
    %s35 = sadd.s32 %s34, 1
    %s36 = scalar_select %p33, %s34, %s35
    %p39 = pneg %p33
    %p40 = scmp.eq.s32.totalorder %s10, 1
    %p41 = por %p39, %p40
    %p42 = scmp.ne.s32.totalorder %s34, %s37
    %p43 = scmp.eq.s32.totalorder %s10, 0
    %p44 = por %p42, %p43
    %p45 = scmp.ne.s32.totalorder %s34, %s37
    %p46 = scmp.eq.s32.totalorder %s15, 1
    %p47 = por %p45, %p46
    %p48 = scmp.ne.s32.totalorder %s37, %s38
    %p49 = scmp.eq.s32.totalorder %s15, 0
    %p50 = por %p48, %p49
    %p51 = scmp.ne.s32.totalorder %s37, %s38
    %p52 = scmp.eq.s32.totalorder %s16, 1
    %p53 = por %p51, %p52
    %p55 = scmp.ne.s32.totalorder %s38, %s54
    %p56 = scmp.eq.s32.totalorder %s16, 0
    %p57 = por %p55, %p56
    %s58 = ssub.s32 %s17, %s29
    %p59 = scmp.eq.s32.totalorder %s58, 0
    %s61 = sadd.s32 %s60, 1
    %s62 = scalar_select %p59, %s60, %s61
    %p65 = pneg %p59
    %p66 = scmp.eq.s32.totalorder %s10, 1
    %p67 = por %p65, %p66
    %p68 = scmp.ne.s32.totalorder %s60, %s63
    %p69 = scmp.eq.s32.totalorder %s10, 0
    %p70 = por %p68, %p69
    %p71 = scmp.ne.s32.totalorder %s60, %s63
    %p72 = scmp.eq.s32.totalorder %s15, 1
    %p73 = por %p71, %p72
    %p74 = scmp.ne.s32.totalorder %s63, %s64
    %p75 = scmp.eq.s32.totalorder %s15, 0
    %p76 = por %p74, %p75
    %p77 = scmp.ne.s32.totalorder %s63, %s64
    %p78 = scmp.eq.s32.totalorder %s16, 1
    %p79 = por %p77, %p78
    %p81 = scmp.ne.s32.totalorder %s64, %s80
    %p82 = scmp.eq.s32.totalorder %s16, 0
    %p83 = por %p81, %p82
    %s84 = ssub.s32 %s17, %s29
    %p85 = scmp.eq.s32.totalorder %s84, 0
    %s87 = sadd.s32 %s86, 1
    %s88 = scalar_select %p85, %s86, %s87
    %p91 = pneg %p85
    %p92 = scmp.eq.s32.totalorder %s10, 1
    %p93 = por %p91, %p92
    %p94 = scmp.ne.s32.totalorder %s86, %s89
    %p95 = scmp.eq.s32.totalorder %s10, 0
    %p96 = por %p94, %p95
    %p97 = scmp.ne.s32.totalorder %s86, %s89
    %p98 = scmp.eq.s32.totalorder %s15, 1
    %p99 = por %p97, %p98
    %p100 = scmp.ne.s32.totalorder %s89, %s90
    %p101 = scmp.eq.s32.totalorder %s15, 0
    %p102 = por %p100, %p101
    %p103 = scmp.ne.s32.totalorder %s89, %s90
    %p104 = scmp.eq.s32.totalorder %s16, 1
    %p105 = por %p103, %p104
    %p107 = scmp.ne.s32.totalorder %s90, %s106
    %p108 = scmp.eq.s32.totalorder %s16, 0
    %p109 = por %p107, %p108
    %s110 = ssub.s32 %s17, %s29
    %p111 = scmp.eq.s32.totalorder %s110, 0
    %s113 = sadd.s32 %s112, 1
    %s114 = scalar_select %p111, %s112, %s113
    %p117 = pneg %p111
    %p118 = scmp.eq.s32.totalorder %s10, 1
    %p119 = por %p117, %p118
    %p120 = scmp.ne.s32.totalorder %s112, %s115
    %p121 = scmp.eq.s32.totalorder %s10, 0
    %p122 = por %p120, %p121
    %p123 = scmp.ne.s32.totalorder %s112, %s115
    %p124 = scmp.eq.s32.totalorder %s15, 1
    %p125 = por %p123, %p124
    %p126 = scmp.ne.s32.totalorder %s115, %s116
    %p127 = scmp.eq.s32.totalorder %s15, 0
    %p128 = por %p126, %p127
    %p129 = scmp.ne.s32.totalorder %s115, %s116
    %p130 = scmp.eq.s32.totalorder %s16, 1
    %p131 = por %p129, %p130
    %p133 = scmp.ne.s32.totalorder %s116, %s132
    %p134 = scmp.eq.s32.totalorder %s16, 0
    %p135 = por %p133, %p134
    %s136 = ssub.s32 %s17, %s29
    %s137 = ssub.s32 %s18, %s25
    %s138 = sor.u32 %s136, %s137
    %p139 = scmp.eq.s32.totalorder %s138, 0
    %s141 = sadd.s32 %s140, 1
    %s142 = scalar_select %p139, %s140, %s141
    %p145 = pneg %p139
    %p146 = scmp.eq.s32.totalorder %s10, 1
    %p147 = por %p145, %p146
    %p148 = scmp.ne.s32.totalorder %s140, %s143
    %p149 = scmp.eq.s32.totalorder %s10, 0
    %p150 = por %p148, %p149
    %p151 = scmp.ne.s32.totalorder %s140, %s143
    %p152 = scmp.eq.s32.totalorder %s15, 1
    %p153 = por %p151, %p152
    %p154 = scmp.ne.s32.totalorder %s143, %s144
    %p155 = scmp.eq.s32.totalorder %s15, 0
    %p156 = por %p154, %p155
    %p157 = scmp.ne.s32.totalorder %s143, %s144
    %p158 = scmp.eq.s32.totalorder %s16, 1
    %p159 = por %p157, %p158
    %p161 = scmp.ne.s32.totalorder %s144, %s160
    %p162 = scmp.eq.s32.totalorder %s16, 0
    %p163 = por %p161, %p162
    %p164 = scmp.le.s32.totalorder 1, %s10
    %p165 = scmp.lt.s32.totalorder %s10, 3
    %p166 = pnand %p164, %p165
    %p167 = pneg %p166
    // Predicated region
    $region9: #{_lambda_.47} parent=5 // pred_check
      _
    $region10: #{_lambda_.47} parent=5 // pred_check_branch
      %169 = sbr.rel (%p166) target = $region12
    $region11: #{_lambda_.47} parent=5 // pred_region
      %s170 = ssub.s32 %s10, 1
    $region12: #{_lambda_.47} parent=5 // pred_fallthru
      _
    %p171 = scmp.lt.s32.totalorder %s10, 2
    // Predicated region
    $region13: #{_lambda_.47} parent=5 // pred_check
      %p172 = pneg %p171
    $region14: #{_lambda_.47} parent=5 // pred_check_branch
      %174 = sbr.rel (%p172) target = $region16
    $region15: #{_lambda_.47} parent=5 // pred_region
      // Predicated region
      $region17: #{_lambda_.47} parent=15 // pred_check
        %p175 = pneg %p44
      $region18: #{_lambda_.47} parent=15 // pred_check_branch
        %177 = sbr.rel (%p175) target = $region20
      $region19: #{_lambda_.47} parent=15 // pred_region
        %p178 = scmp.lt.s32.totalorder %s17, 1
        %s179 = scalar_select %p178, %s17, 1
        %p180 = scmp.lt.s32.totalorder %s18, 0
        %s181 = scalar_select %p180, %s18, 0
        %s182 = sadd.s32 %s181, %s179
        %s183 = smul.addr %s182, 4
        %s184 = scalar_lea.vmem %s0, %s183
      $region20: #{_lambda_.47} parent=15 // pred_fallthru
        _
      // Predicated region
      $region21: #{_lambda_.47} parent=15 // pred_check
        %p185 = pneg %p70
      $region22: #{_lambda_.47} parent=15 // pred_check_branch
        %187 = sbr.rel (%p185) target = $region24
      $region23: #{_lambda_.47} parent=15 // pred_region
        %p188 = scmp.lt.s32.totalorder %s17, 1
        %s189 = scalar_select %p188, %s17, 1
        %s190 = smul.addr %s189, 4
        %s191 = scalar_lea.vmem %s1, %s190
      $region24: #{_lambda_.47} parent=15 // pred_fallthru
        _
      // Predicated region
      $region25: #{_lambda_.47} parent=15 // pred_check
        %p192 = pneg %p96
      $region26: #{_lambda_.47} parent=15 // pred_check_branch
        %194 = sbr.rel (%p192) target = $region28
      $region27: #{_lambda_.47} parent=15 // pred_region
        %p195 = scmp.lt.s32.totalorder %s17, 1
        %s196 = scalar_select %p195, %s17, 1
        %s197 = smul.addr %s196, 4
        %s198 = scalar_lea.vmem %s2, %s197
      $region28: #{_lambda_.47} parent=15 // pred_fallthru
        _
      // Predicated region
      $region29: #{_lambda_.47} parent=15 // pred_check
        %p199 = pneg %p122
      $region30: #{_lambda_.47} parent=15 // pred_check_branch
        %201 = sbr.rel (%p199) target = $region32
      $region31: #{_lambda_.47} parent=15 // pred_region
        %p202 = scmp.lt.s32.totalorder %s17, 1
        %s203 = scalar_select %p202, %s17, 1
        %s204 = scalar_lea.vmem %s3, %s203
      $region32: #{_lambda_.47} parent=15 // pred_fallthru
        _
    $region16: #{_lambda_.47} parent=5 // pred_fallthru
      _
    %p205 = scmp.le.s32.totalorder 1, %s10
    %p206 = scmp.lt.s32.totalorder %s10, 3
    %p207 = pnand %p205, %p206
    %p208 = pneg %p207
    // Predicated region
    $region33: #{_lambda_.47} parent=5 // pred_check
      _
    $region34: #{_lambda_.47} parent=5 // pred_check_branch
      %210 = sbr.rel (%p207) target = $region36
    $region35: #{_lambda_.47} parent=5 // pred_region
      %s211 = ssub.s32 %s10, 1
      %p212 = scmp.lt.s32.totalorder %s19, 1
      %s213 = scalar_select %p212, %s19, 1
      %p214 = scmp.lt.s32.totalorder %s20, 0
      %s215 = scalar_select %p214, %s20, 0
      %s216 = sadd.s32 %s215, %s213
      %s217 = smul.addr %s216, 4
      %s218 = scalar_lea.vmem %s0, %s217
      %p219 = pneg %p50
      %p220 = pneg %p47
      %p221 = scmp.lt.s32.totalorder %s19, 1
      %s222 = scalar_select %p221, %s19, 1
      %s223 = smul.addr %s222, 4
      %s224 = scalar_lea.vmem %s1, %s223
      %p225 = pneg %p76
      %p226 = pneg %p73
      %p227 = scmp.lt.s32.totalorder %s19, 1
      %s228 = scalar_select %p227, %s19, 1
      %s229 = smul.addr %s228, 4
      %s230 = scalar_lea.vmem %s2, %s229
      %p231 = pneg %p102
      %p232 = pneg %p99
      %p233 = scmp.lt.s32.totalorder %s19, 1
      %s234 = scalar_select %p233, %s19, 1
      %s235 = scalar_lea.vmem %s3, %s234
      %p236 = pneg %p128
      %p237 = pneg %p125
      %p238 = pneg %p156
      %p239 = pneg %p153
      %p240 = scmp.lt.s32.totalorder %s19, 1
      %s241 = scalar_select %p240, %s19, 1
      %p242 = scmp.lt.s32.totalorder %s20, 0
      %s243 = scalar_select %p242, %s20, 0
      %s244 = sadd.s32 %s243, %s241
      %s245 = smul.addr %s244, 4
      %s246 = scalar_lea.vmem %s4, %s245
      %p247 = scmp.lt.s32.totalorder %s19, 1
      %s248 = scalar_select %p247, %s19, 1
      %p249 = scmp.lt.s32.totalorder %s20, 0
      %s250 = scalar_select %p249, %s20, 0
      %s251 = sadd.s32 %s250, %s248
      %s252 = smul.addr %s251, 4
      %s253 = scalar_lea.vmem %s0, %s252
      %p254 = scmp.lt.s32.totalorder %s19, 1
      %s255 = scalar_select %p254, %s19, 1
      %s256 = smul.addr %s255, 4
      %s257 = scalar_lea.vmem %s1, %s256
      %p258 = scmp.lt.s32.totalorder %s19, 1
      %s259 = scalar_select %p258, %s19, 1
      %s260 = smul.addr %s259, 4
      %s261 = scalar_lea.vmem %s2, %s260
      %p262 = scmp.lt.s32.totalorder %s19, 1
      %s263 = scalar_select %p262, %s19, 1
      %s264 = scalar_lea.vmem %s3, %s263
      %p265 = scmp.lt.s32.totalorder %s19, 1
      %s266 = scalar_select %p265, %s19, 1
      %p267 = scmp.lt.s32.totalorder %s20, 0
      %s268 = scalar_select %p267, %s20, 0
      %s269 = sadd.s32 %s268, %s266
      %s270 = smul.addr %s269, 4
      %s271 = scalar_lea.vmem %s4, %s270
      %v273 = vld [vmem:[%s264] sm:$0x1]
      %v274 = vsub.f32 1.0, %v273
      %v275 = vmul.f32 %v274, -1e+09
      %v277 = vlaneseq
      %v278 = vshrl.u32 %v277, 7
      %v279 = vsub.s32 0, %v278
      %v280 = vrot.slane %v275, %v279
      %v282 = vld [vmem:[%s253] sm:$0xf]
      %v283 = vld [vmem:[%s257] sm:$0xf]
      %v284 = vld [vmem:[%s261] sm:$0xf]
      %vm285 = vcmask 64512
      %v287 = vsel %vm285, %v282, 0
      %v290 = vsel %vm285, %v283, 0
      %292 = vmatprep.subr.bf16.mxu0 0
      %293 = vmatpush1.bf16.xpose.msra.mxu0 0
      %294 = vmatprep.subr.bf16.mxu0 0
      %295 = vmatpush1.bf16.xpose.msra.mxu0 0
      %296 = vmatprep.subr.bf16.mxu0 0
      %297 = vmatpush1.bf16.xpose.msra.mxu0 0
      %298 = vmatprep.subr.bf16.mxu0 0
      %299 = vmatpush1.bf16.xpose.msra.mxu0 0
      %300 = vmatprep.subr.bf16.mxu0 0
      %301 = vmatpush1.bf16.xpose.msra.mxu0 0
      %302 = vmatprep.subr.bf16.mxu0 0
      %303 = vmatpush1.bf16.xpose.msra.mxu0 0
      %304 = vmatprep.subr.bf16.mxu0 0
      %305 = vmatpush1.bf16.xpose.msra.mxu0 0
      %306 = vmatprep.subr.bf16.mxu0 0
      %307 = vmatpush1.bf16.xpose.msra.mxu0 %v290
      %308 = vmatprep.subr.bf16.mxu0 0
      %309 = vmatpush2.bf16.xpose.msra.mxu0 0
      %310 = vmatprep.subr.bf16.mxu0 0
      %311 = vmatpush2.bf16.xpose.msra.mxu0 0
      %312 = vmatprep.subr.bf16.mxu0 0
      %313 = vmatpush2.bf16.xpose.msra.mxu0 0
      %314 = vmatprep.subr.bf16.mxu0 0
      %315 = vmatpush2.bf16.xpose.msra.mxu0 0
      %316 = vmatprep.subr.bf16.mxu0 0
      %317 = vmatpush2.bf16.xpose.msra.mxu0 0
      %318 = vmatprep.subr.bf16.mxu0 0
      %319 = vmatpush2.bf16.xpose.msra.mxu0 0
      %320 = vmatprep.subr.bf16.mxu0 0
      %321 = vmatpush2.bf16.xpose.msra.mxu0 0
      %322 = vmatprep.subr.bf16.mxu0 0
      %323 = vmatpush2.bf16.xpose.msra.mxu0 0
      %324 = vmatprep.mubr.bf16.mxu0 0
      %325 = vmatmul.mubr.bf16.gmra.mxu0 %v287
      %v326 = vpop.f32.mrf.mxu0
      %v327 = vadd.f32 0.0, %v326
      %v328 = vpop.f32.mrf.mxu0
      %v329 = vpop.f32.mrf.mxu0
      %v330 = vpop.f32.mrf.mxu0
      %331 = vdwg.mxu0
      %v332 = vmul.f32 %v327, 0.35355338
      %v333 = vadd.f32 %v332, %v280
      %v334 = vsel %vm285, %v333, -inf
      %335 = vmax.xlane.f32.xlu0 %v334
      %v336 = vpop.xlane.xlu0 %335
      %v337 = vsub.f32 %v333, %v336
      %v338 = vmul.f32 %v337, 1.442695
      %v339 = vpow.pop %v338
      %v340 = vsel %vm285, %v339, 0.0
      %341 = vadd.xlane.f32.xlu0 %v340
      %v342 = vpop.xlane.xlu0 %341
      %v343 = vrcp.pop %v342
      %v344 = vmul.f32 %v339, %v343
      %v345 = vpack.c.bf16 %v344, %v344
      %v347 = vunpack.c.l.b16 %v284
      %v348 = vpack.c.b16 %v347, %v347
      %349 = vrot.lane.b32.xlu0 %v348, 96
      %v350 = vpop.permute.xlu0 %349
      %v352 = vsel %vm285, %v345, 0
      %vm354 = vcmask 1043456
      %v356 = vsel %vm354, %v350, 0
      %358 = vmatprep.subr.bf16.mxu0 0
      %359 = vmatpush1.bf16.msra.mxu0 0
      %360 = vmatprep.subr.bf16.mxu0 0
      %361 = vmatpush1.bf16.msra.mxu0 0
      %362 = vmatprep.subr.bf16.mxu0 0
      %363 = vmatpush1.bf16.msra.mxu0 0
      %364 = vmatprep.subr.bf16.mxu0 0
      %365 = vmatpush1.bf16.msra.mxu0 0
      %366 = vmatprep.subr.bf16.mxu0 0
      %367 = vmatpush1.bf16.msra.mxu0 0
      %368 = vmatprep.subr.bf16.mxu0 0
      %369 = vmatpush1.bf16.msra.mxu0 0
      %370 = vmatprep.subr.bf16.mxu0 0
      %371 = vmatpush1.bf16.msra.mxu0 0
      %372 = vmatprep.subr.bf16.mxu0 0
      %373 = vmatpush1.bf16.msra.mxu0 %v356
      %374 = vmatprep.subr.bf16.mxu0 0
      %375 = vmatpush2.bf16.msra.mxu0 0
      %376 = vmatprep.subr.bf16.mxu0 0
      %377 = vmatpush2.bf16.msra.mxu0 0
      %378 = vmatprep.subr.bf16.mxu0 0
      %379 = vmatpush2.bf16.msra.mxu0 0
      %380 = vmatprep.subr.bf16.mxu0 0
      %381 = vmatpush2.bf16.msra.mxu0 0
      %382 = vmatprep.subr.bf16.mxu0 0
      %383 = vmatpush2.bf16.msra.mxu0 0
      %384 = vmatprep.subr.bf16.mxu0 0
      %385 = vmatpush2.bf16.msra.mxu0 0
      %386 = vmatprep.subr.bf16.mxu0 0
      %387 = vmatpush2.bf16.msra.mxu0 0
      %388 = vmatprep.subr.bf16.mxu0 0
      %389 = vmatpush2.bf16.msra.mxu0 0
      %390 = vmatprep.mubr.bf16.mxu0 0
      %391 = vmatmul.mubr.bf16.gmra.mxu0 %v352
      %v392 = vpop.f32.mrf.mxu0
      %v393 = vadd.f32 0.0, %v392
      %v394 = vpop.f32.mrf.mxu0
      %v395 = vpop.f32.mrf.mxu0
      %v396 = vpop.f32.mrf.mxu0
      %397 = vdwg.mxu0
      %v398 = vpack.c.bf16 %v393, %v393
      %vm399 = vcmask 60416
      %400 = vst.msk [vmem:[%s271] sm:$0xf] %vm399, %v398
      %v401 = vld [vmem:[%s253] sm:$0xf]
      %v402 = vld [vmem:[%s257] sm:$0xf]
      %v403 = vld [vmem:[%s261] sm:$0xf]
      %v405 = vunpack.c.l.b16 %v401
      %v406 = vpack.c.b16 %v405, %v405
      %407 = vrot.lane.b32.xlu0 %v406, 120
      %v408 = vpop.permute.xlu0 %407
      %v410 = vunpack.c.l.b16 %v402
      %v411 = vpack.c.b16 %v410, %v410
      %412 = vrot.lane.b32.xlu0 %v411, 120
      %v413 = vpop.permute.xlu0 %412
      %v415 = vsel %vm285, %v408, 0
      %v418 = vsel %vm285, %v413, 0
      %420 = vmatprep.subr.bf16.mxu0 0
      %421 = vmatpush1.bf16.xpose.msra.mxu0 0
      %422 = vmatprep.subr.bf16.mxu0 0
      %423 = vmatpush1.bf16.xpose.msra.mxu0 0
      %424 = vmatprep.subr.bf16.mxu0 0
      %425 = vmatpush1.bf16.xpose.msra.mxu0 0
      %426 = vmatprep.subr.bf16.mxu0 0
      %427 = vmatpush1.bf16.xpose.msra.mxu0 0
      %428 = vmatprep.subr.bf16.mxu0 0
      %429 = vmatpush1.bf16.xpose.msra.mxu0 0
      %430 = vmatprep.subr.bf16.mxu0 0
      %431 = vmatpush1.bf16.xpose.msra.mxu0 0
      %432 = vmatprep.subr.bf16.mxu0 0
      %433 = vmatpush1.bf16.xpose.msra.mxu0 0
      %434 = vmatprep.subr.bf16.mxu0 0
      %435 = vmatpush1.bf16.xpose.msra.mxu0 %v418
      %436 = vmatprep.subr.bf16.mxu0 0
      %437 = vmatpush2.bf16.xpose.msra.mxu0 0
      %438 = vmatprep.subr.bf16.mxu0 0
      %439 = vmatpush2.bf16.xpose.msra.mxu0 0
      %440 = vmatprep.subr.bf16.mxu0 0
      %441 = vmatpush2.bf16.xpose.msra.mxu0 0
      %442 = vmatprep.subr.bf16.mxu0 0
      %443 = vmatpush2.bf16.xpose.msra.mxu0 0
      %444 = vmatprep.subr.bf16.mxu0 0
      %445 = vmatpush2.bf16.xpose.msra.mxu0 0
      %446 = vmatprep.subr.bf16.mxu0 0
      %447 = vmatpush2.bf16.xpose.msra.mxu0 0
      %448 = vmatprep.subr.bf16.mxu0 0
      %449 = vmatpush2.bf16.xpose.msra.mxu0 0
      %450 = vmatprep.subr.bf16.mxu0 0
      %451 = vmatpush2.bf16.xpose.msra.mxu0 0
      %452 = vmatprep.mubr.bf16.mxu0 0
      %453 = vmatmul.mubr.bf16.gmra.mxu0 %v415
      %v454 = vpop.f32.mrf.mxu0
      %v455 = vadd.f32 0.0, %v454
      %v456 = vpop.f32.mrf.mxu0
      %v457 = vpop.f32.mrf.mxu0
      %v458 = vpop.f32.mrf.mxu0
      %459 = vdwg.mxu0
      %v460 = vmul.f32 %v455, 0.35355338
      %v461 = vadd.f32 %v460, %v280
      %v462 = vsel %vm285, %v461, -inf
      %463 = vmax.xlane.f32.xlu0 %v462
      %v464 = vpop.xlane.xlu0 %463
      %v465 = vsub.f32 %v461, %v464
      %v466 = vmul.f32 %v465, 1.442695
      %v467 = vpow.pop %v466
      %v468 = vsel %vm285, %v467, 0.0
      %469 = vadd.xlane.f32.xlu0 %v468
      %v470 = vpop.xlane.xlu0 %469
      %v471 = vrcp.pop %v470
      %v472 = vmul.f32 %v467, %v471
      %v473 = vpack.c.bf16 %v472, %v472
      %v475 = vunpack.c.l.b16 %v403
      %v476 = vpack.c.b16 %v475, %v475
      %477 = vrot.lane.b32.xlu0 %v476, 88
      %v478 = vpop.permute.xlu0 %477
      %v480 = vsel %vm285, %v473, 0
      %v483 = vsel %vm354, %v478, 0
      %485 = vmatprep.subr.bf16.mxu0 0
      %486 = vmatpush1.bf16.msra.mxu0 0
      %487 = vmatprep.subr.bf16.mxu0 0
      %488 = vmatpush1.bf16.msra.mxu0 0
      %489 = vmatprep.subr.bf16.mxu0 0
      %490 = vmatpush1.bf16.msra.mxu0 0
      %491 = vmatprep.subr.bf16.mxu0 0
      %492 = vmatpush1.bf16.msra.mxu0 0
      %493 = vmatprep.subr.bf16.mxu0 0
      %494 = vmatpush1.bf16.msra.mxu0 0
      %495 = vmatprep.subr.bf16.mxu0 0
      %496 = vmatpush1.bf16.msra.mxu0 0
      %497 = vmatprep.subr.bf16.mxu0 0
      %498 = vmatpush1.bf16.msra.mxu0 0
      %499 = vmatprep.subr.bf16.mxu0 0
      %500 = vmatpush1.bf16.msra.mxu0 %v483
      %501 = vmatprep.subr.bf16.mxu0 0
      %502 = vmatpush2.bf16.msra.mxu0 0
      %503 = vmatprep.subr.bf16.mxu0 0
      %504 = vmatpush2.bf16.msra.mxu0 0
      %505 = vmatprep.subr.bf16.mxu0 0
      %506 = vmatpush2.bf16.msra.mxu0 0
      %507 = vmatprep.subr.bf16.mxu0 0
      %508 = vmatpush2.bf16.msra.mxu0 0
      %509 = vmatprep.subr.bf16.mxu0 0
      %510 = vmatpush2.bf16.msra.mxu0 0
      %511 = vmatprep.subr.bf16.mxu0 0
      %512 = vmatpush2.bf16.msra.mxu0 0
      %513 = vmatprep.subr.bf16.mxu0 0
      %514 = vmatpush2.bf16.msra.mxu0 0
      %515 = vmatprep.subr.bf16.mxu0 0
      %516 = vmatpush2.bf16.msra.mxu0 0
      %517 = vmatprep.mubr.bf16.mxu0 0
      %518 = vmatmul.mubr.bf16.gmra.mxu0 %v480
      %v519 = vpop.f32.mrf.mxu0
      %v520 = vadd.f32 0.0, %v519
      %v521 = vpop.f32.mrf.mxu0
      %v522 = vpop.f32.mrf.mxu0
      %v523 = vpop.f32.mrf.mxu0
      %524 = vdwg.mxu0
      %v525 = vpack.c.bf16 %v520, %v520
      %v527 = vunpack.c.l.b16 %v525
      %v528 = vpack.c.b16 %v527, %v527
      %529 = vrot.lane.b32.xlu0 %v528, 8
      %v530 = vpop.permute.xlu0 %529
      %vm532 = vcmask 126016
      %533 = vst.msk [vmem:[%s271] sm:$0xf] %vm532, %v530
      %v534 = vld [vmem:[%s253] sm:$0xf]
      %v535 = vld [vmem:[%s257] sm:$0xf]
      %v536 = vld [vmem:[%s261] sm:$0xf]
      %v538 = vunpack.c.l.b16 %v534
      %v539 = vpack.c.b16 %v538, %v538
      %540 = vrot.lane.b32.xlu0 %v539, 112
      %v541 = vpop.permute.xlu0 %540
      %v543 = vunpack.c.l.b16 %v535
      %v544 = vpack.c.b16 %v543, %v543
      %545 = vrot.lane.b32.xlu0 %v544, 112
      %v546 = vpop.permute.xlu0 %545
      %v548 = vsel %vm285, %v541, 0
      %v551 = vsel %vm285, %v546, 0
      %553 = vmatprep.subr.bf16.mxu0 0
      %554 = vmatpush1.bf16.xpose.msra.mxu0 0
      %555 = vmatprep.subr.bf16.mxu0 0
      %556 = vmatpush1.bf16.xpose.msra.mxu0 0
      %557 = vmatprep.subr.bf16.mxu0 0
      %558 = vmatpush1.bf16.xpose.msra.mxu0 0
      %559 = vmatprep.subr.bf16.mxu0 0
      %560 = vmatpush1.bf16.xpose.msra.mxu0 0
      %561 = vmatprep.subr.bf16.mxu0 0
      %562 = vmatpush1.bf16.xpose.msra.mxu0 0
      %563 = vmatprep.subr.bf16.mxu0 0
      %564 = vmatpush1.bf16.xpose.msra.mxu0 0
      %565 = vmatprep.subr.bf16.mxu0 0
      %566 = vmatpush1.bf16.xpose.msra.mxu0 0
      %567 = vmatprep.subr.bf16.mxu0 0
      %568 = vmatpush1.bf16.xpose.msra.mxu0 %v551
      %569 = vmatprep.subr.bf16.mxu0 0
      %570 = vmatpush2.bf16.xpose.msra.mxu0 0
      %571 = vmatprep.subr.bf16.mxu0 0
      %572 = vmatpush2.bf16.xpose.msra.mxu0 0
      %573 = vmatprep.subr.bf16.mxu0 0
      %574 = vmatpush2.bf16.xpose.msra.mxu0 0
      %575 = vmatprep.subr.bf16.mxu0 0
      %576 = vmatpush2.bf16.xpose.msra.mxu0 0
      %577 = vmatprep.subr.bf16.mxu0 0
      %578 = vmatpush2.bf16.xpose.msra.mxu0 0
      %579 = vmatprep.subr.bf16.mxu0 0
      %580 = vmatpush2.bf16.xpose.msra.mxu0 0
      %581 = vmatprep.subr.bf16.mxu0 0
      %582 = vmatpush2.bf16.xpose.msra.mxu0 0
      %583 = vmatprep.subr.bf16.mxu0 0
      %584 = vmatpush2.bf16.xpose.msra.mxu0 0
      %585 = vmatprep.mubr.bf16.mxu0 0
      %586 = vmatmul.mubr.bf16.gmra.mxu0 %v548
      %v587 = vpop.f32.mrf.mxu0
      %v588 = vadd.f32 0.0, %v587
      %v589 = vpop.f32.mrf.mxu0
      %v590 = vpop.f32.mrf.mxu0
      %v591 = vpop.f32.mrf.mxu0
      %592 = vdwg.mxu0
      %v593 = vmul.f32 %v588, 0.35355338
      %v594 = vadd.f32 %v593, %v280
      %v595 = vsel %vm285, %v594, -inf
      %596 = vmax.xlane.f32.xlu0 %v595
      %v597 = vpop.xlane.xlu0 %596
      %v598 = vsub.f32 %v594, %v597
      %v599 = vmul.f32 %v598, 1.442695
      %v600 = vpow.pop %v599
      %v601 = vsel %vm285, %v600, 0.0
      %602 = vadd.xlane.f32.xlu0 %v601
      %v603 = vpop.xlane.xlu0 %602
      %v604 = vrcp.pop %v603
      %v605 = vmul.f32 %v600, %v604
      %v606 = vpack.c.bf16 %v605, %v605
      %v608 = vunpack.c.l.b16 %v536
      %v609 = vpack.c.b16 %v608, %v608
      %610 = vrot.lane.b32.xlu0 %v609, 80
      %v611 = vpop.permute.xlu0 %610
      %v613 = vsel %vm285, %v606, 0
      %v616 = vsel %vm354, %v611, 0
      %618 = vmatprep.subr.bf16.mxu0 0
      %619 = vmatpush1.bf16.msra.mxu0 0
      %620 = vmatprep.subr.bf16.mxu0 0
      %621 = vmatpush1.bf16.msra.mxu0 0
      %622 = vmatprep.subr.bf16.mxu0 0
      %623 = vmatpush1.bf16.msra.mxu0 0
      %624 = vmatprep.subr.bf16.mxu0 0
      %625 = vmatpush1.bf16.msra.mxu0 0
      %626 = vmatprep.subr.bf16.mxu0 0
      %627 = vmatpush1.bf16.msra.mxu0 0
      %628 = vmatprep.subr.bf16.mxu0 0
      %629 = vmatpush1.bf16.msra.mxu0 0
      %630 = vmatprep.subr.bf16.mxu0 0
      %631 = vmatpush1.bf16.msra.mxu0 0
      %632 = vmatprep.subr.bf16.mxu0 0
      %633 = vmatpush1.bf16.msra.mxu0 %v616
      %634 = vmatprep.subr.bf16.mxu0 0
      %635 = vmatpush2.bf16.msra.mxu0 0
      %636 = vmatprep.subr.bf16.mxu0 0
      %637 = vmatpush2.bf16.msra.mxu0 0
      %638 = vmatprep.subr.bf16.mxu0 0
      %639 = vmatpush2.bf16.msra.mxu0 0
      %640 = vmatprep.subr.bf16.mxu0 0
      %641 = vmatpush2.bf16.msra.mxu0 0
      %642 = vmatprep.subr.bf16.mxu0 0
      %643 = vmatpush2.bf16.msra.mxu0 0
      %644 = vmatprep.subr.bf16.mxu0 0
      %645 = vmatpush2.bf16.msra.mxu0 0
      %646 = vmatprep.subr.bf16.mxu0 0
      %647 = vmatpush2.bf16.msra.mxu0 0
      %648 = vmatprep.subr.bf16.mxu0 0
      %649 = vmatpush2.bf16.msra.mxu0 0
      %650 = vmatprep.mubr.bf16.mxu0 0
      %651 = vmatmul.mubr.bf16.gmra.mxu0 %v613
      %v652 = vpop.f32.mrf.mxu0
      %v653 = vadd.f32 0.0, %v652
      %v654 = vpop.f32.mrf.mxu0
      %v655 = vpop.f32.mrf.mxu0
      %v656 = vpop.f32.mrf.mxu0
      %657 = vdwg.mxu0
      %v658 = vpack.c.bf16 %v653, %v653
      %v660 = vunpack.c.l.b16 %v658
      %v661 = vpack.c.b16 %v660, %v660
      %662 = vrot.lane.b32.xlu0 %v661, 16
      %v663 = vpop.permute.xlu0 %662
      %vm665 = vcmask 191616
      %666 = vst.msk [vmem:[%s271] sm:$0xf] %vm665, %v663
      %v667 = vld [vmem:[%s253] sm:$0xf]
      %v668 = vld [vmem:[%s257] sm:$0xf]
      %v669 = vld [vmem:[%s261] sm:$0xf]
      %v671 = vunpack.c.l.b16 %v667
      %v672 = vpack.c.b16 %v671, %v671
      %673 = vrot.lane.b32.xlu0 %v672, 104
      %v674 = vpop.permute.xlu0 %673
      %v676 = vunpack.c.l.b16 %v668
      %v677 = vpack.c.b16 %v676, %v676
      %678 = vrot.lane.b32.xlu0 %v677, 104
      %v679 = vpop.permute.xlu0 %678
      %v681 = vsel %vm285, %v674, 0
      %v684 = vsel %vm285, %v679, 0
      %686 = vmatprep.subr.bf16.mxu0 0
      %687 = vmatpush1.bf16.xpose.msra.mxu0 0
      %688 = vmatprep.subr.bf16.mxu0 0
      %689 = vmatpush1.bf16.xpose.msra.mxu0 0
      %690 = vmatprep.subr.bf16.mxu0 0
      %691 = vmatpush1.bf16.xpose.msra.mxu0 0
      %692 = vmatprep.subr.bf16.mxu0 0
      %693 = vmatpush1.bf16.xpose.msra.mxu0 0
      %694 = vmatprep.subr.bf16.mxu0 0
      %695 = vmatpush1.bf16.xpose.msra.mxu0 0
      %696 = vmatprep.subr.bf16.mxu0 0
      %697 = vmatpush1.bf16.xpose.msra.mxu0 0
      %698 = vmatprep.subr.bf16.mxu0 0
      %699 = vmatpush1.bf16.xpose.msra.mxu0 0
      %700 = vmatprep.subr.bf16.mxu0 0
      %701 = vmatpush1.bf16.xpose.msra.mxu0 %v684
      %702 = vmatprep.subr.bf16.mxu0 0
      %703 = vmatpush2.bf16.xpose.msra.mxu0 0
      %704 = vmatprep.subr.bf16.mxu0 0
      %705 = vmatpush2.bf16.xpose.msra.mxu0 0
      %706 = vmatprep.subr.bf16.mxu0 0
      %707 = vmatpush2.bf16.xpose.msra.mxu0 0
      %708 = vmatprep.subr.bf16.mxu0 0
      %709 = vmatpush2.bf16.xpose.msra.mxu0 0
      %710 = vmatprep.subr.bf16.mxu0 0
      %711 = vmatpush2.bf16.xpose.msra.mxu0 0
      %712 = vmatprep.subr.bf16.mxu0 0
      %713 = vmatpush2.bf16.xpose.msra.mxu0 0
      %714 = vmatprep.subr.bf16.mxu0 0
      %715 = vmatpush2.bf16.xpose.msra.mxu0 0
      %716 = vmatprep.subr.bf16.mxu0 0
      %717 = vmatpush2.bf16.xpose.msra.mxu0 0
      %718 = vmatprep.mubr.bf16.mxu0 0
      %719 = vmatmul.mubr.bf16.gmra.mxu0 %v681
      %v720 = vpop.f32.mrf.mxu0
      %v721 = vadd.f32 0.0, %v720
      %v722 = vpop.f32.mrf.mxu0
      %v723 = vpop.f32.mrf.mxu0
      %v724 = vpop.f32.mrf.mxu0
      %725 = vdwg.mxu0
      %v726 = vmul.f32 %v721, 0.35355338
      %v727 = vadd.f32 %v726, %v280
      %v728 = vsel %vm285, %v727, -inf
      %729 = vmax.xlane.f32.xlu0 %v728
      %v730 = vpop.xlane.xlu0 %729
      %v731 = vsub.f32 %v727, %v730
      %v732 = vmul.f32 %v731, 1.442695
      %v733 = vpow.pop %v732
      %v734 = vsel %vm285, %v733, 0.0
      %735 = vadd.xlane.f32.xlu0 %v734
      %v736 = vpop.xlane.xlu0 %735
      %v737 = vrcp.pop %v736
      %v738 = vmul.f32 %v733, %v737
      %v739 = vpack.c.bf16 %v738, %v738
      %v741 = vunpack.c.l.b16 %v669
      %v742 = vpack.c.b16 %v741, %v741
      %743 = vrot.lane.b32.xlu0 %v742, 72
      %v744 = vpop.permute.xlu0 %743
      %v746 = vsel %vm285, %v739, 0
      %v749 = vsel %vm354, %v744, 0
      %751 = vmatprep.subr.bf16.mxu0 0
      %752 = vmatpush1.bf16.msra.mxu0 0
      %753 = vmatprep.subr.bf16.mxu0 0
      %754 = vmatpush1.bf16.msra.mxu0 0
      %755 = vmatprep.subr.bf16.mxu0 0
      %756 = vmatpush1.bf16.msra.mxu0 0
      %757 = vmatprep.subr.bf16.mxu0 0
      %758 = vmatpush1.bf16.msra.mxu0 0
      %759 = vmatprep.subr.bf16.mxu0 0
      %760 = vmatpush1.bf16.msra.mxu0 0
      %761 = vmatprep.subr.bf16.mxu0 0
      %762 = vmatpush1.bf16.msra.mxu0 0
      %763 = vmatprep.subr.bf16.mxu0 0
      %764 = vmatpush1.bf16.msra.mxu0 0
      %765 = vmatprep.subr.bf16.mxu0 0
      %766 = vmatpush1.bf16.msra.mxu0 %v749
      %767 = vmatprep.subr.bf16.mxu0 0
      %768 = vmatpush2.bf16.msra.mxu0 0
      %769 = vmatprep.subr.bf16.mxu0 0
      %770 = vmatpush2.bf16.msra.mxu0 0
      %771 = vmatprep.subr.bf16.mxu0 0
      %772 = vmatpush2.bf16.msra.mxu0 0
      %773 = vmatprep.subr.bf16.mxu0 0
      %774 = vmatpush2.bf16.msra.mxu0 0
      %775 = vmatprep.subr.bf16.mxu0 0
      %776 = vmatpush2.bf16.msra.mxu0 0
      %777 = vmatprep.subr.bf16.mxu0 0
      %778 = vmatpush2.bf16.msra.mxu0 0
      %779 = vmatprep.subr.bf16.mxu0 0
      %780 = vmatpush2.bf16.msra.mxu0 0
      %781 = vmatprep.subr.bf16.mxu0 0
      %782 = vmatpush2.bf16.msra.mxu0 0
      %783 = vmatprep.mubr.bf16.mxu0 0
      %784 = vmatmul.mubr.bf16.gmra.mxu0 %v746
      %v785 = vpop.f32.mrf.mxu0
      %v786 = vadd.f32 0.0, %v785
      %v787 = vpop.f32.mrf.mxu0
      %v788 = vpop.f32.mrf.mxu0
      %v789 = vpop.f32.mrf.mxu0
      %790 = vdwg.mxu0
      %v791 = vpack.c.bf16 %v786, %v786
      %v793 = vunpack.c.l.b16 %v791
      %v794 = vpack.c.b16 %v793, %v793
      %795 = vrot.lane.b32.xlu0 %v794, 24
      %v796 = vpop.permute.xlu0 %795
      %vm798 = vcmask 257216
      %799 = vst.msk [vmem:[%s271] sm:$0xf] %vm798, %v796
      %p800 = scmp.lt.s32.totalorder %s19, 1
      %s801 = scalar_select %p800, %s19, 1
      %p802 = scmp.lt.s32.totalorder %s20, 0
      %s803 = scalar_select %p802, %s20, 0
      %s804 = sadd.s32 %s803, %s801
      %s805 = smul.addr %s804, 4
      %s806 = scalar_lea.vmem %s4, %s805
      // Predicated region
      $region37: #{_lambda_.47} parent=35 // pred_check
        %p807 = pneg %p153
      $region38: #{_lambda_.47} parent=35 // pred_check_branch
        %809 = sbr.rel (%p807) target = $region40
      $region39: #{_lambda_.47} parent=35 // pred_region
        _
      $region40: #{_lambda_.47} parent=35 // pred_fallthru
        _
    $region36: #{_lambda_.47} parent=5 // pred_fallthru
      _
    %p810 = scmp.le.s32.totalorder 2, %s10
    // Predicated region
    $region41: #{_lambda_.47} parent=5 // pred_check
      %p811 = pneg %p810
    $region42: #{_lambda_.47} parent=5 // pred_check_branch
      %813 = sbr.rel (%p811) target = $region44
    $region43: #{_lambda_.47} parent=5 // pred_region
      %s814 = ssub.s32 %s10, 2
      // Predicated region
      $region45: #{_lambda_.47} parent=43 // pred_check
        %p815 = pneg %p159
      $region46: #{_lambda_.47} parent=43 // pred_check_branch
        %817 = sbr.rel (%p815) target = $region48
      $region47: #{_lambda_.47} parent=43 // pred_region
        %p818 = scmp.lt.s32.totalorder %s21, 1
        %s819 = scalar_select %p818, %s21, 1
        %p820 = scmp.lt.s32.totalorder %s22, 0
        %s821 = scalar_select %p820, %s22, 0
        %s822 = sadd.s32 %s821, %s819
        %s823 = smul.addr %s822, 4
        %s824 = scalar_lea.vmem %s4, %s823
      $region48: #{_lambda_.47} parent=43 // pred_fallthru
        _
    $region44: #{_lambda_.47} parent=5 // pred_fallthru
      _
  $region6: #{_lambda_.47} parent=0 // loop_footer
    %s14 = sadd.s32 1, %s10
  $region7: #{_lambda_.47} parent=0 // loop_footer_branch
    %9 = sbr.rel target = $region3
  $region8: #{_lambda_.47} parent=0 // loop_exit
    _

</llo_original>
